<compile_context>
chip_gen: v7x
topology: tpu7x:2x2x1
jax: 0.10.0
libtpu: 0.0.40
codegen_flags: <defaults>
</compile_context>

<pallas_src>
import functools

import jax
import jax.numpy as jnp
import numpy as np
from jax.experimental import pallas as pl
from jax.experimental.pallas import tpu as pltpu


# --------------------------------------------------------------------------- #
# Fused kernel: conv1+pool -> conv2+pool -> fc1 -> fc2 -> fc3
# --------------------------------------------------------------------------- #
def _lenet_kernel(bb, ph_ref, w1_ref, b1_ref, w2_ref, b2_ref,
                  wf1_ref, bf1_ref, wf2_ref, bf2_ref, wf3_ref, bf3_ref,
                  out_ref, y1p_scr):
    f32, cdt = jnp.float32, jnp.bfloat16

    # ---------------- conv1 (3x3 'same') + bias + ReLU + 2x2 max-pool --------
    # ph_ref: (4, bb, 15, 15) = row/col parity phases of the zero-padded input.
    planes = [[ph_ref[2 * p + q].astype(cdt) for q in (0, 1)] for p in (0, 1)]
    w1k = [w1_ref[k] for k in range(9)]                      # (14, 128) bf16

    # 16 distinct (row-offset rh, col-offset rw) input slices shared by 36 taps.
    s1 = {}
    for rh in range(4):
        p, qh = rh % 2, rh // 2
        for rw in range(4):
            q, qw = rw % 2, rw // 2
            s1[(rh, rw)] = (planes[p][q][:, qh:qh + 14, qw:qw + 14]
                            .reshape(bb * 14, 14))
    pooled1 = None
    for dh in (0, 1):                                        # 2x2 pooling taps
        for dw in (0, 1):
            acc = None
            for kh in range(3):                              # 3x3 conv taps
                for kw in range(3):
                    d = jnp.dot(s1[(dh + kh, dw + kw)], w1k[kh * 3 + kw],
                                preferred_element_type=f32)
                    acc = d if acc is None else acc + d
            pooled1 = acc if pooled1 is None else jnp.maximum(pooled1, acc)
    # Shared per-channel bias commutes with max and ReLU.  The padding lane
    # groups (7 and 8) have zero weights and zero bias, so they stay exactly 0
    # and double as conv2's 'same' zero-padding columns.
    y1 = jnp.maximum(pooled1 + b1_ref[...], 0.0)             # (bb*14, 128) f32

    # conv2 input: y1 with one zero 'same'-padding row above/below each image.
    y1p_scr[:, 1:15, :] = y1.reshape(bb, 14, 128)
    y1p_scr[:, 0:1, :] = jnp.zeros((bb, 1, 128), f32)
    y1p_scr[:, 15:16, :] = jnp.zeros((bb, 1, 128), f32)

    # ---------------- conv2 (3x3 'same') + bias + ReLU + 2x2 max-pool --------
    w2k = [w2_ref[k] for k in range(9)]                      # (56, 112) bf16
    s2 = {}
    for rh in range(4):
        rows = y1p_scr[:, pl.ds(rh, 7, 2), :]                # strided sublane read
        for rw in range(4):
            q, qw = rw % 2, rw // 2
            lo = (0 if q == 1 else 64) + 8 * qw              # column-parity half
            s2[(rh, rw)] = (rows[:, :, lo:lo + 56]
                            .reshape(bb * 7, 56).astype(cdt))
    pooled2 = None
    for dh in (0, 1):
        for dw in (0, 1):
            acc = None
            for kh in range(3):
                for kw in range(3):
                    d = jnp.dot(s2[(dh + kh, dw + kw)], w2k[kh * 3 + kw],
                                preferred_element_type=f32)
                    acc = d if acc is None else acc + d
            pooled2 = acc if pooled2 is None else jnp.maximum(pooled2, acc)
    y2 = jnp.maximum(pooled2 + b2_ref[...], 0.0)             # (bb*7, 112) f32

    # ---------------- fc1 + ReLU + fc2 + ReLU + fc3 (VMEM resident) ----------
    y2b = y2.astype(cdt).reshape(bb, 7, 112)
    h = None
    for r in range(7):                                       # contract 7 spatial rows
        d = jnp.dot(y2b[:, r, :], wf1_ref[r], preferred_element_type=f32)
        h = d if h is None else h + d
    h = jnp.maximum(h + bf1_ref[...], 0.0)                   # (bb, 128)
    h = jnp.maximum(jnp.dot(h.astype(cdt), wf2_ref[...],
                            preferred_element_type=f32) + bf2_ref[...], 0.0)
    o = jnp.dot(h.astype(cdt), wf3_ref[...],
                preferred_element_type=f32) + bf3_ref[...]
    out_ref[0] = o.astype(out_ref.dtype)                     # lane-dense (bb, 128)


# --------------------------------------------------------------------------- #
# One-time weight preparation (hoisted out of the per-call forward path).
# --------------------------------------------------------------------------- #
def prepare_params(params):
    f32, cdt = jnp.float32, jnp.bfloat16
    w1, b1 = params["w1"].astype(f32), params["b1"].astype(f32)   # (3,3,1,8), (8,)
    w2, b2 = params["w2"].astype(f32), params["b2"].astype(f32)   # (3,3,8,16), (16,)

    # conv1 block-diagonal weights, lane layout of the 128-wide output:
    #   output column c even = 2j  -> lane group j      (first 64 lanes)
    #   output column c odd  = 2j+1-> lane group 9 + j  (second 64 lanes)
    #   groups 7 and 8 stay zero = conv2's 'same' zero-padding columns.
    tgt_grp = np.array([c // 2 if c % 2 == 0 else 8 + (c + 1) // 2
                        for c in range(14)])
    place1 = np.zeros((14, 16), np.float32)
    place1[np.arange(14), tgt_grp] = 1.0
    place1 = jnp.asarray(place1)                                   # (14, 16)
    w1k = w1.reshape(9, 8)                                         # (tap, cout)
    w1blk = (place1[None, :, :, None] * w1k[:, None, None, :]
             ).reshape(9, 14, 128).astype(cdt)
    grp_on = np.zeros((16,), np.float32)
    grp_on[0:7] = 1.0
    grp_on[9:16] = 1.0
    b1row = (jnp.asarray(grp_on)[:, None] * b1[None, :]).reshape(1, 128)

    # conv2 block-diagonal weights: lanes (col, cin=8) -> (col, cout=16).
    eye7 = jnp.eye(7, dtype=f32)
    w2blk = jnp.stack([jnp.kron(eye7, w2[kh, kw])
                       for kh in range(3) for kw in range(3)]).astype(cdt)  # (9,56,112)
    b2row = jnp.tile(b2, 7).reshape(1, 112).astype(f32)

    # fc1: permute rows from torch's NCHW flatten (c*49+h*7+w) to per-row (h)
    # blocks with lane order (w, c); pad N 120 -> 128.
    wf1 = params["wf1"].reshape(16, 7, 7, 120).transpose(1, 2, 0, 3).reshape(7, 112, 120)
    wf1b = jnp.pad(wf1, ((0, 0), (0, 0), (0, 8))).astype(cdt)       # (7,112,128)
    bf1p = jnp.pad(params["bf1"], (0, 8)).reshape(1, 128).astype(f32)
    wf2p = jnp.pad(params["wf2"], ((0, 8), (0, 44))).astype(cdt)    # (128,128)
    bf2p = jnp.pad(params["bf2"], (0, 44)).reshape(1, 128).astype(f32)
    wf3p = jnp.pad(params["wf3"], ((0, 44), (0, 118))).astype(cdt)  # (128,128)
    bf3p = jnp.pad(params["bf3"], (0, 118)).reshape(1, 128).astype(f32)

    return dict(w1blk=w1blk, b1row=b1row, w2blk=w2blk, b2row=b2row,
                wf1b=wf1b, bf1p=bf1p, wf2p=wf2p, bf2p=bf2p,
                wf3p=wf3p, bf3p=bf3p)


# ------------------------------- forward pass ------------------------------ #
def net_forward(prep, x_nchw):
    """Forward pass matching Net.forward.  x_nchw: (B, 1, 28, 28) float32."""
    B = x_nchw.shape[0]
    x = x_nchw.reshape(B, 28, 28).astype(jnp.float32)              # Cin == 1
    xp = jnp.pad(x, ((0, 0), (1, 1), (1, 1)))                      # (B, 30, 30)
    # (row, col) parity phases in one gather: phases[2p+q][b,h,w] = xp[b,2h+p,2w+q]
    phases = xp.reshape(B, 15, 2, 15, 2).transpose(2, 4, 0, 1, 3).reshape(4, B, 15, 15)

    # Batch blocking: >=2 grid steps when possible (dual TensorCore on v7x),
    # with the batch block folded into the MXU M dimension inside each step.
    if B >= 2 and B % 2 == 0:
        n_blk, bb = 2, B // 2
    else:
        n_blk, bb = 1, B

    kern = functools.partial(_lenet_kernel, bb)
    out = pl.pallas_call(
        kern,
        out_shape=jax.ShapeDtypeStruct((n_blk, bb, 128), jnp.float32),
        grid=(n_blk,),
        in_specs=[
            pl.BlockSpec((4, bb, 15, 15), lambda i: (0, i, 0, 0)),
            pl.BlockSpec((9, 14, 128), lambda i: (0, 0, 0)),
            pl.BlockSpec((1, 128), lambda i: (0, 0)),
            pl.BlockSpec((9, 56, 112), lambda i: (0, 0, 0)),
            pl.BlockSpec((1, 112), lambda i: (0, 0)),
            pl.BlockSpec((7, 112, 128), lambda i: (0, 0, 0)),
            pl.BlockSpec((1, 128), lambda i: (0, 0)),
            pl.BlockSpec((128, 128), lambda i: (0, 0)),
            pl.BlockSpec((1, 128), lambda i: (0, 0)),
            pl.BlockSpec((128, 128), lambda i: (0, 0)),
            pl.BlockSpec((1, 128), lambda i: (0, 0)),
        ],
        out_specs=pl.BlockSpec((1, bb, 128), lambda i: (i, 0, 0)),
        scratch_shapes=[pltpu.VMEM((bb, 16, 128), jnp.float32)],
        compiler_params=pltpu.CompilerParams(
            dimension_semantics=("parallel",)),
    )(phases, prep["w1blk"], prep["b1row"], prep["w2blk"], prep["b2row"],
      prep["wf1b"], prep["bf1p"], prep["wf2p"], prep["bf2p"],
      prep["wf3p"], prep["bf3p"])
    return out.reshape(B, 128)[:, :10]


# ----------------------------- params & reference -------------------------- #
def init_params(key):
    """Deterministic synthetic parameters with the same shapes as the module."""
    ks = jax.random.split(key, 10)
    s = 0.05
    w1 = jax.random.normal(ks[0], (3, 3, 1, 8), jnp.float32) * s     # HWIO
    b1 = jax.random.normal(ks[1], (8,), jnp.float32) * s
    w2 = jax.random.normal(ks[2], (3, 3, 8, 16), jnp.float32) * s
    b2 = jax.random.normal(ks[3], (16,), jnp.float32) * s
    wf1 = jax.random.normal(ks[4], (16 * 7 * 7, 120), jnp.float32) * s
    bf1 = jax.random.normal(ks[5], (120,), jnp.float32) * s
    wf2 = jax.random.normal(ks[6], (120, 84), jnp.float32) * s
    bf2 = jax.random.normal(ks[7], (84,), jnp.float32) * s
    wf3 = jax.random.normal(ks[8], (84, 10), jnp.float32) * s
    bf3 = jax.random.normal(ks[9], (10,), jnp.float32) * s
    return dict(w1=w1, b1=b1, w2=w2, b2=b2,
                wf1=wf1, bf1=bf1, wf2=wf2, bf2=bf2, wf3=wf3, bf3=bf3)


def ref_forward(params, x_nchw):
    """Pure-JAX reference (NCHW-flatten semantics, like torch)."""
    hp = jax.lax.Precision.HIGHEST
    x = jnp.transpose(x_nchw, (0, 2, 3, 1))

    def conv(x, w, b):
        B, H, W, _ = x.shape
        xp = jnp.pad(x, ((0, 0), (1, 1), (1, 1), (0, 0)))
        acc = jnp.zeros((B, H, W, w.shape[-1]), jnp.float32)
        for kh in range(3):
            for kw in range(3):
                acc = acc + jnp.einsum("bhwc,cd->bhwd",
                                       xp[:, kh:kh + H, kw:kw + W, :],
                                       w[kh, kw], precision=hp)
        return acc + b

    def pool(x):
        B, H, W, C = x.shape
        return x.reshape(B, H // 2, 2, W // 2, 2, C).max(axis=(2, 4))

    y = pool(jax.nn.relu(conv(x, params["w1"], params["b1"])))
    y = pool(jax.nn.relu(conv(y, params["w2"], params["b2"])))
    flat = jnp.transpose(y, (0, 3, 1, 2)).reshape(x.shape[0], -1)   # NCHW flatten
    h = jax.nn.relu(jnp.dot(flat, params["wf1"], precision=hp) + params["bf1"])
    h = jax.nn.relu(jnp.dot(h, params["wf2"], precision=hp) + params["bf2"])
    return jnp.dot(h, params["wf3"], precision=hp) + params["bf3"]


if __name__ == "__main__":
    key = jax.random.PRNGKey(0)
    k_x, k_p = jax.random.split(key)
    # fc1 (16*7*7) implies 28x28 single-channel input; batch = 2.
    x = jax.random.normal(k_x, (2, 1, 28, 28), jnp.float32)
    params = init_params(k_p)
    prep = prepare_params(params)          # weight prep done once, outside forward

    fwd = jax.jit(net_forward)
    out = jax.block_until_ready(fwd(prep, x))

    assert out.shape == (2, 10), out.shape
    assert bool(jnp.all(jnp.isfinite(out)))
    ref = ref_forward(params, x)
    # bf16 MXU operands (f32 accumulation) => slightly looser atol than pure f32.
    assert bool(jnp.allclose(out, ref, rtol=2e-2, atol=3e-3)), (out, ref)
    print("KERNEL_OK")
</pallas_src>

<mosaic_0001>
module attributes {stable_mosaic.version = 11 : i64} {
  func.func @_lenet_kernel(%arg0: i32, %arg1: memref<4x1x15x15xf32, #tpu.memory_space<vmem>>, %arg2: memref<9x14x128xbf16, #tpu.memory_space<vmem>>, %arg3: memref<1x128xf32, #tpu.memory_space<vmem>>, %arg4: memref<9x56x112xbf16, #tpu.memory_space<vmem>>, %arg5: memref<1x112xf32, #tpu.memory_space<vmem>>, %arg6: memref<7x112x128xbf16, #tpu.memory_space<vmem>>, %arg7: memref<1x128xf32, #tpu.memory_space<vmem>>, %arg8: memref<128x128xbf16, #tpu.memory_space<vmem>>, %arg9: memref<1x128xf32, #tpu.memory_space<vmem>>, %arg10: memref<128x128xbf16, #tpu.memory_space<vmem>>, %arg11: memref<1x128xf32, #tpu.memory_space<vmem>>, %arg12: memref<1x1x128xf32, #tpu.memory_space<vmem>>, %arg13: memref<1x16x128xf32, #tpu.memory_space<vmem>>) attributes {dimension_semantics = [#tpu.dimension_semantics<parallel>], iteration_bounds = array<i64: 2>, scalar_prefetch = 0 : i64, scratch_operands = 1 : i64, tpu.core_type = #tpu.core_type<tc>, window_params = [{transform_indices = @transform_0, window_bounds = array<i64: 4, 1, 15, 15>}, {pipeline_mode = #tpu.pipeline_mode<synchronous>, transform_indices = @transform_1, window_bounds = array<i64: 9, 14, 128>}, {pipeline_mode = #tpu.pipeline_mode<synchronous>, transform_indices = @transform_2, window_bounds = array<i64: 1, 128>}, {pipeline_mode = #tpu.pipeline_mode<synchronous>, transform_indices = @transform_3, window_bounds = array<i64: 9, 56, 112>}, {pipeline_mode = #tpu.pipeline_mode<synchronous>, transform_indices = @transform_4, window_bounds = array<i64: 1, 112>}, {pipeline_mode = #tpu.pipeline_mode<synchronous>, transform_indices = @transform_5, window_bounds = array<i64: 7, 112, 128>}, {pipeline_mode = #tpu.pipeline_mode<synchronous>, transform_indices = @transform_6, window_bounds = array<i64: 1, 128>}, {pipeline_mode = #tpu.pipeline_mode<synchronous>, transform_indices = @transform_7, window_bounds = array<i64: 128, 128>}, {pipeline_mode = #tpu.pipeline_mode<synchronous>, transform_indices = @transform_8, window_bounds = array<i64: 1, 128>}, {pipeline_mode = #tpu.pipeline_mode<synchronous>, transform_indices = @transform_9, window_bounds = array<i64: 128, 128>}, {pipeline_mode = #tpu.pipeline_mode<synchronous>, transform_indices = @transform_10, window_bounds = array<i64: 1, 128>}, {transform_indices = @transform_11, window_bounds = array<i64: 1, 1, 128>}]} {
    %c0 = arith.constant 0 : index
    %c0_0 = arith.constant 0 : index
    %c0_1 = arith.constant 0 : index
    %c0_2 = arith.constant 0 : index
    %0 = vector.load %arg1[%c0, %c0_0, %c0_1, %c0_2] : memref<4x1x15x15xf32, #tpu.memory_space<vmem>>, vector<1x1x15x15xf32>
    %1 = vector.shape_cast %0 : vector<1x1x15x15xf32> to vector<1x15x15xf32>
    %2 = arith.truncf %1 : vector<1x15x15xf32> to vector<1x15x15xbf16>
    %c1 = arith.constant 1 : index
    %c0_3 = arith.constant 0 : index
    %c0_4 = arith.constant 0 : index
    %c0_5 = arith.constant 0 : index
    %3 = vector.load %arg1[%c1, %c0_3, %c0_4, %c0_5] : memref<4x1x15x15xf32, #tpu.memory_space<vmem>>, vector<1x1x15x15xf32>
    %4 = vector.shape_cast %3 : vector<1x1x15x15xf32> to vector<1x15x15xf32>
    %5 = arith.truncf %4 : vector<1x15x15xf32> to vector<1x15x15xbf16>
    %c2 = arith.constant 2 : index
    %c0_6 = arith.constant 0 : index
    %c0_7 = arith.constant 0 : index
    %c0_8 = arith.constant 0 : index
    %6 = vector.load %arg1[%c2, %c0_6, %c0_7, %c0_8] : memref<4x1x15x15xf32, #tpu.memory_space<vmem>>, vector<1x1x15x15xf32>
    %7 = vector.shape_cast %6 : vector<1x1x15x15xf32> to vector<1x15x15xf32>
    %8 = arith.truncf %7 : vector<1x15x15xf32> to vector<1x15x15xbf16>
    %c3 = arith.constant 3 : index
    %c0_9 = arith.constant 0 : index
    %c0_10 = arith.constant 0 : index
    %c0_11 = arith.constant 0 : index
    %9 = vector.load %arg1[%c3, %c0_9, %c0_10, %c0_11] : memref<4x1x15x15xf32, #tpu.memory_space<vmem>>, vector<1x1x15x15xf32>
    %10 = vector.shape_cast %9 : vector<1x1x15x15xf32> to vector<1x15x15xf32>
    %11 = arith.truncf %10 : vector<1x15x15xf32> to vector<1x15x15xbf16>
    %c0_12 = arith.constant 0 : index
    %c0_13 = arith.constant 0 : index
    %c0_14 = arith.constant 0 : index
    %12 = vector.load %arg2[%c0_12, %c0_13, %c0_14] : memref<9x14x128xbf16, #tpu.memory_space<vmem>>, vector<1x14x128xbf16>
    %13 = vector.shape_cast %12 : vector<1x14x128xbf16> to vector<14x128xbf16>
    %c1_15 = arith.constant 1 : index
    %c0_16 = arith.constant 0 : index
    %c0_17 = arith.constant 0 : index
    %14 = vector.load %arg2[%c1_15, %c0_16, %c0_17] : memref<9x14x128xbf16, #tpu.memory_space<vmem>>, vector<1x14x128xbf16>
    %15 = vector.shape_cast %14 : vector<1x14x128xbf16> to vector<14x128xbf16>
    %c2_18 = arith.constant 2 : index
    %c0_19 = arith.constant 0 : index
    %c0_20 = arith.constant 0 : index
    %16 = vector.load %arg2[%c2_18, %c0_19, %c0_20] : memref<9x14x128xbf16, #tpu.memory_space<vmem>>, vector<1x14x128xbf16>
    %17 = vector.shape_cast %16 : vector<1x14x128xbf16> to vector<14x128xbf16>
    %c3_21 = arith.constant 3 : index
    %c0_22 = arith.constant 0 : index
    %c0_23 = arith.constant 0 : index
    %18 = vector.load %arg2[%c3_21, %c0_22, %c0_23] : memref<9x14x128xbf16, #tpu.memory_space<vmem>>, vector<1x14x128xbf16>
    %19 = vector.shape_cast %18 : vector<1x14x128xbf16> to vector<14x128xbf16>
    %c4 = arith.constant 4 : index
    %c0_24 = arith.constant 0 : index
    %c0_25 = arith.constant 0 : index
    %20 = vector.load %arg2[%c4, %c0_24, %c0_25] : memref<9x14x128xbf16, #tpu.memory_space<vmem>>, vector<1x14x128xbf16>
    %21 = vector.shape_cast %20 : vector<1x14x128xbf16> to vector<14x128xbf16>
    %c5 = arith.constant 5 : index
    %c0_26 = arith.constant 0 : index
    %c0_27 = arith.constant 0 : index
    %22 = vector.load %arg2[%c5, %c0_26, %c0_27] : memref<9x14x128xbf16, #tpu.memory_space<vmem>>, vector<1x14x128xbf16>
    %23 = vector.shape_cast %22 : vector<1x14x128xbf16> to vector<14x128xbf16>
    %c6 = arith.constant 6 : index
    %c0_28 = arith.constant 0 : index
    %c0_29 = arith.constant 0 : index
    %24 = vector.load %arg2[%c6, %c0_28, %c0_29] : memref<9x14x128xbf16, #tpu.memory_space<vmem>>, vector<1x14x128xbf16>
    %25 = vector.shape_cast %24 : vector<1x14x128xbf16> to vector<14x128xbf16>
    %c7 = arith.constant 7 : index
    %c0_30 = arith.constant 0 : index
    %c0_31 = arith.constant 0 : index
    %26 = vector.load %arg2[%c7, %c0_30, %c0_31] : memref<9x14x128xbf16, #tpu.memory_space<vmem>>, vector<1x14x128xbf16>
    %27 = vector.shape_cast %26 : vector<1x14x128xbf16> to vector<14x128xbf16>
    %c8 = arith.constant 8 : index
    %c0_32 = arith.constant 0 : index
    %c0_33 = arith.constant 0 : index
    %28 = vector.load %arg2[%c8, %c0_32, %c0_33] : memref<9x14x128xbf16, #tpu.memory_space<vmem>>, vector<1x14x128xbf16>
    %29 = vector.shape_cast %28 : vector<1x14x128xbf16> to vector<14x128xbf16>
    %30 = vector.extract_strided_slice %2 {offsets = [0, 0, 0], sizes = [1, 14, 14], strides = [1, 1, 1]} : vector<1x15x15xbf16> to vector<1x14x14xbf16>
    %31 = vector.shape_cast %30 : vector<1x14x14xbf16> to vector<14x14xbf16>
    %32 = vector.extract_strided_slice %5 {offsets = [0, 0, 0], sizes = [1, 14, 14], strides = [1, 1, 1]} : vector<1x15x15xbf16> to vector<1x14x14xbf16>
    %33 = vector.shape_cast %32 : vector<1x14x14xbf16> to vector<14x14xbf16>
    %34 = vector.extract_strided_slice %2 {offsets = [0, 0, 1], sizes = [1, 14, 14], strides = [1, 1, 1]} : vector<1x15x15xbf16> to vector<1x14x14xbf16>
    %35 = vector.shape_cast %34 : vector<1x14x14xbf16> to vector<14x14xbf16>
    %36 = vector.extract_strided_slice %5 {offsets = [0, 0, 1], sizes = [1, 14, 14], strides = [1, 1, 1]} : vector<1x15x15xbf16> to vector<1x14x14xbf16>
    %37 = vector.shape_cast %36 : vector<1x14x14xbf16> to vector<14x14xbf16>
    %38 = vector.extract_strided_slice %8 {offsets = [0, 0, 0], sizes = [1, 14, 14], strides = [1, 1, 1]} : vector<1x15x15xbf16> to vector<1x14x14xbf16>
    %39 = vector.shape_cast %38 : vector<1x14x14xbf16> to vector<14x14xbf16>
    %40 = vector.extract_strided_slice %11 {offsets = [0, 0, 0], sizes = [1, 14, 14], strides = [1, 1, 1]} : vector<1x15x15xbf16> to vector<1x14x14xbf16>
    %41 = vector.shape_cast %40 : vector<1x14x14xbf16> to vector<14x14xbf16>
    %42 = vector.extract_strided_slice %8 {offsets = [0, 0, 1], sizes = [1, 14, 14], strides = [1, 1, 1]} : vector<1x15x15xbf16> to vector<1x14x14xbf16>
    %43 = vector.shape_cast %42 : vector<1x14x14xbf16> to vector<14x14xbf16>
    %44 = vector.extract_strided_slice %11 {offsets = [0, 0, 1], sizes = [1, 14, 14], strides = [1, 1, 1]} : vector<1x15x15xbf16> to vector<1x14x14xbf16>
    %45 = vector.shape_cast %44 : vector<1x14x14xbf16> to vector<14x14xbf16>
    %46 = vector.extract_strided_slice %2 {offsets = [0, 1, 0], sizes = [1, 14, 14], strides = [1, 1, 1]} : vector<1x15x15xbf16> to vector<1x14x14xbf16>
    %47 = vector.shape_cast %46 : vector<1x14x14xbf16> to vector<14x14xbf16>
    %48 = vector.extract_strided_slice %5 {offsets = [0, 1, 0], sizes = [1, 14, 14], strides = [1, 1, 1]} : vector<1x15x15xbf16> to vector<1x14x14xbf16>
    %49 = vector.shape_cast %48 : vector<1x14x14xbf16> to vector<14x14xbf16>
    %50 = vector.extract_strided_slice %2 {offsets = [0, 1, 1], sizes = [1, 14, 14], strides = [1, 1, 1]} : vector<1x15x15xbf16> to vector<1x14x14xbf16>
    %51 = vector.shape_cast %50 : vector<1x14x14xbf16> to vector<14x14xbf16>
    %52 = vector.extract_strided_slice %5 {offsets = [0, 1, 1], sizes = [1, 14, 14], strides = [1, 1, 1]} : vector<1x15x15xbf16> to vector<1x14x14xbf16>
    %53 = vector.shape_cast %52 : vector<1x14x14xbf16> to vector<14x14xbf16>
    %54 = vector.extract_strided_slice %8 {offsets = [0, 1, 0], sizes = [1, 14, 14], strides = [1, 1, 1]} : vector<1x15x15xbf16> to vector<1x14x14xbf16>
    %55 = vector.shape_cast %54 : vector<1x14x14xbf16> to vector<14x14xbf16>
    %56 = vector.extract_strided_slice %11 {offsets = [0, 1, 0], sizes = [1, 14, 14], strides = [1, 1, 1]} : vector<1x15x15xbf16> to vector<1x14x14xbf16>
    %57 = vector.shape_cast %56 : vector<1x14x14xbf16> to vector<14x14xbf16>
    %58 = vector.extract_strided_slice %8 {offsets = [0, 1, 1], sizes = [1, 14, 14], strides = [1, 1, 1]} : vector<1x15x15xbf16> to vector<1x14x14xbf16>
    %59 = vector.shape_cast %58 : vector<1x14x14xbf16> to vector<14x14xbf16>
    %60 = vector.extract_strided_slice %11 {offsets = [0, 1, 1], sizes = [1, 14, 14], strides = [1, 1, 1]} : vector<1x15x15xbf16> to vector<1x14x14xbf16>
    %61 = vector.shape_cast %60 : vector<1x14x14xbf16> to vector<14x14xbf16>
    %cst = arith.constant dense<0.000000e+00> : vector<14x128xf32>
    %62 = tpu.matmul %31, %13, %cst {dimension_numbers = #tpu.dot_dimension_numbers<[1], [0], [0], [1], [0, 0, 1, 1], [], []>} : vector<14x14xbf16>, vector<14x128xbf16>, vector<14x128xf32> -> vector<14x128xf32>
    %cst_34 = arith.constant dense<0.000000e+00> : vector<14x128xf32>
    %63 = tpu.matmul %33, %15, %cst_34 {dimension_numbers = #tpu.dot_dimension_numbers<[1], [0], [0], [1], [0, 0, 1, 1], [], []>} : vector<14x14xbf16>, vector<14x128xbf16>, vector<14x128xf32> -> vector<14x128xf32>
    %64 = arith.addf %62, %63 : vector<14x128xf32>
    %cst_35 = arith.constant dense<0.000000e+00> : vector<14x128xf32>
    %65 = tpu.matmul %35, %17, %cst_35 {dimension_numbers = #tpu.dot_dimension_numbers<[1], [0], [0], [1], [0, 0, 1, 1], [], []>} : vector<14x14xbf16>, vector<14x128xbf16>, vector<14x128xf32> -> vector<14x128xf32>
    %66 = arith.addf %64, %65 : vector<14x128xf32>
    %cst_36 = arith.constant dense<0.000000e+00> : vector<14x128xf32>
    %67 = tpu.matmul %39, %19, %cst_36 {dimension_numbers = #tpu.dot_dimension_numbers<[1], [0], [0], [1], [0, 0, 1, 1], [], []>} : vector<14x14xbf16>, vector<14x128xbf16>, vector<14x128xf32> -> vector<14x128xf32>
    %68 = arith.addf %66, %67 : vector<14x128xf32>
    %cst_37 = arith.constant dense<0.000000e+00> : vector<14x128xf32>
    %69 = tpu.matmul %41, %21, %cst_37 {dimension_numbers = #tpu.dot_dimension_numbers<[1], [0], [0], [1], [0, 0, 1, 1], [], []>} : vector<14x14xbf16>, vector<14x128xbf16>, vector<14x128xf32> -> vector<14x128xf32>
    %70 = arith.addf %68, %69 : vector<14x128xf32>
    %cst_38 = arith.constant dense<0.000000e+00> : vector<14x128xf32>
    %71 = tpu.matmul %43, %23, %cst_38 {dimension_numbers = #tpu.dot_dimension_numbers<[1], [0], [0], [1], [0, 0, 1, 1], [], []>} : vector<14x14xbf16>, vector<14x128xbf16>, vector<14x128xf32> -> vector<14x128xf32>
    %72 = arith.addf %70, %71 : vector<14x128xf32>
    %cst_39 = arith.constant dense<0.000000e+00> : vector<14x128xf32>
    %73 = tpu.matmul %47, %25, %cst_39 {dimension_numbers = #tpu.dot_dimension_numbers<[1], [0], [0], [1], [0, 0, 1, 1], [], []>} : vector<14x14xbf16>, vector<14x128xbf16>, vector<14x128xf32> -> vector<14x128xf32>
    %74 = arith.addf %72, %73 : vector<14x128xf32>
    %cst_40 = arith.constant dense<0.000000e+00> : vector<14x128xf32>
    %75 = tpu.matmul %49, %27, %cst_40 {dimension_numbers = #tpu.dot_dimension_numbers<[1], [0], [0], [1], [0, 0, 1, 1], [], []>} : vector<14x14xbf16>, vector<14x128xbf16>, vector<14x128xf32> -> vector<14x128xf32>
    %76 = arith.addf %74, %75 : vector<14x128xf32>
    %cst_41 = arith.constant dense<0.000000e+00> : vector<14x128xf32>
    %77 = tpu.matmul %51, %29, %cst_41 {dimension_numbers = #tpu.dot_dimension_numbers<[1], [0], [0], [1], [0, 0, 1, 1], [], []>} : vector<14x14xbf16>, vector<14x128xbf16>, vector<14x128xf32> -> vector<14x128xf32>
    %78 = arith.addf %76, %77 : vector<14x128xf32>
    %cst_42 = arith.constant dense<0.000000e+00> : vector<14x128xf32>
    %79 = tpu.matmul %33, %13, %cst_42 {dimension_numbers = #tpu.dot_dimension_numbers<[1], [0], [0], [1], [0, 0, 1, 1], [], []>} : vector<14x14xbf16>, vector<14x128xbf16>, vector<14x128xf32> -> vector<14x128xf32>
    %cst_43 = arith.constant dense<0.000000e+00> : vector<14x128xf32>
    %80 = tpu.matmul %35, %15, %cst_43 {dimension_numbers = #tpu.dot_dimension_numbers<[1], [0], [0], [1], [0, 0, 1, 1], [], []>} : vector<14x14xbf16>, vector<14x128xbf16>, vector<14x128xf32> -> vector<14x128xf32>
    %81 = arith.addf %79, %80 : vector<14x128xf32>
    %cst_44 = arith.constant dense<0.000000e+00> : vector<14x128xf32>
    %82 = tpu.matmul %37, %17, %cst_44 {dimension_numbers = #tpu.dot_dimension_numbers<[1], [0], [0], [1], [0, 0, 1, 1], [], []>} : vector<14x14xbf16>, vector<14x128xbf16>, vector<14x128xf32> -> vector<14x128xf32>
    %83 = arith.addf %81, %82 : vector<14x128xf32>
    %cst_45 = arith.constant dense<0.000000e+00> : vector<14x128xf32>
    %84 = tpu.matmul %41, %19, %cst_45 {dimension_numbers = #tpu.dot_dimension_numbers<[1], [0], [0], [1], [0, 0, 1, 1], [], []>} : vector<14x14xbf16>, vector<14x128xbf16>, vector<14x128xf32> -> vector<14x128xf32>
    %85 = arith.addf %83, %84 : vector<14x128xf32>
    %cst_46 = arith.constant dense<0.000000e+00> : vector<14x128xf32>
    %86 = tpu.matmul %43, %21, %cst_46 {dimension_numbers = #tpu.dot_dimension_numbers<[1], [0], [0], [1], [0, 0, 1, 1], [], []>} : vector<14x14xbf16>, vector<14x128xbf16>, vector<14x128xf32> -> vector<14x128xf32>
    %87 = arith.addf %85, %86 : vector<14x128xf32>
    %cst_47 = arith.constant dense<0.000000e+00> : vector<14x128xf32>
    %88 = tpu.matmul %45, %23, %cst_47 {dimension_numbers = #tpu.dot_dimension_numbers<[1], [0], [0], [1], [0, 0, 1, 1], [], []>} : vector<14x14xbf16>, vector<14x128xbf16>, vector<14x128xf32> -> vector<14x128xf32>
    %89 = arith.addf %87, %88 : vector<14x128xf32>
    %cst_48 = arith.constant dense<0.000000e+00> : vector<14x128xf32>
    %90 = tpu.matmul %49, %25, %cst_48 {dimension_numbers = #tpu.dot_dimension_numbers<[1], [0], [0], [1], [0, 0, 1, 1], [], []>} : vector<14x14xbf16>, vector<14x128xbf16>, vector<14x128xf32> -> vector<14x128xf32>
    %91 = arith.addf %89, %90 : vector<14x128xf32>
    %cst_49 = arith.constant dense<0.000000e+00> : vector<14x128xf32>
    %92 = tpu.matmul %51, %27, %cst_49 {dimension_numbers = #tpu.dot_dimension_numbers<[1], [0], [0], [1], [0, 0, 1, 1], [], []>} : vector<14x14xbf16>, vector<14x128xbf16>, vector<14x128xf32> -> vector<14x128xf32>
    %93 = arith.addf %91, %92 : vector<14x128xf32>
    %cst_50 = arith.constant dense<0.000000e+00> : vector<14x128xf32>
    %94 = tpu.matmul %53, %29, %cst_50 {dimension_numbers = #tpu.dot_dimension_numbers<[1], [0], [0], [1], [0, 0, 1, 1], [], []>} : vector<14x14xbf16>, vector<14x128xbf16>, vector<14x128xf32> -> vector<14x128xf32>
    %95 = arith.addf %93, %94 : vector<14x128xf32>
    %96 = arith.maximumf %78, %95 : vector<14x128xf32>
    %cst_51 = arith.constant dense<0.000000e+00> : vector<14x128xf32>
    %97 = tpu.matmul %39, %13, %cst_51 {dimension_numbers = #tpu.dot_dimension_numbers<[1], [0], [0], [1], [0, 0, 1, 1], [], []>} : vector<14x14xbf16>, vector<14x128xbf16>, vector<14x128xf32> -> vector<14x128xf32>
    %cst_52 = arith.constant dense<0.000000e+00> : vector<14x128xf32>
    %98 = tpu.matmul %41, %15, %cst_52 {dimension_numbers = #tpu.dot_dimension_numbers<[1], [0], [0], [1], [0, 0, 1, 1], [], []>} : vector<14x14xbf16>, vector<14x128xbf16>, vector<14x128xf32> -> vector<14x128xf32>
    %99 = arith.addf %97, %98 : vector<14x128xf32>
    %cst_53 = arith.constant dense<0.000000e+00> : vector<14x128xf32>
    %100 = tpu.matmul %43, %17, %cst_53 {dimension_numbers = #tpu.dot_dimension_numbers<[1], [0], [0], [1], [0, 0, 1, 1], [], []>} : vector<14x14xbf16>, vector<14x128xbf16>, vector<14x128xf32> -> vector<14x128xf32>
    %101 = arith.addf %99, %100 : vector<14x128xf32>
    %cst_54 = arith.constant dense<0.000000e+00> : vector<14x128xf32>
    %102 = tpu.matmul %47, %19, %cst_54 {dimension_numbers = #tpu.dot_dimension_numbers<[1], [0], [0], [1], [0, 0, 1, 1], [], []>} : vector<14x14xbf16>, vector<14x128xbf16>, vector<14x128xf32> -> vector<14x128xf32>
    %103 = arith.addf %101, %102 : vector<14x128xf32>
    %cst_55 = arith.constant dense<0.000000e+00> : vector<14x128xf32>
    %104 = tpu.matmul %49, %21, %cst_55 {dimension_numbers = #tpu.dot_dimension_numbers<[1], [0], [0], [1], [0, 0, 1, 1], [], []>} : vector<14x14xbf16>, vector<14x128xbf16>, vector<14x128xf32> -> vector<14x128xf32>
    %105 = arith.addf %103, %104 : vector<14x128xf32>
    %cst_56 = arith.constant dense<0.000000e+00> : vector<14x128xf32>
    %106 = tpu.matmul %51, %23, %cst_56 {dimension_numbers = #tpu.dot_dimension_numbers<[1], [0], [0], [1], [0, 0, 1, 1], [], []>} : vector<14x14xbf16>, vector<14x128xbf16>, vector<14x128xf32> -> vector<14x128xf32>
    %107 = arith.addf %105, %106 : vector<14x128xf32>
    %cst_57 = arith.constant dense<0.000000e+00> : vector<14x128xf32>
    %108 = tpu.matmul %55, %25, %cst_57 {dimension_numbers = #tpu.dot_dimension_numbers<[1], [0], [0], [1], [0, 0, 1, 1], [], []>} : vector<14x14xbf16>, vector<14x128xbf16>, vector<14x128xf32> -> vector<14x128xf32>
    %109 = arith.addf %107, %108 : vector<14x128xf32>
    %cst_58 = arith.constant dense<0.000000e+00> : vector<14x128xf32>
    %110 = tpu.matmul %57, %27, %cst_58 {dimension_numbers = #tpu.dot_dimension_numbers<[1], [0], [0], [1], [0, 0, 1, 1], [], []>} : vector<14x14xbf16>, vector<14x128xbf16>, vector<14x128xf32> -> vector<14x128xf32>
    %111 = arith.addf %109, %110 : vector<14x128xf32>
    %cst_59 = arith.constant dense<0.000000e+00> : vector<14x128xf32>
    %112 = tpu.matmul %59, %29, %cst_59 {dimension_numbers = #tpu.dot_dimension_numbers<[1], [0], [0], [1], [0, 0, 1, 1], [], []>} : vector<14x14xbf16>, vector<14x128xbf16>, vector<14x128xf32> -> vector<14x128xf32>
    %113 = arith.addf %111, %112 : vector<14x128xf32>
    %114 = arith.maximumf %96, %113 : vector<14x128xf32>
    %cst_60 = arith.constant dense<0.000000e+00> : vector<14x128xf32>
    %115 = tpu.matmul %41, %13, %cst_60 {dimension_numbers = #tpu.dot_dimension_numbers<[1], [0], [0], [1], [0, 0, 1, 1], [], []>} : vector<14x14xbf16>, vector<14x128xbf16>, vector<14x128xf32> -> vector<14x128xf32>
    %cst_61 = arith.constant dense<0.000000e+00> : vector<14x128xf32>
    %116 = tpu.matmul %43, %15, %cst_61 {dimension_numbers = #tpu.dot_dimension_numbers<[1], [0], [0], [1], [0, 0, 1, 1], [], []>} : vector<14x14xbf16>, vector<14x128xbf16>, vector<14x128xf32> -> vector<14x128xf32>
    %117 = arith.addf %115, %116 : vector<14x128xf32>
    %cst_62 = arith.constant dense<0.000000e+00> : vector<14x128xf32>
    %118 = tpu.matmul %45, %17, %cst_62 {dimension_numbers = #tpu.dot_dimension_numbers<[1], [0], [0], [1], [0, 0, 1, 1], [], []>} : vector<14x14xbf16>, vector<14x128xbf16>, vector<14x128xf32> -> vector<14x128xf32>
    %119 = arith.addf %117, %118 : vector<14x128xf32>
    %cst_63 = arith.constant dense<0.000000e+00> : vector<14x128xf32>
    %120 = tpu.matmul %49, %19, %cst_63 {dimension_numbers = #tpu.dot_dimension_numbers<[1], [0], [0], [1], [0, 0, 1, 1], [], []>} : vector<14x14xbf16>, vector<14x128xbf16>, vector<14x128xf32> -> vector<14x128xf32>
    %121 = arith.addf %119, %120 : vector<14x128xf32>
    %cst_64 = arith.constant dense<0.000000e+00> : vector<14x128xf32>
    %122 = tpu.matmul %51, %21, %cst_64 {dimension_numbers = #tpu.dot_dimension_numbers<[1], [0], [0], [1], [0, 0, 1, 1], [], []>} : vector<14x14xbf16>, vector<14x128xbf16>, vector<14x128xf32> -> vector<14x128xf32>
    %123 = arith.addf %121, %122 : vector<14x128xf32>
    %cst_65 = arith.constant dense<0.000000e+00> : vector<14x128xf32>
    %124 = tpu.matmul %53, %23, %cst_65 {dimension_numbers = #tpu.dot_dimension_numbers<[1], [0], [0], [1], [0, 0, 1, 1], [], []>} : vector<14x14xbf16>, vector<14x128xbf16>, vector<14x128xf32> -> vector<14x128xf32>
    %125 = arith.addf %123, %124 : vector<14x128xf32>
    %cst_66 = arith.constant dense<0.000000e+00> : vector<14x128xf32>
    %126 = tpu.matmul %57, %25, %cst_66 {dimension_numbers = #tpu.dot_dimension_numbers<[1], [0], [0], [1], [0, 0, 1, 1], [], []>} : vector<14x14xbf16>, vector<14x128xbf16>, vector<14x128xf32> -> vector<14x128xf32>
    %127 = arith.addf %125, %126 : vector<14x128xf32>
    %cst_67 = arith.constant dense<0.000000e+00> : vector<14x128xf32>
    %128 = tpu.matmul %59, %27, %cst_67 {dimension_numbers = #tpu.dot_dimension_numbers<[1], [0], [0], [1], [0, 0, 1, 1], [], []>} : vector<14x14xbf16>, vector<14x128xbf16>, vector<14x128xf32> -> vector<14x128xf32>
    %129 = arith.addf %127, %128 : vector<14x128xf32>
    %cst_68 = arith.constant dense<0.000000e+00> : vector<14x128xf32>
    %130 = tpu.matmul %61, %29, %cst_68 {dimension_numbers = #tpu.dot_dimension_numbers<[1], [0], [0], [1], [0, 0, 1, 1], [], []>} : vector<14x14xbf16>, vector<14x128xbf16>, vector<14x128xf32> -> vector<14x128xf32>
    %131 = arith.addf %129, %130 : vector<14x128xf32>
    %132 = arith.maximumf %114, %131 : vector<14x128xf32>
    %c0_69 = arith.constant 0 : index
    %c0_70 = arith.constant 0 : index
    %133 = vector.load %arg3[%c0_69, %c0_70] : memref<1x128xf32, #tpu.memory_space<vmem>>, vector<1x128xf32>
    %134 = vector.broadcast %133 : vector<1x128xf32> to vector<14x128xf32>
    %135 = arith.addf %132, %134 : vector<14x128xf32>
    %cst_71 = arith.constant 0.000000e+00 : f32
    %136 = vector.broadcast %cst_71 : f32 to vector<14x128xf32>
    %137 = arith.maximumf %135, %136 : vector<14x128xf32>
    %138 = vector.shape_cast %137 : vector<14x128xf32> to vector<1x14x128xf32>
    %c0_72 = arith.constant 0 : index
    %c1_73 = arith.constant 1 : index
    %c0_74 = arith.constant 0 : index
    %139 = vector.load %arg13[%c0_72, %c1_73, %c0_74] : memref<1x16x128xf32, #tpu.memory_space<vmem>>, vector<1x14x128xf32>
    tpu.vector_store %arg13[%c0_72, %c1_73, %c0_74], %138 {strides = array<i32>} : memref<1x16x128xf32, #tpu.memory_space<vmem>>, vector<1x14x128xf32>,
    %cst_75 = arith.constant 0.000000e+00 : f32
    %140 = vector.broadcast %cst_75 : f32 to vector<1x1x128xf32>
    %c0_76 = arith.constant 0 : index
    %c0_77 = arith.constant 0 : index
    %c0_78 = arith.constant 0 : index
    %141 = vector.load %arg13[%c0_76, %c0_77, %c0_78] : memref<1x16x128xf32, #tpu.memory_space<vmem>>, vector<1x1x128xf32>
    tpu.vector_store %arg13[%c0_76, %c0_77, %c0_78], %140 {strides = array<i32>} : memref<1x16x128xf32, #tpu.memory_space<vmem>>, vector<1x1x128xf32>,
    %cst_79 = arith.constant 0.000000e+00 : f32
    %142 = vector.broadcast %cst_79 : f32 to vector<1x1x128xf32>
    %c0_80 = arith.constant 0 : index
    %c15 = arith.constant 15 : index
    %c0_81 = arith.constant 0 : index
    %143 = vector.load %arg13[%c0_80, %c15, %c0_81] : memref<1x16x128xf32, #tpu.memory_space<vmem>>, vector<1x1x128xf32>
    tpu.vector_store %arg13[%c0_80, %c15, %c0_81], %142 {strides = array<i32>} : memref<1x16x128xf32, #tpu.memory_space<vmem>>, vector<1x1x128xf32>,
    %c0_82 = arith.constant 0 : index
    %c0_83 = arith.constant 0 : index
    %c0_84 = arith.constant 0 : index
    %144 = vector.load %arg4[%c0_82, %c0_83, %c0_84] : memref<9x56x112xbf16, #tpu.memory_space<vmem>>, vector<1x56x112xbf16>
    %145 = vector.shape_cast %144 : vector<1x56x112xbf16> to vector<56x112xbf16>
    %c1_85 = arith.constant 1 : index
    %c0_86 = arith.constant 0 : index
    %c0_87 = arith.constant 0 : index
    %146 = vector.load %arg4[%c1_85, %c0_86, %c0_87] : memref<9x56x112xbf16, #tpu.memory_space<vmem>>, vector<1x56x112xbf16>
    %147 = vector.shape_cast %146 : vector<1x56x112xbf16> to vector<56x112xbf16>
    %c2_88 = arith.constant 2 : index
    %c0_89 = arith.constant 0 : index
    %c0_90 = arith.constant 0 : index
    %148 = vector.load %arg4[%c2_88, %c0_89, %c0_90] : memref<9x56x112xbf16, #tpu.memory_space<vmem>>, vector<1x56x112xbf16>
    %149 = vector.shape_cast %148 : vector<1x56x112xbf16> to vector<56x112xbf16>
    %c3_91 = arith.constant 3 : index
    %c0_92 = arith.constant 0 : index
    %c0_93 = arith.constant 0 : index
    %150 = vector.load %arg4[%c3_91, %c0_92, %c0_93] : memref<9x56x112xbf16, #tpu.memory_space<vmem>>, vector<1x56x112xbf16>
    %151 = vector.shape_cast %150 : vector<1x56x112xbf16> to vector<56x112xbf16>
    %c4_94 = arith.constant 4 : index
    %c0_95 = arith.constant 0 : index
    %c0_96 = arith.constant 0 : index
    %152 = vector.load %arg4[%c4_94, %c0_95, %c0_96] : memref<9x56x112xbf16, #tpu.memory_space<vmem>>, vector<1x56x112xbf16>
    %153 = vector.shape_cast %152 : vector<1x56x112xbf16> to vector<56x112xbf16>
    %c5_97 = arith.constant 5 : index
    %c0_98 = arith.constant 0 : index
    %c0_99 = arith.constant 0 : index
    %154 = vector.load %arg4[%c5_97, %c0_98, %c0_99] : memref<9x56x112xbf16, #tpu.memory_space<vmem>>, vector<1x56x112xbf16>
    %155 = vector.shape_cast %154 : vector<1x56x112xbf16> to vector<56x112xbf16>
    %c6_100 = arith.constant 6 : index
    %c0_101 = arith.constant 0 : index
    %c0_102 = arith.constant 0 : index
    %156 = vector.load %arg4[%c6_100, %c0_101, %c0_102] : memref<9x56x112xbf16, #tpu.memory_space<vmem>>, vector<1x56x112xbf16>
    %157 = vector.shape_cast %156 : vector<1x56x112xbf16> to vector<56x112xbf16>
    %c7_103 = arith.constant 7 : index
    %c0_104 = arith.constant 0 : index
    %c0_105 = arith.constant 0 : index
    %158 = vector.load %arg4[%c7_103, %c0_104, %c0_105] : memref<9x56x112xbf16, #tpu.memory_space<vmem>>, vector<1x56x112xbf16>
    %159 = vector.shape_cast %158 : vector<1x56x112xbf16> to vector<56x112xbf16>
    %c8_106 = arith.constant 8 : index
    %c0_107 = arith.constant 0 : index
    %c0_108 = arith.constant 0 : index
    %160 = vector.load %arg4[%c8_106, %c0_107, %c0_108] : memref<9x56x112xbf16, #tpu.memory_space<vmem>>, vector<1x56x112xbf16>
    %161 = vector.shape_cast %160 : vector<1x56x112xbf16> to vector<56x112xbf16>
    %c0_109 = arith.constant 0 : index
    %c0_110 = arith.constant 0 : index
    %c0_111 = arith.constant 0 : index
    %162 = tpu.strided_load %arg13[%c0_109, %c0_110, %c0_111] {strides = array<i32: 1, 2, 1>} : memref<1x16x128xf32, #tpu.memory_space<vmem>>, vector<1x7x128xf32>
    %163 = vector.extract_strided_slice %162 {offsets = [0, 0, 64], sizes = [1, 7, 56], strides = [1, 1, 1]} : vector<1x7x128xf32> to vector<1x7x56xf32>
    %164 = vector.shape_cast %163 : vector<1x7x56xf32> to vector<7x56xf32>
    %165 = arith.truncf %164 : vector<7x56xf32> to vector<7x56xbf16>
    %166 = vector.extract_strided_slice %162 {offsets = [0, 0, 0], sizes = [1, 7, 56], strides = [1, 1, 1]} : vector<1x7x128xf32> to vector<1x7x56xf32>
    %167 = vector.shape_cast %166 : vector<1x7x56xf32> to vector<7x56xf32>
    %168 = arith.truncf %167 : vector<7x56xf32> to vector<7x56xbf16>
    %169 = vector.extract_strided_slice %162 {offsets = [0, 0, 72], sizes = [1, 7, 56], strides = [1, 1, 1]} : vector<1x7x128xf32> to vector<1x7x56xf32>
    %170 = vector.shape_cast %169 : vector<1x7x56xf32> to vector<7x56xf32>
    %171 = arith.truncf %170 : vector<7x56xf32> to vector<7x56xbf16>
    %172 = vector.extract_strided_slice %162 {offsets = [0, 0, 8], sizes = [1, 7, 56], strides = [1, 1, 1]} : vector<1x7x128xf32> to vector<1x7x56xf32>
    %173 = vector.shape_cast %172 : vector<1x7x56xf32> to vector<7x56xf32>
    %174 = arith.truncf %173 : vector<7x56xf32> to vector<7x56xbf16>
    %c0_112 = arith.constant 0 : index
    %c1_113 = arith.constant 1 : index
    %c0_114 = arith.constant 0 : index
    %175 = tpu.strided_load %arg13[%c0_112, %c1_113, %c0_114] {strides = array<i32: 1, 2, 1>} : memref<1x16x128xf32, #tpu.memory_space<vmem>>, vector<1x7x128xf32>
    %176 = vector.extract_strided_slice %175 {offsets = [0, 0, 64], sizes = [1, 7, 56], strides = [1, 1, 1]} : vector<1x7x128xf32> to vector<1x7x56xf32>
    %177 = vector.shape_cast %176 : vector<1x7x56xf32> to vector<7x56xf32>
    %178 = arith.truncf %177 : vector<7x56xf32> to vector<7x56xbf16>
    %179 = vector.extract_strided_slice %175 {offsets = [0, 0, 0], sizes = [1, 7, 56], strides = [1, 1, 1]} : vector<1x7x128xf32> to vector<1x7x56xf32>
    %180 = vector.shape_cast %179 : vector<1x7x56xf32> to vector<7x56xf32>
    %181 = arith.truncf %180 : vector<7x56xf32> to vector<7x56xbf16>
    %182 = vector.extract_strided_slice %175 {offsets = [0, 0, 72], sizes = [1, 7, 56], strides = [1, 1, 1]} : vector<1x7x128xf32> to vector<1x7x56xf32>
    %183 = vector.shape_cast %182 : vector<1x7x56xf32> to vector<7x56xf32>
    %184 = arith.truncf %183 : vector<7x56xf32> to vector<7x56xbf16>
    %185 = vector.extract_strided_slice %175 {offsets = [0, 0, 8], sizes = [1, 7, 56], strides = [1, 1, 1]} : vector<1x7x128xf32> to vector<1x7x56xf32>
    %186 = vector.shape_cast %185 : vector<1x7x56xf32> to vector<7x56xf32>
    %187 = arith.truncf %186 : vector<7x56xf32> to vector<7x56xbf16>
    %c0_115 = arith.constant 0 : index
    %c2_116 = arith.constant 2 : index
    %c0_117 = arith.constant 0 : index
    %188 = tpu.strided_load %arg13[%c0_115, %c2_116, %c0_117] {strides = array<i32: 1, 2, 1>} : memref<1x16x128xf32, #tpu.memory_space<vmem>>, vector<1x7x128xf32>
    %189 = vector.extract_strided_slice %188 {offsets = [0, 0, 64], sizes = [1, 7, 56], strides = [1, 1, 1]} : vector<1x7x128xf32> to vector<1x7x56xf32>
    %190 = vector.shape_cast %189 : vector<1x7x56xf32> to vector<7x56xf32>
    %191 = arith.truncf %190 : vector<7x56xf32> to vector<7x56xbf16>
    %192 = vector.extract_strided_slice %188 {offsets = [0, 0, 0], sizes = [1, 7, 56], strides = [1, 1, 1]} : vector<1x7x128xf32> to vector<1x7x56xf32>
    %193 = vector.shape_cast %192 : vector<1x7x56xf32> to vector<7x56xf32>
    %194 = arith.truncf %193 : vector<7x56xf32> to vector<7x56xbf16>
    %195 = vector.extract_strided_slice %188 {offsets = [0, 0, 72], sizes = [1, 7, 56], strides = [1, 1, 1]} : vector<1x7x128xf32> to vector<1x7x56xf32>
    %196 = vector.shape_cast %195 : vector<1x7x56xf32> to vector<7x56xf32>
    %197 = arith.truncf %196 : vector<7x56xf32> to vector<7x56xbf16>
    %198 = vector.extract_strided_slice %188 {offsets = [0, 0, 8], sizes = [1, 7, 56], strides = [1, 1, 1]} : vector<1x7x128xf32> to vector<1x7x56xf32>
    %199 = vector.shape_cast %198 : vector<1x7x56xf32> to vector<7x56xf32>
    %200 = arith.truncf %199 : vector<7x56xf32> to vector<7x56xbf16>
    %c0_118 = arith.constant 0 : index
    %c3_119 = arith.constant 3 : index
    %c0_120 = arith.constant 0 : index
    %201 = tpu.strided_load %arg13[%c0_118, %c3_119, %c0_120] {strides = array<i32: 1, 2, 1>} : memref<1x16x128xf32, #tpu.memory_space<vmem>>, vector<1x7x128xf32>
    %202 = vector.extract_strided_slice %201 {offsets = [0, 0, 64], sizes = [1, 7, 56], strides = [1, 1, 1]} : vector<1x7x128xf32> to vector<1x7x56xf32>
    %203 = vector.shape_cast %202 : vector<1x7x56xf32> to vector<7x56xf32>
    %204 = arith.truncf %203 : vector<7x56xf32> to vector<7x56xbf16>
    %205 = vector.extract_strided_slice %201 {offsets = [0, 0, 0], sizes = [1, 7, 56], strides = [1, 1, 1]} : vector<1x7x128xf32> to vector<1x7x56xf32>
    %206 = vector.shape_cast %205 : vector<1x7x56xf32> to vector<7x56xf32>
    %207 = arith.truncf %206 : vector<7x56xf32> to vector<7x56xbf16>
    %208 = vector.extract_strided_slice %201 {offsets = [0, 0, 72], sizes = [1, 7, 56], strides = [1, 1, 1]} : vector<1x7x128xf32> to vector<1x7x56xf32>
    %209 = vector.shape_cast %208 : vector<1x7x56xf32> to vector<7x56xf32>
    %210 = arith.truncf %209 : vector<7x56xf32> to vector<7x56xbf16>
    %211 = vector.extract_strided_slice %201 {offsets = [0, 0, 8], sizes = [1, 7, 56], strides = [1, 1, 1]} : vector<1x7x128xf32> to vector<1x7x56xf32>
    %212 = vector.shape_cast %211 : vector<1x7x56xf32> to vector<7x56xf32>
    %213 = arith.truncf %212 : vector<7x56xf32> to vector<7x56xbf16>
    %cst_121 = arith.constant dense<0.000000e+00> : vector<7x112xf32>
    %214 = tpu.matmul %165, %145, %cst_121 {dimension_numbers = #tpu.dot_dimension_numbers<[1], [0], [0], [1], [0, 0, 1, 1], [], []>} : vector<7x56xbf16>, vector<56x112xbf16>, vector<7x112xf32> -> vector<7x112xf32>
    %cst_122 = arith.constant dense<0.000000e+00> : vector<7x112xf32>
    %215 = tpu.matmul %168, %147, %cst_122 {dimension_numbers = #tpu.dot_dimension_numbers<[1], [0], [0], [1], [0, 0, 1, 1], [], []>} : vector<7x56xbf16>, vector<56x112xbf16>, vector<7x112xf32> -> vector<7x112xf32>
    %216 = arith.addf %214, %215 : vector<7x112xf32>
    %cst_123 = arith.constant dense<0.000000e+00> : vector<7x112xf32>
    %217 = tpu.matmul %171, %149, %cst_123 {dimension_numbers = #tpu.dot_dimension_numbers<[1], [0], [0], [1], [0, 0, 1, 1], [], []>} : vector<7x56xbf16>, vector<56x112xbf16>, vector<7x112xf32> -> vector<7x112xf32>
    %218 = arith.addf %216, %217 : vector<7x112xf32>
    %cst_124 = arith.constant dense<0.000000e+00> : vector<7x112xf32>
    %219 = tpu.matmul %178, %151, %cst_124 {dimension_numbers = #tpu.dot_dimension_numbers<[1], [0], [0], [1], [0, 0, 1, 1], [], []>} : vector<7x56xbf16>, vector<56x112xbf16>, vector<7x112xf32> -> vector<7x112xf32>
    %220 = arith.addf %218, %219 : vector<7x112xf32>
    %cst_125 = arith.constant dense<0.000000e+00> : vector<7x112xf32>
    %221 = tpu.matmul %181, %153, %cst_125 {dimension_numbers = #tpu.dot_dimension_numbers<[1], [0], [0], [1], [0, 0, 1, 1], [], []>} : vector<7x56xbf16>, vector<56x112xbf16>, vector<7x112xf32> -> vector<7x112xf32>
    %222 = arith.addf %220, %221 : vector<7x112xf32>
    %cst_126 = arith.constant dense<0.000000e+00> : vector<7x112xf32>
    %223 = tpu.matmul %184, %155, %cst_126 {dimension_numbers = #tpu.dot_dimension_numbers<[1], [0], [0], [1], [0, 0, 1, 1], [], []>} : vector<7x56xbf16>, vector<56x112xbf16>, vector<7x112xf32> -> vector<7x112xf32>
    %224 = arith.addf %222, %223 : vector<7x112xf32>
    %cst_127 = arith.constant dense<0.000000e+00> : vector<7x112xf32>
    %225 = tpu.matmul %191, %157, %cst_127 {dimension_numbers = #tpu.dot_dimension_numbers<[1], [0], [0], [1], [0, 0, 1, 1], [], []>} : vector<7x56xbf16>, vector<56x112xbf16>, vector<7x112xf32> -> vector<7x112xf32>
    %226 = arith.addf %224, %225 : vector<7x112xf32>
    %cst_128 = arith.constant dense<0.000000e+00> : vector<7x112xf32>
    %227 = tpu.matmul %194, %159, %cst_128 {dimension_numbers = #tpu.dot_dimension_numbers<[1], [0], [0], [1], [0, 0, 1, 1], [], []>} : vector<7x56xbf16>, vector<56x112xbf16>, vector<7x112xf32> -> vector<7x112xf32>
    %228 = arith.addf %226, %227 : vector<7x112xf32>
    %cst_129 = arith.constant dense<0.000000e+00> : vector<7x112xf32>
    %229 = tpu.matmul %197, %161, %cst_129 {dimension_numbers = #tpu.dot_dimension_numbers<[1], [0], [0], [1], [0, 0, 1, 1], [], []>} : vector<7x56xbf16>, vector<56x112xbf16>, vector<7x112xf32> -> vector<7x112xf32>
    %230 = arith.addf %228, %229 : vector<7x112xf32>
    %cst_130 = arith.constant dense<0.000000e+00> : vector<7x112xf32>
    %231 = tpu.matmul %168, %145, %cst_130 {dimension_numbers = #tpu.dot_dimension_numbers<[1], [0], [0], [1], [0, 0, 1, 1], [], []>} : vector<7x56xbf16>, vector<56x112xbf16>, vector<7x112xf32> -> vector<7x112xf32>
    %cst_131 = arith.constant dense<0.000000e+00> : vector<7x112xf32>
    %232 = tpu.matmul %171, %147, %cst_131 {dimension_numbers = #tpu.dot_dimension_numbers<[1], [0], [0], [1], [0, 0, 1, 1], [], []>} : vector<7x56xbf16>, vector<56x112xbf16>, vector<7x112xf32> -> vector<7x112xf32>
    %233 = arith.addf %231, %232 : vector<7x112xf32>
    %cst_132 = arith.constant dense<0.000000e+00> : vector<7x112xf32>
    %234 = tpu.matmul %174, %149, %cst_132 {dimension_numbers = #tpu.dot_dimension_numbers<[1], [0], [0], [1], [0, 0, 1, 1], [], []>} : vector<7x56xbf16>, vector<56x112xbf16>, vector<7x112xf32> -> vector<7x112xf32>
    %235 = arith.addf %233, %234 : vector<7x112xf32>
    %cst_133 = arith.constant dense<0.000000e+00> : vector<7x112xf32>
    %236 = tpu.matmul %181, %151, %cst_133 {dimension_numbers = #tpu.dot_dimension_numbers<[1], [0], [0], [1], [0, 0, 1, 1], [], []>} : vector<7x56xbf16>, vector<56x112xbf16>, vector<7x112xf32> -> vector<7x112xf32>
    %237 = arith.addf %235, %236 : vector<7x112xf32>
    %cst_134 = arith.constant dense<0.000000e+00> : vector<7x112xf32>
    %238 = tpu.matmul %184, %153, %cst_134 {dimension_numbers = #tpu.dot_dimension_numbers<[1], [0], [0], [1], [0, 0, 1, 1], [], []>} : vector<7x56xbf16>, vector<56x112xbf16>, vector<7x112xf32> -> vector<7x112xf32>
    %239 = arith.addf %237, %238 : vector<7x112xf32>
    %cst_135 = arith.constant dense<0.000000e+00> : vector<7x112xf32>
    %240 = tpu.matmul %187, %155, %cst_135 {dimension_numbers = #tpu.dot_dimension_numbers<[1], [0], [0], [1], [0, 0, 1, 1], [], []>} : vector<7x56xbf16>, vector<56x112xbf16>, vector<7x112xf32> -> vector<7x112xf32>
    %241 = arith.addf %239, %240 : vector<7x112xf32>
    %cst_136 = arith.constant dense<0.000000e+00> : vector<7x112xf32>
    %242 = tpu.matmul %194, %157, %cst_136 {dimension_numbers = #tpu.dot_dimension_numbers<[1], [0], [0], [1], [0, 0, 1, 1], [], []>} : vector<7x56xbf16>, vector<56x112xbf16>, vector<7x112xf32> -> vector<7x112xf32>
    %243 = arith.addf %241, %242 : vector<7x112xf32>
    %cst_137 = arith.constant dense<0.000000e+00> : vector<7x112xf32>
    %244 = tpu.matmul %197, %159, %cst_137 {dimension_numbers = #tpu.dot_dimension_numbers<[1], [0], [0], [1], [0, 0, 1, 1], [], []>} : vector<7x56xbf16>, vector<56x112xbf16>, vector<7x112xf32> -> vector<7x112xf32>
    %245 = arith.addf %243, %244 : vector<7x112xf32>
    %cst_138 = arith.constant dense<0.000000e+00> : vector<7x112xf32>
    %246 = tpu.matmul %200, %161, %cst_138 {dimension_numbers = #tpu.dot_dimension_numbers<[1], [0], [0], [1], [0, 0, 1, 1], [], []>} : vector<7x56xbf16>, vector<56x112xbf16>, vector<7x112xf32> -> vector<7x112xf32>
    %247 = arith.addf %245, %246 : vector<7x112xf32>
    %248 = arith.maximumf %230, %247 : vector<7x112xf32>
    %cst_139 = arith.constant dense<0.000000e+00> : vector<7x112xf32>
    %249 = tpu.matmul %178, %145, %cst_139 {dimension_numbers = #tpu.dot_dimension_numbers<[1], [0], [0], [1], [0, 0, 1, 1], [], []>} : vector<7x56xbf16>, vector<56x112xbf16>, vector<7x112xf32> -> vector<7x112xf32>
    %cst_140 = arith.constant dense<0.000000e+00> : vector<7x112xf32>
    %250 = tpu.matmul %181, %147, %cst_140 {dimension_numbers = #tpu.dot_dimension_numbers<[1], [0], [0], [1], [0, 0, 1, 1], [], []>} : vector<7x56xbf16>, vector<56x112xbf16>, vector<7x112xf32> -> vector<7x112xf32>
    %251 = arith.addf %249, %250 : vector<7x112xf32>
    %cst_141 = arith.constant dense<0.000000e+00> : vector<7x112xf32>
    %252 = tpu.matmul %184, %149, %cst_141 {dimension_numbers = #tpu.dot_dimension_numbers<[1], [0], [0], [1], [0, 0, 1, 1], [], []>} : vector<7x56xbf16>, vector<56x112xbf16>, vector<7x112xf32> -> vector<7x112xf32>
    %253 = arith.addf %251, %252 : vector<7x112xf32>
    %cst_142 = arith.constant dense<0.000000e+00> : vector<7x112xf32>
    %254 = tpu.matmul %191, %151, %cst_142 {dimension_numbers = #tpu.dot_dimension_numbers<[1], [0], [0], [1], [0, 0, 1, 1], [], []>} : vector<7x56xbf16>, vector<56x112xbf16>, vector<7x112xf32> -> vector<7x112xf32>
    %255 = arith.addf %253, %254 : vector<7x112xf32>
    %cst_143 = arith.constant dense<0.000000e+00> : vector<7x112xf32>
    %256 = tpu.matmul %194, %153, %cst_143 {dimension_numbers = #tpu.dot_dimension_numbers<[1], [0], [0], [1], [0, 0, 1, 1], [], []>} : vector<7x56xbf16>, vector<56x112xbf16>, vector<7x112xf32> -> vector<7x112xf32>
    %257 = arith.addf %255, %256 : vector<7x112xf32>
    %cst_144 = arith.constant dense<0.000000e+00> : vector<7x112xf32>
    %258 = tpu.matmul %197, %155, %cst_144 {dimension_numbers = #tpu.dot_dimension_numbers<[1], [0], [0], [1], [0, 0, 1, 1], [], []>} : vector<7x56xbf16>, vector<56x112xbf16>, vector<7x112xf32> -> vector<7x112xf32>
    %259 = arith.addf %257, %258 : vector<7x112xf32>
    %cst_145 = arith.constant dense<0.000000e+00> : vector<7x112xf32>
    %260 = tpu.matmul %204, %157, %cst_145 {dimension_numbers = #tpu.dot_dimension_numbers<[1], [0], [0], [1], [0, 0, 1, 1], [], []>} : vector<7x56xbf16>, vector<56x112xbf16>, vector<7x112xf32> -> vector<7x112xf32>
    %261 = arith.addf %259, %260 : vector<7x112xf32>
    %cst_146 = arith.constant dense<0.000000e+00> : vector<7x112xf32>
    %262 = tpu.matmul %207, %159, %cst_146 {dimension_numbers = #tpu.dot_dimension_numbers<[1], [0], [0], [1], [0, 0, 1, 1], [], []>} : vector<7x56xbf16>, vector<56x112xbf16>, vector<7x112xf32> -> vector<7x112xf32>
    %263 = arith.addf %261, %262 : vector<7x112xf32>
    %cst_147 = arith.constant dense<0.000000e+00> : vector<7x112xf32>
    %264 = tpu.matmul %210, %161, %cst_147 {dimension_numbers = #tpu.dot_dimension_numbers<[1], [0], [0], [1], [0, 0, 1, 1], [], []>} : vector<7x56xbf16>, vector<56x112xbf16>, vector<7x112xf32> -> vector<7x112xf32>
    %265 = arith.addf %263, %264 : vector<7x112xf32>
    %266 = arith.maximumf %248, %265 : vector<7x112xf32>
    %cst_148 = arith.constant dense<0.000000e+00> : vector<7x112xf32>
    %267 = tpu.matmul %181, %145, %cst_148 {dimension_numbers = #tpu.dot_dimension_numbers<[1], [0], [0], [1], [0, 0, 1, 1], [], []>} : vector<7x56xbf16>, vector<56x112xbf16>, vector<7x112xf32> -> vector<7x112xf32>
    %cst_149 = arith.constant dense<0.000000e+00> : vector<7x112xf32>
    %268 = tpu.matmul %184, %147, %cst_149 {dimension_numbers = #tpu.dot_dimension_numbers<[1], [0], [0], [1], [0, 0, 1, 1], [], []>} : vector<7x56xbf16>, vector<56x112xbf16>, vector<7x112xf32> -> vector<7x112xf32>
    %269 = arith.addf %267, %268 : vector<7x112xf32>
    %cst_150 = arith.constant dense<0.000000e+00> : vector<7x112xf32>
    %270 = tpu.matmul %187, %149, %cst_150 {dimension_numbers = #tpu.dot_dimension_numbers<[1], [0], [0], [1], [0, 0, 1, 1], [], []>} : vector<7x56xbf16>, vector<56x112xbf16>, vector<7x112xf32> -> vector<7x112xf32>
    %271 = arith.addf %269, %270 : vector<7x112xf32>
    %cst_151 = arith.constant dense<0.000000e+00> : vector<7x112xf32>
    %272 = tpu.matmul %194, %151, %cst_151 {dimension_numbers = #tpu.dot_dimension_numbers<[1], [0], [0], [1], [0, 0, 1, 1], [], []>} : vector<7x56xbf16>, vector<56x112xbf16>, vector<7x112xf32> -> vector<7x112xf32>
    %273 = arith.addf %271, %272 : vector<7x112xf32>
    %cst_152 = arith.constant dense<0.000000e+00> : vector<7x112xf32>
    %274 = tpu.matmul %197, %153, %cst_152 {dimension_numbers = #tpu.dot_dimension_numbers<[1], [0], [0], [1], [0, 0, 1, 1], [], []>} : vector<7x56xbf16>, vector<56x112xbf16>, vector<7x112xf32> -> vector<7x112xf32>
    %275 = arith.addf %273, %274 : vector<7x112xf32>
    %cst_153 = arith.constant dense<0.000000e+00> : vector<7x112xf32>
    %276 = tpu.matmul %200, %155, %cst_153 {dimension_numbers = #tpu.dot_dimension_numbers<[1], [0], [0], [1], [0, 0, 1, 1], [], []>} : vector<7x56xbf16>, vector<56x112xbf16>, vector<7x112xf32> -> vector<7x112xf32>
    %277 = arith.addf %275, %276 : vector<7x112xf32>
    %cst_154 = arith.constant dense<0.000000e+00> : vector<7x112xf32>
    %278 = tpu.matmul %207, %157, %cst_154 {dimension_numbers = #tpu.dot_dimension_numbers<[1], [0], [0], [1], [0, 0, 1, 1], [], []>} : vector<7x56xbf16>, vector<56x112xbf16>, vector<7x112xf32> -> vector<7x112xf32>
    %279 = arith.addf %277, %278 : vector<7x112xf32>
    %cst_155 = arith.constant dense<0.000000e+00> : vector<7x112xf32>
    %280 = tpu.matmul %210, %159, %cst_155 {dimension_numbers = #tpu.dot_dimension_numbers<[1], [0], [0], [1], [0, 0, 1, 1], [], []>} : vector<7x56xbf16>, vector<56x112xbf16>, vector<7x112xf32> -> vector<7x112xf32>
    %281 = arith.addf %279, %280 : vector<7x112xf32>
    %cst_156 = arith.constant dense<0.000000e+00> : vector<7x112xf32>
    %282 = tpu.matmul %213, %161, %cst_156 {dimension_numbers = #tpu.dot_dimension_numbers<[1], [0], [0], [1], [0, 0, 1, 1], [], []>} : vector<7x56xbf16>, vector<56x112xbf16>, vector<7x112xf32> -> vector<7x112xf32>
    %283 = arith.addf %281, %282 : vector<7x112xf32>
    %284 = arith.maximumf %266, %283 : vector<7x112xf32>
    %c0_157 = arith.constant 0 : index
    %c0_158 = arith.constant 0 : index
    %285 = vector.load %arg5[%c0_157, %c0_158] : memref<1x112xf32, #tpu.memory_space<vmem>>, vector<1x112xf32>
    %286 = vector.broadcast %285 : vector<1x112xf32> to vector<7x112xf32>
    %287 = arith.addf %284, %286 : vector<7x112xf32>
    %cst_159 = arith.constant 0.000000e+00 : f32
    %288 = vector.broadcast %cst_159 : f32 to vector<7x112xf32>
    %289 = arith.maximumf %287, %288 : vector<7x112xf32>
    %290 = arith.truncf %289 : vector<7x112xf32> to vector<7x112xbf16>
    %291 = vector.shape_cast %290 : vector<7x112xbf16> to vector<1x7x112xbf16>
    %292 = vector.extract_strided_slice %291 {offsets = [0, 0, 0], sizes = [1, 1, 112], strides = [1, 1, 1]} : vector<1x7x112xbf16> to vector<1x1x112xbf16>
    %293 = vector.shape_cast %292 : vector<1x1x112xbf16> to vector<1x112xbf16>
    %c0_160 = arith.constant 0 : index
    %c0_161 = arith.constant 0 : index
    %c0_162 = arith.constant 0 : index
    %294 = vector.load %arg6[%c0_160, %c0_161, %c0_162] : memref<7x112x128xbf16, #tpu.memory_space<vmem>>, vector<1x112x128xbf16>
    %295 = vector.shape_cast %294 : vector<1x112x128xbf16> to vector<112x128xbf16>
    %cst_163 = arith.constant dense<0.000000e+00> : vector<1x128xf32>
    %296 = tpu.matmul %293, %295, %cst_163 {dimension_numbers = #tpu.dot_dimension_numbers<[1], [0], [0], [1], [0, 0, 1, 1], [], []>} : vector<1x112xbf16>, vector<112x128xbf16>, vector<1x128xf32> -> vector<1x128xf32>
    %297 = vector.extract_strided_slice %291 {offsets = [0, 1, 0], sizes = [1, 1, 112], strides = [1, 1, 1]} : vector<1x7x112xbf16> to vector<1x1x112xbf16>
    %298 = vector.shape_cast %297 : vector<1x1x112xbf16> to vector<1x112xbf16>
    %c1_164 = arith.constant 1 : index
    %c0_165 = arith.constant 0 : index
    %c0_166 = arith.constant 0 : index
    %299 = vector.load %arg6[%c1_164, %c0_165, %c0_166] : memref<7x112x128xbf16, #tpu.memory_space<vmem>>, vector<1x112x128xbf16>
    %300 = vector.shape_cast %299 : vector<1x112x128xbf16> to vector<112x128xbf16>
    %cst_167 = arith.constant dense<0.000000e+00> : vector<1x128xf32>
    %301 = tpu.matmul %298, %300, %cst_167 {dimension_numbers = #tpu.dot_dimension_numbers<[1], [0], [0], [1], [0, 0, 1, 1], [], []>} : vector<1x112xbf16>, vector<112x128xbf16>, vector<1x128xf32> -> vector<1x128xf32>
    %302 = arith.addf %296, %301 : vector<1x128xf32>
    %303 = vector.extract_strided_slice %291 {offsets = [0, 2, 0], sizes = [1, 1, 112], strides = [1, 1, 1]} : vector<1x7x112xbf16> to vector<1x1x112xbf16>
    %304 = vector.shape_cast %303 : vector<1x1x112xbf16> to vector<1x112xbf16>
    %c2_168 = arith.constant 2 : index
    %c0_169 = arith.constant 0 : index
    %c0_170 = arith.constant 0 : index
    %305 = vector.load %arg6[%c2_168, %c0_169, %c0_170] : memref<7x112x128xbf16, #tpu.memory_space<vmem>>, vector<1x112x128xbf16>
    %306 = vector.shape_cast %305 : vector<1x112x128xbf16> to vector<112x128xbf16>
    %cst_171 = arith.constant dense<0.000000e+00> : vector<1x128xf32>
    %307 = tpu.matmul %304, %306, %cst_171 {dimension_numbers = #tpu.dot_dimension_numbers<[1], [0], [0], [1], [0, 0, 1, 1], [], []>} : vector<1x112xbf16>, vector<112x128xbf16>, vector<1x128xf32> -> vector<1x128xf32>
    %308 = arith.addf %302, %307 : vector<1x128xf32>
    %309 = vector.extract_strided_slice %291 {offsets = [0, 3, 0], sizes = [1, 1, 112], strides = [1, 1, 1]} : vector<1x7x112xbf16> to vector<1x1x112xbf16>
    %310 = vector.shape_cast %309 : vector<1x1x112xbf16> to vector<1x112xbf16>
    %c3_172 = arith.constant 3 : index
    %c0_173 = arith.constant 0 : index
    %c0_174 = arith.constant 0 : index
    %311 = vector.load %arg6[%c3_172, %c0_173, %c0_174] : memref<7x112x128xbf16, #tpu.memory_space<vmem>>, vector<1x112x128xbf16>
    %312 = vector.shape_cast %311 : vector<1x112x128xbf16> to vector<112x128xbf16>
    %cst_175 = arith.constant dense<0.000000e+00> : vector<1x128xf32>
    %313 = tpu.matmul %310, %312, %cst_175 {dimension_numbers = #tpu.dot_dimension_numbers<[1], [0], [0], [1], [0, 0, 1, 1], [], []>} : vector<1x112xbf16>, vector<112x128xbf16>, vector<1x128xf32> -> vector<1x128xf32>
    %314 = arith.addf %308, %313 : vector<1x128xf32>
    %315 = vector.extract_strided_slice %291 {offsets = [0, 4, 0], sizes = [1, 1, 112], strides = [1, 1, 1]} : vector<1x7x112xbf16> to vector<1x1x112xbf16>
    %316 = vector.shape_cast %315 : vector<1x1x112xbf16> to vector<1x112xbf16>
    %c4_176 = arith.constant 4 : index
    %c0_177 = arith.constant 0 : index
    %c0_178 = arith.constant 0 : index
    %317 = vector.load %arg6[%c4_176, %c0_177, %c0_178] : memref<7x112x128xbf16, #tpu.memory_space<vmem>>, vector<1x112x128xbf16>
    %318 = vector.shape_cast %317 : vector<1x112x128xbf16> to vector<112x128xbf16>
    %cst_179 = arith.constant dense<0.000000e+00> : vector<1x128xf32>
    %319 = tpu.matmul %316, %318, %cst_179 {dimension_numbers = #tpu.dot_dimension_numbers<[1], [0], [0], [1], [0, 0, 1, 1], [], []>} : vector<1x112xbf16>, vector<112x128xbf16>, vector<1x128xf32> -> vector<1x128xf32>
    %320 = arith.addf %314, %319 : vector<1x128xf32>
    %321 = vector.extract_strided_slice %291 {offsets = [0, 5, 0], sizes = [1, 1, 112], strides = [1, 1, 1]} : vector<1x7x112xbf16> to vector<1x1x112xbf16>
    %322 = vector.shape_cast %321 : vector<1x1x112xbf16> to vector<1x112xbf16>
    %c5_180 = arith.constant 5 : index
    %c0_181 = arith.constant 0 : index
    %c0_182 = arith.constant 0 : index
    %323 = vector.load %arg6[%c5_180, %c0_181, %c0_182] : memref<7x112x128xbf16, #tpu.memory_space<vmem>>, vector<1x112x128xbf16>
    %324 = vector.shape_cast %323 : vector<1x112x128xbf16> to vector<112x128xbf16>
    %cst_183 = arith.constant dense<0.000000e+00> : vector<1x128xf32>
    %325 = tpu.matmul %322, %324, %cst_183 {dimension_numbers = #tpu.dot_dimension_numbers<[1], [0], [0], [1], [0, 0, 1, 1], [], []>} : vector<1x112xbf16>, vector<112x128xbf16>, vector<1x128xf32> -> vector<1x128xf32>
    %326 = arith.addf %320, %325 : vector<1x128xf32>
    %327 = vector.extract_strided_slice %291 {offsets = [0, 6, 0], sizes = [1, 1, 112], strides = [1, 1, 1]} : vector<1x7x112xbf16> to vector<1x1x112xbf16>
    %328 = vector.shape_cast %327 : vector<1x1x112xbf16> to vector<1x112xbf16>
    %c6_184 = arith.constant 6 : index
    %c0_185 = arith.constant 0 : index
    %c0_186 = arith.constant 0 : index
    %329 = vector.load %arg6[%c6_184, %c0_185, %c0_186] : memref<7x112x128xbf16, #tpu.memory_space<vmem>>, vector<1x112x128xbf16>
    %330 = vector.shape_cast %329 : vector<1x112x128xbf16> to vector<112x128xbf16>
    %cst_187 = arith.constant dense<0.000000e+00> : vector<1x128xf32>
    %331 = tpu.matmul %328, %330, %cst_187 {dimension_numbers = #tpu.dot_dimension_numbers<[1], [0], [0], [1], [0, 0, 1, 1], [], []>} : vector<1x112xbf16>, vector<112x128xbf16>, vector<1x128xf32> -> vector<1x128xf32>
    %332 = arith.addf %326, %331 : vector<1x128xf32>
    %c0_188 = arith.constant 0 : index
    %c0_189 = arith.constant 0 : index
    %333 = vector.load %arg7[%c0_188, %c0_189] : memref<1x128xf32, #tpu.memory_space<vmem>>, vector<1x128xf32>
    %334 = arith.addf %332, %333 : vector<1x128xf32>
    %cst_190 = arith.constant 0.000000e+00 : f32
    %335 = vector.broadcast %cst_190 : f32 to vector<1x128xf32>
    %336 = arith.maximumf %334, %335 : vector<1x128xf32>
    %337 = arith.truncf %336 : vector<1x128xf32> to vector<1x128xbf16>
    %c0_191 = arith.constant 0 : index
    %c0_192 = arith.constant 0 : index
    %338 = vector.load %arg8[%c0_191, %c0_192] : memref<128x128xbf16, #tpu.memory_space<vmem>>, vector<128x128xbf16>
    %cst_193 = arith.constant dense<0.000000e+00> : vector<1x128xf32>
    %339 = tpu.matmul %337, %338, %cst_193 {dimension_numbers = #tpu.dot_dimension_numbers<[1], [0], [0], [1], [0, 0, 1, 1], [], []>} : vector<1x128xbf16>, vector<128x128xbf16>, vector<1x128xf32> -> vector<1x128xf32>
    %c0_194 = arith.constant 0 : index
    %c0_195 = arith.constant 0 : index
    %340 = vector.load %arg9[%c0_194, %c0_195] : memref<1x128xf32, #tpu.memory_space<vmem>>, vector<1x128xf32>
    %341 = arith.addf %339, %340 : vector<1x128xf32>
    %cst_196 = arith.constant 0.000000e+00 : f32
    %342 = vector.broadcast %cst_196 : f32 to vector<1x128xf32>
    %343 = arith.maximumf %341, %342 : vector<1x128xf32>
    %344 = arith.truncf %343 : vector<1x128xf32> to vector<1x128xbf16>
    %c0_197 = arith.constant 0 : index
    %c0_198 = arith.constant 0 : index
    %345 = vector.load %arg10[%c0_197, %c0_198] : memref<128x128xbf16, #tpu.memory_space<vmem>>, vector<128x128xbf16>
    %cst_199 = arith.constant dense<0.000000e+00> : vector<1x128xf32>
    %346 = tpu.matmul %344, %345, %cst_199 {dimension_numbers = #tpu.dot_dimension_numbers<[1], [0], [0], [1], [0, 0, 1, 1], [], []>} : vector<1x128xbf16>, vector<128x128xbf16>, vector<1x128xf32> -> vector<1x128xf32>
    %c0_200 = arith.constant 0 : index
    %c0_201 = arith.constant 0 : index
    %347 = vector.load %arg11[%c0_200, %c0_201] : memref<1x128xf32, #tpu.memory_space<vmem>>, vector<1x128xf32>
    %348 = arith.addf %346, %347 : vector<1x128xf32>
    %c0_202 = arith.constant 0 : index
    %c0_203 = arith.constant 0 : index
    %c0_204 = arith.constant 0 : index
    %349 = vector.load %arg12[%c0_202, %c0_203, %c0_204] : memref<1x1x128xf32, #tpu.memory_space<vmem>>, vector<1x1x128xf32>
    %350 = vector.shape_cast %349 : vector<1x1x128xf32> to vector<1x128xf32>
    %351 = vector.shape_cast %348 : vector<1x128xf32> to vector<1x1x128xf32>
    tpu.vector_store %arg12[%c0_202, %c0_203, %c0_204], %351 {strides = array<i32>} : memref<1x1x128xf32, #tpu.memory_space<vmem>>, vector<1x1x128xf32>,
    return
  }
  func.func @transform_0(%arg0: i32) -> (i32, i32, i32, i32) {
    %c0_i32 = arith.constant 0 : i32
    %c0_i32_0 = arith.constant 0 : i32
    %c0_i32_1 = arith.constant 0 : i32
    %c0_i32_2 = arith.constant 0 : i32
    return %c0_i32, %arg0, %c0_i32_0, %c0_i32_1 : i32, i32, i32, i32
  }
  func.func @transform_1(%arg0: i32) -> (i32, i32, i32) {
    %c0_i32 = arith.constant 0 : i32
    %c0_i32_0 = arith.constant 0 : i32
    %c0_i32_1 = arith.constant 0 : i32
    %c0_i32_2 = arith.constant 0 : i32
    return %c0_i32, %c0_i32_0, %c0_i32_1 : i32, i32, i32
  }
  func.func @transform_2(%arg0: i32) -> (i32, i32) {
    %c0_i32 = arith.constant 0 : i32
    %c0_i32_0 = arith.constant 0 : i32
    %c0_i32_1 = arith.constant 0 : i32
    return %c0_i32, %c0_i32_0 : i32, i32
  }
  func.func @transform_3(%arg0: i32) -> (i32, i32, i32) {
    %c0_i32 = arith.constant 0 : i32
    %c0_i32_0 = arith.constant 0 : i32
    %c0_i32_1 = arith.constant 0 : i32
    %c0_i32_2 = arith.constant 0 : i32
    return %c0_i32, %c0_i32_0, %c0_i32_1 : i32, i32, i32
  }
  func.func @transform_4(%arg0: i32) -> (i32, i32) {
    %c0_i32 = arith.constant 0 : i32
    %c0_i32_0 = arith.constant 0 : i32
    %c0_i32_1 = arith.constant 0 : i32
    return %c0_i32, %c0_i32_0 : i32, i32
  }
  func.func @transform_5(%arg0: i32) -> (i32, i32, i32) {
    %c0_i32 = arith.constant 0 : i32
    %c0_i32_0 = arith.constant 0 : i32
    %c0_i32_1 = arith.constant 0 : i32
    %c0_i32_2 = arith.constant 0 : i32
    return %c0_i32, %c0_i32_0, %c0_i32_1 : i32, i32, i32
  }
  func.func @transform_6(%arg0: i32) -> (i32, i32) {
    %c0_i32 = arith.constant 0 : i32
    %c0_i32_0 = arith.constant 0 : i32
    %c0_i32_1 = arith.constant 0 : i32
    return %c0_i32, %c0_i32_0 : i32, i32
  }
  func.func @transform_7(%arg0: i32) -> (i32, i32) {
    %c0_i32 = arith.constant 0 : i32
    %c0_i32_0 = arith.constant 0 : i32
    %c0_i32_1 = arith.constant 0 : i32
    return %c0_i32, %c0_i32_0 : i32, i32
  }
  func.func @transform_8(%arg0: i32) -> (i32, i32) {
    %c0_i32 = arith.constant 0 : i32
    %c0_i32_0 = arith.constant 0 : i32
    %c0_i32_1 = arith.constant 0 : i32
    return %c0_i32, %c0_i32_0 : i32, i32
  }
  func.func @transform_9(%arg0: i32) -> (i32, i32) {
    %c0_i32 = arith.constant 0 : i32
    %c0_i32_0 = arith.constant 0 : i32
    %c0_i32_1 = arith.constant 0 : i32
    return %c0_i32, %c0_i32_0 : i32, i32
  }
  func.func @transform_10(%arg0: i32) -> (i32, i32) {
    %c0_i32 = arith.constant 0 : i32
    %c0_i32_0 = arith.constant 0 : i32
    %c0_i32_1 = arith.constant 0 : i32
    return %c0_i32, %c0_i32_0 : i32, i32
  }
  func.func @transform_11(%arg0: i32) -> (i32, i32, i32) {
    %c0_i32 = arith.constant 0 : i32
    %c0_i32_0 = arith.constant 0 : i32
    %c0_i32_1 = arith.constant 0 : i32
    return %arg0, %c0_i32, %c0_i32_0 : i32, i32, i32
  }
}

</mosaic_0001>

<llo_original>
// kernel: net_forward.1
$region0: #{net_forward.1}
  #allocation0 [shape = 'u32[]', space=smem, size = 0x4, offset = 0x4, fixed_abs, tag = 'smem constant byte address 0x4 - core index']
  #allocation1 [shape = 'u32[144,128]{1,0:T(1,128)}', space=vmem, size = 0x12000, scoped, tag = 'internal scratch']
  #allocation2 [shape = 'f32[1,16,128]{2,1,0:T(8,128)}', space=vmem, size = 0x2000, scoped, tag = 'scratch operand']
  %s0 = inlined_call_operand.vmem [shape: f32[4,2,15,15], index: 0, kind: input, shape index: {}]
  %s1 = inlined_call_operand.vmem [shape: bf16[9,14,128], index: 1, kind: input, shape index: {}]
  %s2 = inlined_call_operand.vmem [shape: f32[1,128], index: 2, kind: input, shape index: {}]
  %s3 = inlined_call_operand.vmem [shape: bf16[9,56,112], index: 3, kind: input, shape index: {}]
  %s4 = inlined_call_operand.vmem [shape: f32[1,112], index: 4, kind: input, shape index: {}]
  %s5 = inlined_call_operand.vmem [shape: bf16[7,112,128], index: 5, kind: input, shape index: {}]
  %s6 = inlined_call_operand.vmem [shape: f32[1,128], index: 6, kind: input, shape index: {}]
  %s7 = inlined_call_operand.vmem [shape: bf16[128,128], index: 7, kind: input, shape index: {}]
  %s8 = inlined_call_operand.vmem [shape: f32[1,128], index: 8, kind: input, shape index: {}]
  %s9 = inlined_call_operand.vmem [shape: bf16[128,128], index: 9, kind: input, shape index: {}]
  %s10 = inlined_call_operand.vmem [shape: f32[1,128], index: 10, kind: input, shape index: {}]
  %s11 = inlined_call_operand.hbm [shape: f32[2,1,128], index: 11, kind: output, shape index: {}]
  %s12 = sld [smem:[#allocation0]]
  $region115: #{net_forward.1} parent=0
    _
  %s14 = ssub.s32 1, %s12
  %s15 = scalar_select 0, %s14, %s12
  $region1: #{net_forward.1} parent=0
    #allocation3 [shape = 'u8[65536]{0}', space=vmem, size = 0x10000, scoped, tag = 'input window, operand 0']
    #allocation4 [shape = 'u8[1024]{0}', space=vmem, size = 0x400, scoped, tag = 'output window, operand 0']
    #allocation5 [shape = 's32[2]{0}', space=sflag, size = 0x8, scoped, tag = 'scoped memory for net_forward.1']
    %16 = vsyncpa [#allocation5], 0
    %s17 = scalar_lea.sflag [#allocation5], 1
    %18 = vsyncpa %s17, 0
    loop: start=0, step=1, limit=4
    $region2: #{net_forward.1} parent=1 // loop_pre_header
      _
    $region3: #{net_forward.1} parent=1 // loop_header
      %s20 = sphi 0, %s24
      %p21 = scmp.ge.s32.totalorder %s20, 4
      %s30 = sphi 0, %s32
      %s33 = sphi 0, %s30
      %s34 = sphi 0, %s33
      %s50 = sphi 0, %s34
      %s54 = sphi 0, %s54
      %s56 = sphi 0, %s54
      %s57 = sphi 0, %s56
      %s71 = sphi 0, %s57
      %s75 = sphi 0, %s75
      %s77 = sphi 0, %s75
      %s78 = sphi 0, %s77
      %s92 = sphi 0, %s78
      %s96 = sphi 0, %s96
      %s98 = sphi 0, %s96
      %s99 = sphi 0, %s98
      %s113 = sphi 0, %s99
      %s117 = sphi 0, %s117
      %s119 = sphi 0, %s117
      %s120 = sphi 0, %s119
      %s134 = sphi 0, %s120
      %s138 = sphi 0, %s138
      %s140 = sphi 0, %s138
      %s141 = sphi 0, %s140
      %s155 = sphi 0, %s141
      %s159 = sphi 0, %s159
      %s161 = sphi 0, %s159
      %s162 = sphi 0, %s161
      %s176 = sphi 0, %s162
      %s180 = sphi 0, %s180
      %s182 = sphi 0, %s180
      %s183 = sphi 0, %s182
      %s197 = sphi 0, %s183
      %s201 = sphi 0, %s201
      %s203 = sphi 0, %s201
      %s204 = sphi 0, %s203
      %s218 = sphi 0, %s204
      %s222 = sphi 0, %s222
      %s224 = sphi 0, %s222
      %s225 = sphi 0, %s224
      %s239 = sphi 0, %s225
      %s243 = sphi 0, %s243
      %s245 = sphi 0, %s243
      %s246 = sphi 0, %s245
      %s260 = sphi 0, %s246
      %s266 = sphi 0, %s268
      %s269 = sphi 0, %s266
      %s270 = sphi 0, %s269
      %s286 = sphi 0, %s270
    $region4: #{net_forward.1} parent=1 // loop_header_branch
      %23 = sbr.rel (%p21) target = $region8
    $region5: #{net_forward.1} parent=1 // loop_body
      %s25 = ssub.s32 %s20, 1
      %s26 = ssub.s32 %s20, 2
      %s27 = sadd.s32 %s20, 1
      %s28 = ssub.s32 %s20, %s27
      %p29 = scmp.eq.s32.totalorder %s28, 0
      %s31 = sadd.s32 %s30, 1
      %s32 = scalar_select %p29, %s30, %s31
      %p35 = pneg %p29
      %p36 = scmp.eq.s32.totalorder %s20, 1
      %p37 = por %p35, %p36
      %p38 = scmp.ne.s32.totalorder %s30, %s33
      %p39 = scmp.eq.s32.totalorder %s20, 0
      %p40 = por %p38, %p39
      %p41 = scmp.ne.s32.totalorder %s30, %s33
      %p42 = scmp.eq.s32.totalorder %s25, 1
      %p43 = por %p41, %p42
      %p44 = scmp.ne.s32.totalorder %s33, %s34
      %p45 = scmp.eq.s32.totalorder %s25, 0
      %p46 = por %p44, %p45
      %p47 = scmp.ne.s32.totalorder %s33, %s34
      %p48 = scmp.eq.s32.totalorder %s26, 1
      %p49 = por %p47, %p48
      %p51 = scmp.ne.s32.totalorder %s34, %s50
      %p52 = scmp.eq.s32.totalorder %s26, 0
      %p53 = por %p51, %p52
      %s55 = sadd.s32 %s54, 1
      %p58 = scmp.eq.s32.totalorder %s20, 1
      %p59 = scmp.ne.s32.totalorder %s54, %s56
      %p60 = scmp.eq.s32.totalorder %s20, 0
      %p61 = por %p59, %p60
      %p62 = scmp.ne.s32.totalorder %s54, %s56
      %p63 = scmp.eq.s32.totalorder %s25, 1
      %p64 = por %p62, %p63
      %p65 = scmp.ne.s32.totalorder %s56, %s57
      %p66 = scmp.eq.s32.totalorder %s25, 0
      %p67 = por %p65, %p66
      %p68 = scmp.ne.s32.totalorder %s56, %s57
      %p69 = scmp.eq.s32.totalorder %s26, 1
      %p70 = por %p68, %p69
      %p72 = scmp.ne.s32.totalorder %s57, %s71
      %p73 = scmp.eq.s32.totalorder %s26, 0
      %p74 = por %p72, %p73
      %s76 = sadd.s32 %s75, 1
      %p79 = scmp.eq.s32.totalorder %s20, 1
      %p80 = scmp.ne.s32.totalorder %s75, %s77
      %p81 = scmp.eq.s32.totalorder %s20, 0
      %p82 = por %p80, %p81
      %p83 = scmp.ne.s32.totalorder %s75, %s77
      %p84 = scmp.eq.s32.totalorder %s25, 1
      %p85 = por %p83, %p84
      %p86 = scmp.ne.s32.totalorder %s77, %s78
      %p87 = scmp.eq.s32.totalorder %s25, 0
      %p88 = por %p86, %p87
      %p89 = scmp.ne.s32.totalorder %s77, %s78
      %p90 = scmp.eq.s32.totalorder %s26, 1
      %p91 = por %p89, %p90
      %p93 = scmp.ne.s32.totalorder %s78, %s92
      %p94 = scmp.eq.s32.totalorder %s26, 0
      %p95 = por %p93, %p94
      %s97 = sadd.s32 %s96, 1
      %p100 = scmp.eq.s32.totalorder %s20, 1
      %p101 = scmp.ne.s32.totalorder %s96, %s98
      %p102 = scmp.eq.s32.totalorder %s20, 0
      %p103 = por %p101, %p102
      %p104 = scmp.ne.s32.totalorder %s96, %s98
      %p105 = scmp.eq.s32.totalorder %s25, 1
      %p106 = por %p104, %p105
      %p107 = scmp.ne.s32.totalorder %s98, %s99
      %p108 = scmp.eq.s32.totalorder %s25, 0
      %p109 = por %p107, %p108
      %p110 = scmp.ne.s32.totalorder %s98, %s99
      %p111 = scmp.eq.s32.totalorder %s26, 1
      %p112 = por %p110, %p111
      %p114 = scmp.ne.s32.totalorder %s99, %s113
      %p115 = scmp.eq.s32.totalorder %s26, 0
      %p116 = por %p114, %p115
      %s118 = sadd.s32 %s117, 1
      %p121 = scmp.eq.s32.totalorder %s20, 1
      %p122 = scmp.ne.s32.totalorder %s117, %s119
      %p123 = scmp.eq.s32.totalorder %s20, 0
      %p124 = por %p122, %p123
      %p125 = scmp.ne.s32.totalorder %s117, %s119
      %p126 = scmp.eq.s32.totalorder %s25, 1
      %p127 = por %p125, %p126
      %p128 = scmp.ne.s32.totalorder %s119, %s120
      %p129 = scmp.eq.s32.totalorder %s25, 0
      %p130 = por %p128, %p129
      %p131 = scmp.ne.s32.totalorder %s119, %s120
      %p132 = scmp.eq.s32.totalorder %s26, 1
      %p133 = por %p131, %p132
      %p135 = scmp.ne.s32.totalorder %s120, %s134
      %p136 = scmp.eq.s32.totalorder %s26, 0
      %p137 = por %p135, %p136
      %s139 = sadd.s32 %s138, 1
      %p142 = scmp.eq.s32.totalorder %s20, 1
      %p143 = scmp.ne.s32.totalorder %s138, %s140
      %p144 = scmp.eq.s32.totalorder %s20, 0
      %p145 = por %p143, %p144
      %p146 = scmp.ne.s32.totalorder %s138, %s140
      %p147 = scmp.eq.s32.totalorder %s25, 1
      %p148 = por %p146, %p147
      %p149 = scmp.ne.s32.totalorder %s140, %s141
      %p150 = scmp.eq.s32.totalorder %s25, 0
      %p151 = por %p149, %p150
      %p152 = scmp.ne.s32.totalorder %s140, %s141
      %p153 = scmp.eq.s32.totalorder %s26, 1
      %p154 = por %p152, %p153
      %p156 = scmp.ne.s32.totalorder %s141, %s155
      %p157 = scmp.eq.s32.totalorder %s26, 0
      %p158 = por %p156, %p157
      %s160 = sadd.s32 %s159, 1
      %p163 = scmp.eq.s32.totalorder %s20, 1
      %p164 = scmp.ne.s32.totalorder %s159, %s161
      %p165 = scmp.eq.s32.totalorder %s20, 0
      %p166 = por %p164, %p165
      %p167 = scmp.ne.s32.totalorder %s159, %s161
      %p168 = scmp.eq.s32.totalorder %s25, 1
      %p169 = por %p167, %p168
      %p170 = scmp.ne.s32.totalorder %s161, %s162
      %p171 = scmp.eq.s32.totalorder %s25, 0
      %p172 = por %p170, %p171
      %p173 = scmp.ne.s32.totalorder %s161, %s162
      %p174 = scmp.eq.s32.totalorder %s26, 1
      %p175 = por %p173, %p174
      %p177 = scmp.ne.s32.totalorder %s162, %s176
      %p178 = scmp.eq.s32.totalorder %s26, 0
      %p179 = por %p177, %p178
      %s181 = sadd.s32 %s180, 1
      %p184 = scmp.eq.s32.totalorder %s20, 1
      %p185 = scmp.ne.s32.totalorder %s180, %s182
      %p186 = scmp.eq.s32.totalorder %s20, 0
      %p187 = por %p185, %p186
      %p188 = scmp.ne.s32.totalorder %s180, %s182
      %p189 = scmp.eq.s32.totalorder %s25, 1
      %p190 = por %p188, %p189
      %p191 = scmp.ne.s32.totalorder %s182, %s183
      %p192 = scmp.eq.s32.totalorder %s25, 0
      %p193 = por %p191, %p192
      %p194 = scmp.ne.s32.totalorder %s182, %s183
      %p195 = scmp.eq.s32.totalorder %s26, 1
      %p196 = por %p194, %p195
      %p198 = scmp.ne.s32.totalorder %s183, %s197
      %p199 = scmp.eq.s32.totalorder %s26, 0
      %p200 = por %p198, %p199
      %s202 = sadd.s32 %s201, 1
      %p205 = scmp.eq.s32.totalorder %s20, 1
      %p206 = scmp.ne.s32.totalorder %s201, %s203
      %p207 = scmp.eq.s32.totalorder %s20, 0
      %p208 = por %p206, %p207
      %p209 = scmp.ne.s32.totalorder %s201, %s203
      %p210 = scmp.eq.s32.totalorder %s25, 1
      %p211 = por %p209, %p210
      %p212 = scmp.ne.s32.totalorder %s203, %s204
      %p213 = scmp.eq.s32.totalorder %s25, 0
      %p214 = por %p212, %p213
      %p215 = scmp.ne.s32.totalorder %s203, %s204
      %p216 = scmp.eq.s32.totalorder %s26, 1
      %p217 = por %p215, %p216
      %p219 = scmp.ne.s32.totalorder %s204, %s218
      %p220 = scmp.eq.s32.totalorder %s26, 0
      %p221 = por %p219, %p220
      %s223 = sadd.s32 %s222, 1
      %p226 = scmp.eq.s32.totalorder %s20, 1
      %p227 = scmp.ne.s32.totalorder %s222, %s224
      %p228 = scmp.eq.s32.totalorder %s20, 0
      %p229 = por %p227, %p228
      %p230 = scmp.ne.s32.totalorder %s222, %s224
      %p231 = scmp.eq.s32.totalorder %s25, 1
      %p232 = por %p230, %p231
      %p233 = scmp.ne.s32.totalorder %s224, %s225
      %p234 = scmp.eq.s32.totalorder %s25, 0
      %p235 = por %p233, %p234
      %p236 = scmp.ne.s32.totalorder %s224, %s225
      %p237 = scmp.eq.s32.totalorder %s26, 1
      %p238 = por %p236, %p237
      %p240 = scmp.ne.s32.totalorder %s225, %s239
      %p241 = scmp.eq.s32.totalorder %s26, 0
      %p242 = por %p240, %p241
      %s244 = sadd.s32 %s243, 1
      %p247 = scmp.eq.s32.totalorder %s20, 1
      %p248 = scmp.ne.s32.totalorder %s243, %s245
      %p249 = scmp.eq.s32.totalorder %s20, 0
      %p250 = por %p248, %p249
      %p251 = scmp.ne.s32.totalorder %s243, %s245
      %p252 = scmp.eq.s32.totalorder %s25, 1
      %p253 = por %p251, %p252
      %p254 = scmp.ne.s32.totalorder %s245, %s246
      %p255 = scmp.eq.s32.totalorder %s25, 0
      %p256 = por %p254, %p255
      %p257 = scmp.ne.s32.totalorder %s245, %s246
      %p258 = scmp.eq.s32.totalorder %s26, 1
      %p259 = por %p257, %p258
      %p261 = scmp.ne.s32.totalorder %s246, %s260
      %p262 = scmp.eq.s32.totalorder %s26, 0
      %p263 = por %p261, %p262
      %s264 = ssub.s32 %s20, %s27
      %p265 = scmp.eq.s32.totalorder %s264, 0
      %s267 = sadd.s32 %s266, 1
      %s268 = scalar_select %p265, %s266, %s267
      %p271 = pneg %p265
      %p272 = scmp.eq.s32.totalorder %s20, 1
      %p273 = por %p271, %p272
      %p274 = scmp.ne.s32.totalorder %s266, %s269
      %p275 = scmp.eq.s32.totalorder %s20, 0
      %p276 = por %p274, %p275
      %p277 = scmp.ne.s32.totalorder %s266, %s269
      %p278 = scmp.eq.s32.totalorder %s25, 1
      %p279 = por %p277, %p278
      %p280 = scmp.ne.s32.totalorder %s269, %s270
      %p281 = scmp.eq.s32.totalorder %s25, 0
      %p282 = por %p280, %p281
      %p283 = scmp.ne.s32.totalorder %s269, %s270
      %p284 = scmp.eq.s32.totalorder %s26, 1
      %p285 = por %p283, %p284
      %p287 = scmp.ne.s32.totalorder %s270, %s286
      %p288 = scmp.eq.s32.totalorder %s26, 0
      %p289 = por %p287, %p288
      %p290 = scmp.le.s32.totalorder 1, %s20
      %p291 = scmp.lt.s32.totalorder %s20, 3
      %p292 = pnand %p290, %p291
      %p293 = pneg %p292
      // Predicated region
      $region9: #{net_forward.1} parent=5 // pred_check
        _
      $region10: #{net_forward.1} parent=5 // pred_check_branch
        %295 = sbr.rel (%p292) target = $region12
      $region11: #{net_forward.1} parent=5 // pred_region
        %s296 = ssub.s32 %s20, 1
        // Predicated region
        $region13: #{net_forward.1} parent=11 // pred_check
          %p297 = pneg %p67
        $region14: #{net_forward.1} parent=11 // pred_check_branch
          %299 = sbr.rel (%p297) target = $region16
        $region15: #{net_forward.1} parent=11 // pred_region
          _
        $region16: #{net_forward.1} parent=11 // pred_fallthru
          _
        // Predicated region
        $region17: #{net_forward.1} parent=11 // pred_check
          %p300 = pneg %p88
        $region18: #{net_forward.1} parent=11 // pred_check_branch
          %302 = sbr.rel (%p300) target = $region20
        $region19: #{net_forward.1} parent=11 // pred_region
          _
        $region20: #{net_forward.1} parent=11 // pred_fallthru
          _
        // Predicated region
        $region21: #{net_forward.1} parent=11 // pred_check
          %p303 = pneg %p109
        $region22: #{net_forward.1} parent=11 // pred_check_branch
          %305 = sbr.rel (%p303) target = $region24
        $region23: #{net_forward.1} parent=11 // pred_region
          _
        $region24: #{net_forward.1} parent=11 // pred_fallthru
          _
        // Predicated region
        $region25: #{net_forward.1} parent=11 // pred_check
          %p306 = pneg %p130
        $region26: #{net_forward.1} parent=11 // pred_check_branch
          %308 = sbr.rel (%p306) target = $region28
        $region27: #{net_forward.1} parent=11 // pred_region
          _
        $region28: #{net_forward.1} parent=11 // pred_fallthru
          _
        // Predicated region
        $region29: #{net_forward.1} parent=11 // pred_check
          %p309 = pneg %p151
        $region30: #{net_forward.1} parent=11 // pred_check_branch
          %311 = sbr.rel (%p309) target = $region32
        $region31: #{net_forward.1} parent=11 // pred_region
          _
        $region32: #{net_forward.1} parent=11 // pred_fallthru
          _
        // Predicated region
        $region33: #{net_forward.1} parent=11 // pred_check
          %p312 = pneg %p172
        $region34: #{net_forward.1} parent=11 // pred_check_branch
          %314 = sbr.rel (%p312) target = $region36
        $region35: #{net_forward.1} parent=11 // pred_region
          _
        $region36: #{net_forward.1} parent=11 // pred_fallthru
          _
        // Predicated region
        $region37: #{net_forward.1} parent=11 // pred_check
          %p315 = pneg %p193
        $region38: #{net_forward.1} parent=11 // pred_check_branch
          %317 = sbr.rel (%p315) target = $region40
        $region39: #{net_forward.1} parent=11 // pred_region
          _
        $region40: #{net_forward.1} parent=11 // pred_fallthru
          _
        // Predicated region
        $region41: #{net_forward.1} parent=11 // pred_check
          %p318 = pneg %p214
        $region42: #{net_forward.1} parent=11 // pred_check_branch
          %320 = sbr.rel (%p318) target = $region44
        $region43: #{net_forward.1} parent=11 // pred_region
          _
        $region44: #{net_forward.1} parent=11 // pred_fallthru
          _
        // Predicated region
        $region45: #{net_forward.1} parent=11 // pred_check
          %p321 = pneg %p235
        $region46: #{net_forward.1} parent=11 // pred_check_branch
          %323 = sbr.rel (%p321) target = $region48
        $region47: #{net_forward.1} parent=11 // pred_region
          _
        $region48: #{net_forward.1} parent=11 // pred_fallthru
          _
        // Predicated region
        $region49: #{net_forward.1} parent=11 // pred_check
          %p324 = pneg %p256
        $region50: #{net_forward.1} parent=11 // pred_check_branch
          %326 = sbr.rel (%p324) target = $region52
        $region51: #{net_forward.1} parent=11 // pred_region
          _
        $region52: #{net_forward.1} parent=11 // pred_fallthru
          _
      $region12: #{net_forward.1} parent=5 // pred_fallthru
        _
      %p327 = scmp.lt.s32.totalorder %s20, 2
      // Predicated region
      $region53: #{net_forward.1} parent=5 // pred_check
        %p328 = pneg %p327
      $region54: #{net_forward.1} parent=5 // pred_check_branch
        %330 = sbr.rel (%p328) target = $region56
      $region55: #{net_forward.1} parent=5 // pred_region
        // Predicated region
        $region57: #{net_forward.1} parent=55 // pred_check
          %p331 = pneg %p40
        $region58: #{net_forward.1} parent=55 // pred_check_branch
          %333 = sbr.rel (%p331) target = $region60
        $region59: #{net_forward.1} parent=55 // pred_region
          %s334 = sand.u32 %s30, 1
          %s335 = sand.u32 %s30, 1
          %s336 = smul.addr %s335, 64
          %s337 = scalar_lea.vmem [#allocation3], %s336
          %s338 = smul.addr %s20, 2
          %s339 = smul.addr %s338, 8
          %s340 = scalar_lea.vmem %s0, %s339
          // Predicated region
          $region61: #{net_forward.1} parent=59 // pred_check
            _
          $region62: #{net_forward.1} parent=59 // pred_check_branch
            %342 = sbr.rel (0) target = $region64
          $region63: #{net_forward.1} parent=59 // pred_region
            // Predicated region
            $region65: #{net_forward.1} parent=63 // pred_check
              _
            $region66: #{net_forward.1} parent=63 // pred_check_branch
              %344 = sbr.rel (0) target = $region68
            $region67: #{net_forward.1} parent=63 // pred_region
              // Predicated region
              $region80: #{net_forward.1} parent=67 // pred_check
                _
              $region81: #{net_forward.1} parent=67 // pred_check_branch
                %373 = sbr.rel (0) target = $region83
              $region82: #{net_forward.1} parent=67 // pred_region
                loop: start=0, step=1, limit=1
                $region84: #{net_forward.1} parent=82 // loop_pre_header
                  _
                $region85: #{net_forward.1} parent=82 // loop_header
                  %s375 = sphi 0, %s379
                  %p376 = scmp.ge.s32.totalorder %s375, 1
                  %s380 = sphi %s340, %s340
                  %s381 = sphi %s337, %s337
                $region86: #{net_forward.1} parent=82 // loop_header_branch
                  %378 = sbr.rel (%p376) target = $region90
                $region87: #{net_forward.1} parent=82 // loop_body
                  %v382 = vld [vmem:[%s380] sm:$0xff]
                  %383 = vst [vmem:[%s381] sm:$0xff] %v382
                  %v384 = vld [vmem:[%s380 + $0x8] sm:$0xff]
                  %385 = vst [vmem:[%s381 + $0x8] sm:$0xff] %v384
                  %v386 = vld [vmem:[%s380 + $0x20] sm:$0xff]
                  %387 = vst [vmem:[%s381 + $0x10] sm:$0xff] %v386
                  %v388 = vld [vmem:[%s380 + $0x28] sm:$0xff]
                  %389 = vst [vmem:[%s381 + $0x18] sm:$0xff] %v388
                  %v390 = vld [vmem:[%s380 + $0x40] sm:$0xff]
                  %391 = vst [vmem:[%s381 + $0x20] sm:$0xff] %v390
                  %v392 = vld [vmem:[%s380 + $0x48] sm:$0xff]
                  %393 = vst [vmem:[%s381 + $0x28] sm:$0xff] %v392
                  %v394 = vld [vmem:[%s380 + $0x60] sm:$0xff]
                  %395 = vst [vmem:[%s381 + $0x30] sm:$0xff] %v394
                  %v396 = vld [vmem:[%s380 + $0x68] sm:$0xff]
                  %397 = vst [vmem:[%s381 + $0x38] sm:$0xff] %v396
                $region88: #{net_forward.1} parent=82 // loop_footer
                  %s379 = sadd.s32 1, %s375
                $region89: #{net_forward.1} parent=82 // loop_footer_branch
                  %374 = sbr.rel target = $region85
                $region90: #{net_forward.1} parent=82 // loop_exit
                  _
              $region83: #{net_forward.1} parent=67 // pred_fallthru
                _
              // Predicated region
              $region91: #{net_forward.1} parent=67 // pred_check
                _
              $region92: #{net_forward.1} parent=67 // pred_check_branch
                %399 = sbr.rel target = $region94
              $region93: #{net_forward.1} parent=67 // pred_region
                _
              $region94: #{net_forward.1} parent=67 // pred_fallthru
                _
            $region68: #{net_forward.1} parent=63 // pred_fallthru
              _
            // Predicated region
            $region69: #{net_forward.1} parent=63 // pred_check
              _
            $region70: #{net_forward.1} parent=63 // pred_check_branch
              %346 = sbr.rel target = $region72
            $region71: #{net_forward.1} parent=63 // pred_region
              loop: start=0, step=1, limit=1
              $region73: #{net_forward.1} parent=71 // loop_pre_header
                _
              $region74: #{net_forward.1} parent=71 // loop_header
                %s349 = sphi 0, %s353
                %p350 = scmp.ge.s32.totalorder %s349, 1
                %s354 = sphi %s340, %s340
                %s355 = sphi %s337, %s337
              $region75: #{net_forward.1} parent=71 // loop_header_branch
                %352 = sbr.rel (%p350) target = $region79
              $region76: #{net_forward.1} parent=71 // loop_body
                %v356 = vld [vmem:[%s354] sm:$0xff]
                %357 = vst [vmem:[%s355] sm:$0xff] %v356
                %v358 = vld [vmem:[%s354 + $0x8] sm:$0xff]
                %359 = vst [vmem:[%s355 + $0x8] sm:$0xff] %v358
                %v360 = vld [vmem:[%s354 + $0x20] sm:$0xff]
                %361 = vst [vmem:[%s355 + $0x10] sm:$0xff] %v360
                %v362 = vld [vmem:[%s354 + $0x28] sm:$0xff]
                %363 = vst [vmem:[%s355 + $0x18] sm:$0xff] %v362
                %v364 = vld [vmem:[%s354 + $0x40] sm:$0xff]
                %365 = vst [vmem:[%s355 + $0x20] sm:$0xff] %v364
                %v366 = vld [vmem:[%s354 + $0x48] sm:$0xff]
                %367 = vst [vmem:[%s355 + $0x28] sm:$0xff] %v366
                %v368 = vld [vmem:[%s354 + $0x60] sm:$0xff]
                %369 = vst [vmem:[%s355 + $0x30] sm:$0xff] %v368
                %v370 = vld [vmem:[%s354 + $0x68] sm:$0xff]
                %371 = vst [vmem:[%s355 + $0x38] sm:$0xff] %v370
              $region77: #{net_forward.1} parent=71 // loop_footer
                %s353 = sadd.s32 1, %s349
              $region78: #{net_forward.1} parent=71 // loop_footer_branch
                %348 = sbr.rel target = $region74
              $region79: #{net_forward.1} parent=71 // loop_exit
                _
            $region72: #{net_forward.1} parent=63 // pred_fallthru
              _
          $region64: #{net_forward.1} parent=59 // pred_fallthru
            _
          %400 = vnop
        $region60: #{net_forward.1} parent=55 // pred_fallthru
          _
      $region56: #{net_forward.1} parent=5 // pred_fallthru
        _
      %p401 = scmp.le.s32.totalorder 1, %s20
      %p402 = scmp.lt.s32.totalorder %s20, 3
      %p403 = pnand %p401, %p402
      %p404 = pneg %p403
      // Predicated region
      $region95: #{net_forward.1} parent=5 // pred_check
        _
      $region96: #{net_forward.1} parent=5 // pred_check_branch
        %406 = sbr.rel (%p403) target = $region98
      $region97: #{net_forward.1} parent=5 // pred_region
        %s407 = ssub.s32 %s20, 1
        %s408 = sand.u32 %s33, 1
        %s409 = sand.u32 %s33, 1
        %s410 = smul.addr %s409, 64
        %s411 = scalar_lea.vmem [#allocation3], %s410
        // Predicated region
        $region99: #{net_forward.1} parent=97 // pred_check
          %p412 = pneg %p46
        $region100: #{net_forward.1} parent=97 // pred_check_branch
          %414 = sbr.rel (%p412) target = $region102
        $region101: #{net_forward.1} parent=97 // pred_region
          _
        $region102: #{net_forward.1} parent=97 // pred_fallthru
          _
        %s415 = sand.u32 %s33, 1
        %s416 = sand.u32 %s33, 1
        %s417 = smul.addr %s416, 64
        %s418 = scalar_lea.vmem [#allocation3], %s417
        %p419 = pneg %p46
        %p420 = pneg %p43
        %p421 = pneg %p67
        %p422 = pneg %p64
        %p423 = pneg %p88
        %p424 = pneg %p85
        %p425 = pneg %p109
        %p426 = pneg %p106
        %p427 = pneg %p130
        %p428 = pneg %p127
        %p429 = pneg %p151
        %p430 = pneg %p148
        %p431 = pneg %p172
        %p432 = pneg %p169
        %p433 = pneg %p193
        %p434 = pneg %p190
        %p435 = pneg %p214
        %p436 = pneg %p211
        %p437 = pneg %p235
        %p438 = pneg %p232
        %p439 = pneg %p256
        %p440 = pneg %p253
        %p441 = pneg %p282
        %p442 = pneg %p279
        %s443 = sand.u32 %s269, 1
        %s444 = scalar_lea.sflag [#allocation5], %s443
        %s445 = sand.u32 %s269, 1
        %s446 = scalar_lea.vmem [#allocation4], %s445
        %v448 = vld [vmem:[%s411] sm:$0xff]
        %v449 = vld [vmem:[%s411 + $0x8] sm:$0x7f]
        %v450 = vpack.c.bf16 %v449, %v448
        %s451 = scalar_lea.vmem %s411, 16 [#allocation3]
        %v452 = vld [vmem:[%s451] sm:$0xff]
        %v453 = vld [vmem:[%s451 + $0x8] sm:$0x7f]
        %v454 = vpack.c.bf16 %v453, %v452
        %s455 = scalar_lea.vmem %s411, 32 [#allocation3]
        %v456 = vld [vmem:[%s455] sm:$0xff]
        %v457 = vld [vmem:[%s455 + $0x8] sm:$0x7f]
        %v458 = vpack.c.bf16 %v457, %v456
        %s459 = scalar_lea.vmem %s411, 48 [#allocation3]
        %v460 = vld [vmem:[%s459] sm:$0xff]
        %v461 = vld [vmem:[%s459 + $0x8] sm:$0x7f]
        %v462 = vpack.c.bf16 %v461, %v460
        %v463 = vld [vmem:[%s1] sm:$0xf]
        %v464 = vld [vmem:[%s1 + $0x4] sm:$0x7]
        %s465 = scalar_lea.vmem %s1, 8
        %v466 = vld [vmem:[%s465] sm:$0xf]
        %v467 = vld [vmem:[%s465 + $0x4] sm:$0x7]
        %s468 = scalar_lea.vmem %s1, 16
        %v469 = vld [vmem:[%s468] sm:$0xf]
        %v470 = vld [vmem:[%s468 + $0x4] sm:$0x7]
        %s471 = scalar_lea.vmem %s1, 24
        %v472 = vld [vmem:[%s471] sm:$0xf]
        %v473 = vld [vmem:[%s471 + $0x4] sm:$0x7]
        %s474 = scalar_lea.vmem %s1, 32
        %v475 = vld [vmem:[%s474] sm:$0xf]
        %v476 = vld [vmem:[%s474 + $0x4] sm:$0x7]
        %s477 = scalar_lea.vmem %s1, 40
        %v478 = vld [vmem:[%s477] sm:$0xf]
        %v479 = vld [vmem:[%s477 + $0x4] sm:$0x7]
        %s480 = scalar_lea.vmem %s1, 48
        %v481 = vld [vmem:[%s480] sm:$0xf]
        %v482 = vld [vmem:[%s480 + $0x4] sm:$0x7]
        %s483 = scalar_lea.vmem %s1, 56
        %v484 = vld [vmem:[%s483] sm:$0xf]
        %v485 = vld [vmem:[%s483 + $0x4] sm:$0x7]
        %s486 = scalar_lea.vmem %s1, 64
        %v487 = vld [vmem:[%s486] sm:$0xf]
        %v488 = vld [vmem:[%s486 + $0x4] sm:$0x7]
        %v491 = vunpack.c.l.b16 %v466
        %v492 = vunpack.c.l.b16 %v467
        %v493 = vpack.c.b16 %v492, %v491
        %vm494 = vcmask 113664
        %v496 = vsel %vm494, %v454, 0
        %vm498 = vcmask 1046528
        %v500 = vsel %vm498, %v493, 0
        %502 = vmatprep.subr.bf16.mxu0 0
        %503 = vmatpush1.bf16.msra.mxu0 %v500
        %504 = vmatprep.subr.bf16.mxu0 0
        %505 = vmatpush1.bf16.msra.mxu0 0
        %506 = vmatprep.subr.bf16.mxu0 0
        %507 = vmatpush1.bf16.msra.mxu0 0
        %508 = vmatprep.subr.bf16.mxu0 0
        %509 = vmatpush1.bf16.msra.mxu0 0
        %510 = vmatprep.subr.bf16.mxu0 0
        %511 = vmatpush1.bf16.msra.mxu0 0
        %512 = vmatprep.subr.bf16.mxu0 0
        %513 = vmatpush1.bf16.msra.mxu0 0
        %514 = vmatprep.subr.bf16.mxu0 0
        %515 = vmatpush1.bf16.msra.mxu0 0
        %516 = vmatprep.subr.bf16.mxu0 0
        %517 = vmatpush1.bf16.msra.mxu0 0
        %518 = vmatprep.subr.bf16.mxu0 0
        %519 = vmatpush1.bf16.msra.mxu0 0
        %520 = vmatprep.subr.bf16.mxu0 0
        %521 = vmatpush1.bf16.msra.mxu0 0
        %522 = vmatprep.subr.bf16.mxu0 0
        %523 = vmatpush1.bf16.msra.mxu0 0
        %524 = vmatprep.subr.bf16.mxu0 0
        %525 = vmatpush1.bf16.msra.mxu0 0
        %526 = vmatprep.subr.bf16.mxu0 0
        %527 = vmatpush1.bf16.msra.mxu0 0
        %528 = vmatprep.subr.bf16.mxu0 0
        %529 = vmatpush1.bf16.msra.mxu0 0
        %530 = vmatprep.subr.bf16.mxu0 0
        %531 = vmatpush1.bf16.msra.mxu0 0
        %532 = vmatprep.subr.bf16.mxu0 0
        %533 = vmatpush1.bf16.msra.mxu0 0
        %534 = vmatprep.mubr.bf16.mxu0 0
        %535 = vmatmul.mubr.bf16.gmra.mrb[0].mxu0 %v496
        %v536 = vpop.f32.mrb[0].mxu0
        %v537 = vadd.f32 0.0, %v536
        %v538 = vpop.f32.mrb[0].mxu0
        %v539 = vpop.f32.mrb[0].mxu0
        %v540 = vadd.f32 0.0, %v539
        %v541 = vpop.f32.mrb[0].mxu0
        %542 = vdwg.mxu0
        %v545 = vunpack.c.l.b16 %v463
        %v546 = vunpack.c.l.b16 %v464
        %v547 = vpack.c.b16 %v546, %v545
        %v549 = vsel %vm494, %v450, 0
        %v552 = vsel %vm498, %v547, 0
        %554 = vmatprep.subr.bf16.mxu0 0
        %555 = vmatpush1.bf16.msra.mxu0 %v552
        %556 = vmatprep.subr.bf16.mxu0 0
        %557 = vmatpush1.bf16.msra.mxu0 0
        %558 = vmatprep.subr.bf16.mxu0 0
        %559 = vmatpush1.bf16.msra.mxu0 0
        %560 = vmatprep.subr.bf16.mxu0 0
        %561 = vmatpush1.bf16.msra.mxu0 0
        %562 = vmatprep.subr.bf16.mxu0 0
        %563 = vmatpush1.bf16.msra.mxu0 0
        %564 = vmatprep.subr.bf16.mxu0 0
        %565 = vmatpush1.bf16.msra.mxu0 0
        %566 = vmatprep.subr.bf16.mxu0 0
        %567 = vmatpush1.bf16.msra.mxu0 0
        %568 = vmatprep.subr.bf16.mxu0 0
        %569 = vmatpush1.bf16.msra.mxu0 0
        %570 = vmatprep.subr.bf16.mxu0 0
        %571 = vmatpush1.bf16.msra.mxu0 0
        %572 = vmatprep.subr.bf16.mxu0 0
        %573 = vmatpush1.bf16.msra.mxu0 0
        %574 = vmatprep.subr.bf16.mxu0 0
        %575 = vmatpush1.bf16.msra.mxu0 0
        %576 = vmatprep.subr.bf16.mxu0 0
        %577 = vmatpush1.bf16.msra.mxu0 0
        %578 = vmatprep.subr.bf16.mxu0 0
        %579 = vmatpush1.bf16.msra.mxu0 0
        %580 = vmatprep.subr.bf16.mxu0 0
        %581 = vmatpush1.bf16.msra.mxu0 0
        %582 = vmatprep.subr.bf16.mxu0 0
        %583 = vmatpush1.bf16.msra.mxu0 0
        %584 = vmatprep.subr.bf16.mxu0 0
        %585 = vmatpush1.bf16.msra.mxu0 0
        %586 = vmatprep.mubr.bf16.mxu0 0
        %587 = vmatmul.mubr.bf16.gmra.mrb[0].mxu0 %v549
        %v588 = vpop.f32.mrb[0].mxu0
        %v589 = vadd.f32 %v537, %v588
        %v590 = vpop.f32.mrb[0].mxu0
        %v591 = vpop.f32.mrb[0].mxu0
        %v592 = vadd.f32 %v540, %v591
        %v593 = vpop.f32.mrb[0].mxu0
        %594 = vdwg.mxu0
        %596 = vrot.lane.b32.xlu0 %v450, 127
        %v597 = vpop.permute.xlu0 %596
        %v600 = vunpack.c.l.b16 %v469
        %v601 = vunpack.c.l.b16 %v470
        %v602 = vpack.c.b16 %v601, %v600
        %v604 = vsel %vm494, %v597, 0
        %v607 = vsel %vm498, %v602, 0
        %609 = vmatprep.subr.bf16.mxu0 0
        %610 = vmatpush1.bf16.msra.mxu0 %v607
        %611 = vmatprep.subr.bf16.mxu0 0
        %612 = vmatpush1.bf16.msra.mxu0 0
        %613 = vmatprep.subr.bf16.mxu0 0
        %614 = vmatpush1.bf16.msra.mxu0 0
        %615 = vmatprep.subr.bf16.mxu0 0
        %616 = vmatpush1.bf16.msra.mxu0 0
        %617 = vmatprep.subr.bf16.mxu0 0
        %618 = vmatpush1.bf16.msra.mxu0 0
        %619 = vmatprep.subr.bf16.mxu0 0
        %620 = vmatpush1.bf16.msra.mxu0 0
        %621 = vmatprep.subr.bf16.mxu0 0
        %622 = vmatpush1.bf16.msra.mxu0 0
        %623 = vmatprep.subr.bf16.mxu0 0
        %624 = vmatpush1.bf16.msra.mxu0 0
        %625 = vmatprep.subr.bf16.mxu0 0
        %626 = vmatpush1.bf16.msra.mxu0 0
        %627 = vmatprep.subr.bf16.mxu0 0
        %628 = vmatpush1.bf16.msra.mxu0 0
        %629 = vmatprep.subr.bf16.mxu0 0
        %630 = vmatpush1.bf16.msra.mxu0 0
        %631 = vmatprep.subr.bf16.mxu0 0
        %632 = vmatpush1.bf16.msra.mxu0 0
        %633 = vmatprep.subr.bf16.mxu0 0
        %634 = vmatpush1.bf16.msra.mxu0 0
        %635 = vmatprep.subr.bf16.mxu0 0
        %636 = vmatpush1.bf16.msra.mxu0 0
        %637 = vmatprep.subr.bf16.mxu0 0
        %638 = vmatpush1.bf16.msra.mxu0 0
        %639 = vmatprep.subr.bf16.mxu0 0
        %640 = vmatpush1.bf16.msra.mxu0 0
        %641 = vmatprep.mubr.bf16.mxu0 0
        %642 = vmatmul.mubr.bf16.gmra.mrb[0].mxu0 %v604
        %v643 = vpop.f32.mrb[0].mxu0
        %v644 = vadd.f32 0.0, %v643
        %v645 = vpop.f32.mrb[0].mxu0
        %v646 = vpop.f32.mrb[0].mxu0
        %v647 = vadd.f32 0.0, %v646
        %v648 = vpop.f32.mrb[0].mxu0
        %649 = vdwg.mxu0
        %v650 = vadd.f32 %v589, %v644
        %v651 = vadd.f32 %v592, %v647
        %v654 = vunpack.c.l.b16 %v472
        %v655 = vunpack.c.l.b16 %v473
        %v656 = vpack.c.b16 %v655, %v654
        %v658 = vsel %vm494, %v458, 0
        %v661 = vsel %vm498, %v656, 0
        %663 = vmatprep.subr.bf16.mxu0 0
        %664 = vmatpush1.bf16.msra.mxu0 %v661
        %665 = vmatprep.subr.bf16.mxu0 0
        %666 = vmatpush1.bf16.msra.mxu0 0
        %667 = vmatprep.subr.bf16.mxu0 0
        %668 = vmatpush1.bf16.msra.mxu0 0
        %669 = vmatprep.subr.bf16.mxu0 0
        %670 = vmatpush1.bf16.msra.mxu0 0
        %671 = vmatprep.subr.bf16.mxu0 0
        %672 = vmatpush1.bf16.msra.mxu0 0
        %673 = vmatprep.subr.bf16.mxu0 0
        %674 = vmatpush1.bf16.msra.mxu0 0
        %675 = vmatprep.subr.bf16.mxu0 0
        %676 = vmatpush1.bf16.msra.mxu0 0
        %677 = vmatprep.subr.bf16.mxu0 0
        %678 = vmatpush1.bf16.msra.mxu0 0
        %679 = vmatprep.subr.bf16.mxu0 0
        %680 = vmatpush1.bf16.msra.mxu0 0
        %681 = vmatprep.subr.bf16.mxu0 0
        %682 = vmatpush1.bf16.msra.mxu0 0
        %683 = vmatprep.subr.bf16.mxu0 0
        %684 = vmatpush1.bf16.msra.mxu0 0
        %685 = vmatprep.subr.bf16.mxu0 0
        %686 = vmatpush1.bf16.msra.mxu0 0
        %687 = vmatprep.subr.bf16.mxu0 0
        %688 = vmatpush1.bf16.msra.mxu0 0
        %689 = vmatprep.subr.bf16.mxu0 0
        %690 = vmatpush1.bf16.msra.mxu0 0
        %691 = vmatprep.subr.bf16.mxu0 0
        %692 = vmatpush1.bf16.msra.mxu0 0
        %693 = vmatprep.subr.bf16.mxu0 0
        %694 = vmatpush1.bf16.msra.mxu0 0
        %695 = vmatprep.mubr.bf16.mxu0 0
        %696 = vmatmul.mubr.bf16.gmra.mrb[0].mxu0 %v658
        %v697 = vpop.f32.mrb[0].mxu0
        %v698 = vadd.f32 0.0, %v697
        %v699 = vpop.f32.mrb[0].mxu0
        %v700 = vpop.f32.mrb[0].mxu0
        %v701 = vadd.f32 0.0, %v700
        %v702 = vpop.f32.mrb[0].mxu0
        %703 = vdwg.mxu0
        %v704 = vadd.f32 %v650, %v698
        %v705 = vadd.f32 %v651, %v701
        %v708 = vunpack.c.l.b16 %v475
        %v709 = vunpack.c.l.b16 %v476
        %v710 = vpack.c.b16 %v709, %v708
        %v712 = vsel %vm494, %v462, 0
        %v715 = vsel %vm498, %v710, 0
        %717 = vmatprep.subr.bf16.mxu0 0
        %718 = vmatpush1.bf16.msra.mxu0 %v715
        %719 = vmatprep.subr.bf16.mxu0 0
        %720 = vmatpush1.bf16.msra.mxu0 0
        %721 = vmatprep.subr.bf16.mxu0 0
        %722 = vmatpush1.bf16.msra.mxu0 0
        %723 = vmatprep.subr.bf16.mxu0 0
        %724 = vmatpush1.bf16.msra.mxu0 0
        %725 = vmatprep.subr.bf16.mxu0 0
        %726 = vmatpush1.bf16.msra.mxu0 0
        %727 = vmatprep.subr.bf16.mxu0 0
        %728 = vmatpush1.bf16.msra.mxu0 0
        %729 = vmatprep.subr.bf16.mxu0 0
        %730 = vmatpush1.bf16.msra.mxu0 0
        %731 = vmatprep.subr.bf16.mxu0 0
        %732 = vmatpush1.bf16.msra.mxu0 0
        %733 = vmatprep.subr.bf16.mxu0 0
        %734 = vmatpush1.bf16.msra.mxu0 0
        %735 = vmatprep.subr.bf16.mxu0 0
        %736 = vmatpush1.bf16.msra.mxu0 0
        %737 = vmatprep.subr.bf16.mxu0 0
        %738 = vmatpush1.bf16.msra.mxu0 0
        %739 = vmatprep.subr.bf16.mxu0 0
        %740 = vmatpush1.bf16.msra.mxu0 0
        %741 = vmatprep.subr.bf16.mxu0 0
        %742 = vmatpush1.bf16.msra.mxu0 0
        %743 = vmatprep.subr.bf16.mxu0 0
        %744 = vmatpush1.bf16.msra.mxu0 0
        %745 = vmatprep.subr.bf16.mxu0 0
        %746 = vmatpush1.bf16.msra.mxu0 0
        %747 = vmatprep.subr.bf16.mxu0 0
        %748 = vmatpush1.bf16.msra.mxu0 0
        %749 = vmatprep.mubr.bf16.mxu0 0
        %750 = vmatmul.mubr.bf16.gmra.mrb[0].mxu0 %v712
        %v751 = vpop.f32.mrb[0].mxu0
        %v752 = vadd.f32 0.0, %v751
        %v753 = vpop.f32.mrb[0].mxu0
        %v754 = vpop.f32.mrb[0].mxu0
        %v755 = vadd.f32 0.0, %v754
        %v756 = vpop.f32.mrb[0].mxu0
        %757 = vdwg.mxu0
        %v758 = vadd.f32 %v704, %v752
        %v759 = vadd.f32 %v705, %v755
        %761 = vrot.lane.b32.xlu0 %v458, 127
        %v762 = vpop.permute.xlu0 %761
        %v765 = vunpack.c.l.b16 %v478
        %v766 = vunpack.c.l.b16 %v479
        %v767 = vpack.c.b16 %v766, %v765
        %v769 = vsel %vm494, %v762, 0
        %v772 = vsel %vm498, %v767, 0
        %774 = vmatprep.subr.bf16.mxu0 0
        %775 = vmatpush1.bf16.msra.mxu0 %v772
        %776 = vmatprep.subr.bf16.mxu0 0
        %777 = vmatpush1.bf16.msra.mxu0 0
        %778 = vmatprep.subr.bf16.mxu0 0
        %779 = vmatpush1.bf16.msra.mxu0 0
        %780 = vmatprep.subr.bf16.mxu0 0
        %781 = vmatpush1.bf16.msra.mxu0 0
        %782 = vmatprep.subr.bf16.mxu0 0
        %783 = vmatpush1.bf16.msra.mxu0 0
        %784 = vmatprep.subr.bf16.mxu0 0
        %785 = vmatpush1.bf16.msra.mxu0 0
        %786 = vmatprep.subr.bf16.mxu0 0
        %787 = vmatpush1.bf16.msra.mxu0 0
        %788 = vmatprep.subr.bf16.mxu0 0
        %789 = vmatpush1.bf16.msra.mxu0 0
        %790 = vmatprep.subr.bf16.mxu0 0
        %791 = vmatpush1.bf16.msra.mxu0 0
        %792 = vmatprep.subr.bf16.mxu0 0
        %793 = vmatpush1.bf16.msra.mxu0 0
        %794 = vmatprep.subr.bf16.mxu0 0
        %795 = vmatpush1.bf16.msra.mxu0 0
        %796 = vmatprep.subr.bf16.mxu0 0
        %797 = vmatpush1.bf16.msra.mxu0 0
        %798 = vmatprep.subr.bf16.mxu0 0
        %799 = vmatpush1.bf16.msra.mxu0 0
        %800 = vmatprep.subr.bf16.mxu0 0
        %801 = vmatpush1.bf16.msra.mxu0 0
        %802 = vmatprep.subr.bf16.mxu0 0
        %803 = vmatpush1.bf16.msra.mxu0 0
        %804 = vmatprep.subr.bf16.mxu0 0
        %805 = vmatpush1.bf16.msra.mxu0 0
        %806 = vmatprep.mubr.bf16.mxu0 0
        %807 = vmatmul.mubr.bf16.gmra.mrb[0].mxu0 %v769
        %v808 = vpop.f32.mrb[0].mxu0
        %v809 = vadd.f32 0.0, %v808
        %v810 = vpop.f32.mrb[0].mxu0
        %v811 = vpop.f32.mrb[0].mxu0
        %v812 = vadd.f32 0.0, %v811
        %v813 = vpop.f32.mrb[0].mxu0
        %814 = vdwg.mxu0
        %v815 = vadd.f32 %v758, %v809
        %v816 = vadd.f32 %v759, %v812
        %v817 = vshrl.u32 %v450, 16
        %v819 = vshll.u32 %v450, 16
        %v821 = vrot.slane %v819, 1
        %v822 = vor.u32 %v817, %v821
        %v825 = vunpack.c.l.b16 %v481
        %v826 = vunpack.c.l.b16 %v482
        %v827 = vpack.c.b16 %v826, %v825
        %v829 = vsel %vm494, %v822, 0
        %v832 = vsel %vm498, %v827, 0
        %834 = vmatprep.subr.bf16.mxu0 0
        %835 = vmatpush1.bf16.msra.mxu0 %v832
        %836 = vmatprep.subr.bf16.mxu0 0
        %837 = vmatpush1.bf16.msra.mxu0 0
        %838 = vmatprep.subr.bf16.mxu0 0
        %839 = vmatpush1.bf16.msra.mxu0 0
        %840 = vmatprep.subr.bf16.mxu0 0
        %841 = vmatpush1.bf16.msra.mxu0 0
        %842 = vmatprep.subr.bf16.mxu0 0
        %843 = vmatpush1.bf16.msra.mxu0 0
        %844 = vmatprep.subr.bf16.mxu0 0
        %845 = vmatpush1.bf16.msra.mxu0 0
        %846 = vmatprep.subr.bf16.mxu0 0
        %847 = vmatpush1.bf16.msra.mxu0 0
        %848 = vmatprep.subr.bf16.mxu0 0
        %849 = vmatpush1.bf16.msra.mxu0 0
        %850 = vmatprep.subr.bf16.mxu0 0
        %851 = vmatpush1.bf16.msra.mxu0 0
        %852 = vmatprep.subr.bf16.mxu0 0
        %853 = vmatpush1.bf16.msra.mxu0 0
        %854 = vmatprep.subr.bf16.mxu0 0
        %855 = vmatpush1.bf16.msra.mxu0 0
        %856 = vmatprep.subr.bf16.mxu0 0
        %857 = vmatpush1.bf16.msra.mxu0 0
        %858 = vmatprep.subr.bf16.mxu0 0
        %859 = vmatpush1.bf16.msra.mxu0 0
        %860 = vmatprep.subr.bf16.mxu0 0
        %861 = vmatpush1.bf16.msra.mxu0 0
        %862 = vmatprep.subr.bf16.mxu0 0
        %863 = vmatpush1.bf16.msra.mxu0 0
        %864 = vmatprep.subr.bf16.mxu0 0
        %865 = vmatpush1.bf16.msra.mxu0 0
        %866 = vmatprep.mubr.bf16.mxu0 0
        %867 = vmatmul.mubr.bf16.gmra.mrb[0].mxu0 %v829
        %v868 = vpop.f32.mrb[0].mxu0
        %v869 = vadd.f32 0.0, %v868
        %v870 = vpop.f32.mrb[0].mxu0
        %v871 = vpop.f32.mrb[0].mxu0
        %v872 = vadd.f32 0.0, %v871
        %v873 = vpop.f32.mrb[0].mxu0
        %874 = vdwg.mxu0
        %v875 = vadd.f32 %v815, %v869
        %v876 = vadd.f32 %v816, %v872
        %v877 = vshrl.u32 %v454, 16
        %v879 = vshll.u32 %v454, 16
        %v881 = vrot.slane %v879, 1
        %v882 = vor.u32 %v877, %v881
        %v885 = vunpack.c.l.b16 %v484
        %v886 = vunpack.c.l.b16 %v485
        %v887 = vpack.c.b16 %v886, %v885
        %v889 = vsel %vm494, %v882, 0
        %v892 = vsel %vm498, %v887, 0
        %894 = vmatprep.subr.bf16.mxu0 0
        %895 = vmatpush1.bf16.msra.mxu0 %v892
        %896 = vmatprep.subr.bf16.mxu0 0
        %897 = vmatpush1.bf16.msra.mxu0 0
        %898 = vmatprep.subr.bf16.mxu0 0
        %899 = vmatpush1.bf16.msra.mxu0 0
        %900 = vmatprep.subr.bf16.mxu0 0
        %901 = vmatpush1.bf16.msra.mxu0 0
        %902 = vmatprep.subr.bf16.mxu0 0
        %903 = vmatpush1.bf16.msra.mxu0 0
        %904 = vmatprep.subr.bf16.mxu0 0
        %905 = vmatpush1.bf16.msra.mxu0 0
        %906 = vmatprep.subr.bf16.mxu0 0
        %907 = vmatpush1.bf16.msra.mxu0 0
        %908 = vmatprep.subr.bf16.mxu0 0
        %909 = vmatpush1.bf16.msra.mxu0 0
        %910 = vmatprep.subr.bf16.mxu0 0
        %911 = vmatpush1.bf16.msra.mxu0 0
        %912 = vmatprep.subr.bf16.mxu0 0
        %913 = vmatpush1.bf16.msra.mxu0 0
        %914 = vmatprep.subr.bf16.mxu0 0
        %915 = vmatpush1.bf16.msra.mxu0 0
        %916 = vmatprep.subr.bf16.mxu0 0
        %917 = vmatpush1.bf16.msra.mxu0 0
        %918 = vmatprep.subr.bf16.mxu0 0
        %919 = vmatpush1.bf16.msra.mxu0 0
        %920 = vmatprep.subr.bf16.mxu0 0
        %921 = vmatpush1.bf16.msra.mxu0 0
        %922 = vmatprep.subr.bf16.mxu0 0
        %923 = vmatpush1.bf16.msra.mxu0 0
        %924 = vmatprep.subr.bf16.mxu0 0
        %925 = vmatpush1.bf16.msra.mxu0 0
        %926 = vmatprep.mubr.bf16.mxu0 0
        %927 = vmatmul.mubr.bf16.gmra.mrb[0].mxu0 %v889
        %v928 = vpop.f32.mrb[0].mxu0
        %v929 = vadd.f32 0.0, %v928
        %v930 = vpop.f32.mrb[0].mxu0
        %v931 = vpop.f32.mrb[0].mxu0
        %v932 = vadd.f32 0.0, %v931
        %v933 = vpop.f32.mrb[0].mxu0
        %934 = vdwg.mxu0
        %v935 = vadd.f32 %v875, %v929
        %v936 = vadd.f32 %v876, %v932
        %937 = vrot.lane.b32.xlu0 %v822, 127
        %v938 = vpop.permute.xlu0 %937
        %v941 = vunpack.c.l.b16 %v487
        %v942 = vunpack.c.l.b16 %v488
        %v943 = vpack.c.b16 %v942, %v941
        %v945 = vsel %vm494, %v938, 0
        %v948 = vsel %vm498, %v943, 0
        %950 = vmatprep.subr.bf16.mxu0 0
        %951 = vmatpush1.bf16.msra.mxu0 %v948
        %952 = vmatprep.subr.bf16.mxu0 0
        %953 = vmatpush1.bf16.msra.mxu0 0
        %954 = vmatprep.subr.bf16.mxu0 0
        %955 = vmatpush1.bf16.msra.mxu0 0
        %956 = vmatprep.subr.bf16.mxu0 0
        %957 = vmatpush1.bf16.msra.mxu0 0
        %958 = vmatprep.subr.bf16.mxu0 0
        %959 = vmatpush1.bf16.msra.mxu0 0
        %960 = vmatprep.subr.bf16.mxu0 0
        %961 = vmatpush1.bf16.msra.mxu0 0
        %962 = vmatprep.subr.bf16.mxu0 0
        %963 = vmatpush1.bf16.msra.mxu0 0
        %964 = vmatprep.subr.bf16.mxu0 0
        %965 = vmatpush1.bf16.msra.mxu0 0
        %966 = vmatprep.subr.bf16.mxu0 0
        %967 = vmatpush1.bf16.msra.mxu0 0
        %968 = vmatprep.subr.bf16.mxu0 0
        %969 = vmatpush1.bf16.msra.mxu0 0
        %970 = vmatprep.subr.bf16.mxu0 0
        %971 = vmatpush1.bf16.msra.mxu0 0
        %972 = vmatprep.subr.bf16.mxu0 0
        %973 = vmatpush1.bf16.msra.mxu0 0
        %974 = vmatprep.subr.bf16.mxu0 0
        %975 = vmatpush1.bf16.msra.mxu0 0
        %976 = vmatprep.subr.bf16.mxu0 0
        %977 = vmatpush1.bf16.msra.mxu0 0
        %978 = vmatprep.subr.bf16.mxu0 0
        %979 = vmatpush1.bf16.msra.mxu0 0
        %980 = vmatprep.subr.bf16.mxu0 0
        %981 = vmatpush1.bf16.msra.mxu0 0
        %982 = vmatprep.mubr.bf16.mxu0 0
        %983 = vmatmul.mubr.bf16.gmra.mrb[0].mxu0 %v945
        %v984 = vpop.f32.mrb[0].mxu0
        %v985 = vadd.f32 0.0, %v984
        %v986 = vpop.f32.mrb[0].mxu0
        %v987 = vpop.f32.mrb[0].mxu0
        %v988 = vadd.f32 0.0, %v987
        %v989 = vpop.f32.mrb[0].mxu0
        %990 = vdwg.mxu0
        %v991 = vadd.f32 %v935, %v985
        %v992 = vadd.f32 %v936, %v988
        %993 = vmatprep.subr.bf16.mxu0 0
        %994 = vmatpush1.bf16.msra.mxu0 %v500
        %995 = vmatprep.subr.bf16.mxu0 0
        %996 = vmatpush1.bf16.msra.mxu0 0
        %997 = vmatprep.subr.bf16.mxu0 0
        %998 = vmatpush1.bf16.msra.mxu0 0
        %999 = vmatprep.subr.bf16.mxu0 0
        %1000 = vmatpush1.bf16.msra.mxu0 0
        %1001 = vmatprep.subr.bf16.mxu0 0
        %1002 = vmatpush1.bf16.msra.mxu0 0
        %1003 = vmatprep.subr.bf16.mxu0 0
        %1004 = vmatpush1.bf16.msra.mxu0 0
        %1005 = vmatprep.subr.bf16.mxu0 0
        %1006 = vmatpush1.bf16.msra.mxu0 0
        %1007 = vmatprep.subr.bf16.mxu0 0
        %1008 = vmatpush1.bf16.msra.mxu0 0
        %1009 = vmatprep.subr.bf16.mxu0 0
        %1010 = vmatpush1.bf16.msra.mxu0 0
        %1011 = vmatprep.subr.bf16.mxu0 0
        %1012 = vmatpush1.bf16.msra.mxu0 0
        %1013 = vmatprep.subr.bf16.mxu0 0
        %1014 = vmatpush1.bf16.msra.mxu0 0
        %1015 = vmatprep.subr.bf16.mxu0 0
        %1016 = vmatpush1.bf16.msra.mxu0 0
        %1017 = vmatprep.subr.bf16.mxu0 0
        %1018 = vmatpush1.bf16.msra.mxu0 0
        %1019 = vmatprep.subr.bf16.mxu0 0
        %1020 = vmatpush1.bf16.msra.mxu0 0
        %1021 = vmatprep.subr.bf16.mxu0 0
        %1022 = vmatpush1.bf16.msra.mxu0 0
        %1023 = vmatprep.subr.bf16.mxu0 0
        %1024 = vmatpush1.bf16.msra.mxu0 0
        %1025 = vmatprep.mubr.bf16.mxu0 0
        %1026 = vmatmul.mubr.bf16.gmra.mrb[0].mxu0 %v604
        %v1027 = vpop.f32.mrb[0].mxu0
        %v1028 = vadd.f32 0.0, %v1027
        %v1029 = vpop.f32.mrb[0].mxu0
        %v1030 = vpop.f32.mrb[0].mxu0
        %v1031 = vadd.f32 0.0, %v1030
        %v1032 = vpop.f32.mrb[0].mxu0
        %1033 = vdwg.mxu0
        %1034 = vmatprep.subr.bf16.mxu0 0
        %1035 = vmatpush1.bf16.msra.mxu0 %v552
        %1036 = vmatprep.subr.bf16.mxu0 0
        %1037 = vmatpush1.bf16.msra.mxu0 0
        %1038 = vmatprep.subr.bf16.mxu0 0
        %1039 = vmatpush1.bf16.msra.mxu0 0
        %1040 = vmatprep.subr.bf16.mxu0 0
        %1041 = vmatpush1.bf16.msra.mxu0 0
        %1042 = vmatprep.subr.bf16.mxu0 0
        %1043 = vmatpush1.bf16.msra.mxu0 0
        %1044 = vmatprep.subr.bf16.mxu0 0
        %1045 = vmatpush1.bf16.msra.mxu0 0
        %1046 = vmatprep.subr.bf16.mxu0 0
        %1047 = vmatpush1.bf16.msra.mxu0 0
        %1048 = vmatprep.subr.bf16.mxu0 0
        %1049 = vmatpush1.bf16.msra.mxu0 0
        %1050 = vmatprep.subr.bf16.mxu0 0
        %1051 = vmatpush1.bf16.msra.mxu0 0
        %1052 = vmatprep.subr.bf16.mxu0 0
        %1053 = vmatpush1.bf16.msra.mxu0 0
        %1054 = vmatprep.subr.bf16.mxu0 0
        %1055 = vmatpush1.bf16.msra.mxu0 0
        %1056 = vmatprep.subr.bf16.mxu0 0
        %1057 = vmatpush1.bf16.msra.mxu0 0
        %1058 = vmatprep.subr.bf16.mxu0 0
        %1059 = vmatpush1.bf16.msra.mxu0 0
        %1060 = vmatprep.subr.bf16.mxu0 0
        %1061 = vmatpush1.bf16.msra.mxu0 0
        %1062 = vmatprep.subr.bf16.mxu0 0
        %1063 = vmatpush1.bf16.msra.mxu0 0
        %1064 = vmatprep.subr.bf16.mxu0 0
        %1065 = vmatpush1.bf16.msra.mxu0 0
        %1066 = vmatprep.mubr.bf16.mxu0 0
        %1067 = vmatmul.mubr.bf16.gmra.mrb[0].mxu0 %v496
        %v1068 = vpop.f32.mrb[0].mxu0
        %v1069 = vadd.f32 %v1028, %v1068
        %v1070 = vpop.f32.mrb[0].mxu0
        %v1071 = vpop.f32.mrb[0].mxu0
        %v1072 = vadd.f32 %v1031, %v1071
        %v1073 = vpop.f32.mrb[0].mxu0
        %1074 = vdwg.mxu0
        %1076 = vrot.lane.b32.xlu0 %v454, 127
        %v1077 = vpop.permute.xlu0 %1076
        %v1079 = vsel %vm494, %v1077, 0
        %1081 = vmatprep.subr.bf16.mxu0 0
        %1082 = vmatpush1.bf16.msra.mxu0 %v607
        %1083 = vmatprep.subr.bf16.mxu0 0
        %1084 = vmatpush1.bf16.msra.mxu0 0
        %1085 = vmatprep.subr.bf16.mxu0 0
        %1086 = vmatpush1.bf16.msra.mxu0 0
        %1087 = vmatprep.subr.bf16.mxu0 0
        %1088 = vmatpush1.bf16.msra.mxu0 0
        %1089 = vmatprep.subr.bf16.mxu0 0
        %1090 = vmatpush1.bf16.msra.mxu0 0
        %1091 = vmatprep.subr.bf16.mxu0 0
        %1092 = vmatpush1.bf16.msra.mxu0 0
        %1093 = vmatprep.subr.bf16.mxu0 0
        %1094 = vmatpush1.bf16.msra.mxu0 0
        %1095 = vmatprep.subr.bf16.mxu0 0
        %1096 = vmatpush1.bf16.msra.mxu0 0
        %1097 = vmatprep.subr.bf16.mxu0 0
        %1098 = vmatpush1.bf16.msra.mxu0 0
        %1099 = vmatprep.subr.bf16.mxu0 0
        %1100 = vmatpush1.bf16.msra.mxu0 0
        %1101 = vmatprep.subr.bf16.mxu0 0
        %1102 = vmatpush1.bf16.msra.mxu0 0
        %1103 = vmatprep.subr.bf16.mxu0 0
        %1104 = vmatpush1.bf16.msra.mxu0 0
        %1105 = vmatprep.subr.bf16.mxu0 0
        %1106 = vmatpush1.bf16.msra.mxu0 0
        %1107 = vmatprep.subr.bf16.mxu0 0
        %1108 = vmatpush1.bf16.msra.mxu0 0
        %1109 = vmatprep.subr.bf16.mxu0 0
        %1110 = vmatpush1.bf16.msra.mxu0 0
        %1111 = vmatprep.subr.bf16.mxu0 0
        %1112 = vmatpush1.bf16.msra.mxu0 0
        %1113 = vmatprep.mubr.bf16.mxu0 0
        %1114 = vmatmul.mubr.bf16.gmra.mrb[0].mxu0 %v1079
        %v1115 = vpop.f32.mrb[0].mxu0
        %v1116 = vadd.f32 0.0, %v1115
        %v1117 = vpop.f32.mrb[0].mxu0
        %v1118 = vpop.f32.mrb[0].mxu0
        %v1119 = vadd.f32 0.0, %v1118
        %v1120 = vpop.f32.mrb[0].mxu0
        %1121 = vdwg.mxu0
        %v1122 = vadd.f32 %v1069, %v1116
        %v1123 = vadd.f32 %v1072, %v1119
        %1124 = vmatprep.subr.bf16.mxu0 0
        %1125 = vmatpush1.bf16.msra.mxu0 %v661
        %1126 = vmatprep.subr.bf16.mxu0 0
        %1127 = vmatpush1.bf16.msra.mxu0 0
        %1128 = vmatprep.subr.bf16.mxu0 0
        %1129 = vmatpush1.bf16.msra.mxu0 0
        %1130 = vmatprep.subr.bf16.mxu0 0
        %1131 = vmatpush1.bf16.msra.mxu0 0
        %1132 = vmatprep.subr.bf16.mxu0 0
        %1133 = vmatpush1.bf16.msra.mxu0 0
        %1134 = vmatprep.subr.bf16.mxu0 0
        %1135 = vmatpush1.bf16.msra.mxu0 0
        %1136 = vmatprep.subr.bf16.mxu0 0
        %1137 = vmatpush1.bf16.msra.mxu0 0
        %1138 = vmatprep.subr.bf16.mxu0 0
        %1139 = vmatpush1.bf16.msra.mxu0 0
        %1140 = vmatprep.subr.bf16.mxu0 0
        %1141 = vmatpush1.bf16.msra.mxu0 0
        %1142 = vmatprep.subr.bf16.mxu0 0
        %1143 = vmatpush1.bf16.msra.mxu0 0
        %1144 = vmatprep.subr.bf16.mxu0 0
        %1145 = vmatpush1.bf16.msra.mxu0 0
        %1146 = vmatprep.subr.bf16.mxu0 0
        %1147 = vmatpush1.bf16.msra.mxu0 0
        %1148 = vmatprep.subr.bf16.mxu0 0
        %1149 = vmatpush1.bf16.msra.mxu0 0
        %1150 = vmatprep.subr.bf16.mxu0 0
        %1151 = vmatpush1.bf16.msra.mxu0 0
        %1152 = vmatprep.subr.bf16.mxu0 0
        %1153 = vmatpush1.bf16.msra.mxu0 0
        %1154 = vmatprep.subr.bf16.mxu0 0
        %1155 = vmatpush1.bf16.msra.mxu0 0
        %1156 = vmatprep.mubr.bf16.mxu0 0
        %1157 = vmatmul.mubr.bf16.gmra.mrb[0].mxu0 %v712
        %v1158 = vpop.f32.mrb[0].mxu0
        %v1159 = vadd.f32 0.0, %v1158
        %v1160 = vpop.f32.mrb[0].mxu0
        %v1161 = vpop.f32.mrb[0].mxu0
        %v1162 = vadd.f32 0.0, %v1161
        %v1163 = vpop.f32.mrb[0].mxu0
        %1164 = vdwg.mxu0
        %v1165 = vadd.f32 %v1122, %v1159
        %v1166 = vadd.f32 %v1123, %v1162
        %1167 = vmatprep.subr.bf16.mxu0 0
        %1168 = vmatpush1.bf16.msra.mxu0 %v715
        %1169 = vmatprep.subr.bf16.mxu0 0
        %1170 = vmatpush1.bf16.msra.mxu0 0
        %1171 = vmatprep.subr.bf16.mxu0 0
        %1172 = vmatpush1.bf16.msra.mxu0 0
        %1173 = vmatprep.subr.bf16.mxu0 0
        %1174 = vmatpush1.bf16.msra.mxu0 0
        %1175 = vmatprep.subr.bf16.mxu0 0
        %1176 = vmatpush1.bf16.msra.mxu0 0
        %1177 = vmatprep.subr.bf16.mxu0 0
        %1178 = vmatpush1.bf16.msra.mxu0 0
        %1179 = vmatprep.subr.bf16.mxu0 0
        %1180 = vmatpush1.bf16.msra.mxu0 0
        %1181 = vmatprep.subr.bf16.mxu0 0
        %1182 = vmatpush1.bf16.msra.mxu0 0
        %1183 = vmatprep.subr.bf16.mxu0 0
        %1184 = vmatpush1.bf16.msra.mxu0 0
        %1185 = vmatprep.subr.bf16.mxu0 0
        %1186 = vmatpush1.bf16.msra.mxu0 0
        %1187 = vmatprep.subr.bf16.mxu0 0
        %1188 = vmatpush1.bf16.msra.mxu0 0
        %1189 = vmatprep.subr.bf16.mxu0 0
        %1190 = vmatpush1.bf16.msra.mxu0 0
        %1191 = vmatprep.subr.bf16.mxu0 0
        %1192 = vmatpush1.bf16.msra.mxu0 0
        %1193 = vmatprep.subr.bf16.mxu0 0
        %1194 = vmatpush1.bf16.msra.mxu0 0
        %1195 = vmatprep.subr.bf16.mxu0 0
        %1196 = vmatpush1.bf16.msra.mxu0 0
        %1197 = vmatprep.subr.bf16.mxu0 0
        %1198 = vmatpush1.bf16.msra.mxu0 0
        %1199 = vmatprep.mubr.bf16.mxu0 0
        %1200 = vmatmul.mubr.bf16.gmra.mrb[0].mxu0 %v769
        %v1201 = vpop.f32.mrb[0].mxu0
        %v1202 = vadd.f32 0.0, %v1201
        %v1203 = vpop.f32.mrb[0].mxu0
        %v1204 = vpop.f32.mrb[0].mxu0
        %v1205 = vadd.f32 0.0, %v1204
        %v1206 = vpop.f32.mrb[0].mxu0
        %1207 = vdwg.mxu0
        %v1208 = vadd.f32 %v1165, %v1202
        %v1209 = vadd.f32 %v1166, %v1205
        %1211 = vrot.lane.b32.xlu0 %v462, 127
        %v1212 = vpop.permute.xlu0 %1211
        %v1214 = vsel %vm494, %v1212, 0
        %1216 = vmatprep.subr.bf16.mxu0 0
        %1217 = vmatpush1.bf16.msra.mxu0 %v772
        %1218 = vmatprep.subr.bf16.mxu0 0
        %1219 = vmatpush1.bf16.msra.mxu0 0
        %1220 = vmatprep.subr.bf16.mxu0 0
        %1221 = vmatpush1.bf16.msra.mxu0 0
        %1222 = vmatprep.subr.bf16.mxu0 0
        %1223 = vmatpush1.bf16.msra.mxu0 0
        %1224 = vmatprep.subr.bf16.mxu0 0
        %1225 = vmatpush1.bf16.msra.mxu0 0
        %1226 = vmatprep.subr.bf16.mxu0 0
        %1227 = vmatpush1.bf16.msra.mxu0 0
        %1228 = vmatprep.subr.bf16.mxu0 0
        %1229 = vmatpush1.bf16.msra.mxu0 0
        %1230 = vmatprep.subr.bf16.mxu0 0
        %1231 = vmatpush1.bf16.msra.mxu0 0
        %1232 = vmatprep.subr.bf16.mxu0 0
        %1233 = vmatpush1.bf16.msra.mxu0 0
        %1234 = vmatprep.subr.bf16.mxu0 0
        %1235 = vmatpush1.bf16.msra.mxu0 0
        %1236 = vmatprep.subr.bf16.mxu0 0
        %1237 = vmatpush1.bf16.msra.mxu0 0
        %1238 = vmatprep.subr.bf16.mxu0 0
        %1239 = vmatpush1.bf16.msra.mxu0 0
        %1240 = vmatprep.subr.bf16.mxu0 0
        %1241 = vmatpush1.bf16.msra.mxu0 0
        %1242 = vmatprep.subr.bf16.mxu0 0
        %1243 = vmatpush1.bf16.msra.mxu0 0
        %1244 = vmatprep.subr.bf16.mxu0 0
        %1245 = vmatpush1.bf16.msra.mxu0 0
        %1246 = vmatprep.subr.bf16.mxu0 0
        %1247 = vmatpush1.bf16.msra.mxu0 0
        %1248 = vmatprep.mubr.bf16.mxu0 0
        %1249 = vmatmul.mubr.bf16.gmra.mrb[0].mxu0 %v1214
        %v1250 = vpop.f32.mrb[0].mxu0
        %v1251 = vadd.f32 0.0, %v1250
        %v1252 = vpop.f32.mrb[0].mxu0
        %v1253 = vpop.f32.mrb[0].mxu0
        %v1254 = vadd.f32 0.0, %v1253
        %v1255 = vpop.f32.mrb[0].mxu0
        %1256 = vdwg.mxu0
        %v1257 = vadd.f32 %v1208, %v1251
        %v1258 = vadd.f32 %v1209, %v1254
        %1259 = vmatprep.subr.bf16.mxu0 0
        %1260 = vmatpush1.bf16.msra.mxu0 %v832
        %1261 = vmatprep.subr.bf16.mxu0 0
        %1262 = vmatpush1.bf16.msra.mxu0 0
        %1263 = vmatprep.subr.bf16.mxu0 0
        %1264 = vmatpush1.bf16.msra.mxu0 0
        %1265 = vmatprep.subr.bf16.mxu0 0
        %1266 = vmatpush1.bf16.msra.mxu0 0
        %1267 = vmatprep.subr.bf16.mxu0 0
        %1268 = vmatpush1.bf16.msra.mxu0 0
        %1269 = vmatprep.subr.bf16.mxu0 0
        %1270 = vmatpush1.bf16.msra.mxu0 0
        %1271 = vmatprep.subr.bf16.mxu0 0
        %1272 = vmatpush1.bf16.msra.mxu0 0
        %1273 = vmatprep.subr.bf16.mxu0 0
        %1274 = vmatpush1.bf16.msra.mxu0 0
        %1275 = vmatprep.subr.bf16.mxu0 0
        %1276 = vmatpush1.bf16.msra.mxu0 0
        %1277 = vmatprep.subr.bf16.mxu0 0
        %1278 = vmatpush1.bf16.msra.mxu0 0
        %1279 = vmatprep.subr.bf16.mxu0 0
        %1280 = vmatpush1.bf16.msra.mxu0 0
        %1281 = vmatprep.subr.bf16.mxu0 0
        %1282 = vmatpush1.bf16.msra.mxu0 0
        %1283 = vmatprep.subr.bf16.mxu0 0
        %1284 = vmatpush1.bf16.msra.mxu0 0
        %1285 = vmatprep.subr.bf16.mxu0 0
        %1286 = vmatpush1.bf16.msra.mxu0 0
        %1287 = vmatprep.subr.bf16.mxu0 0
        %1288 = vmatpush1.bf16.msra.mxu0 0
        %1289 = vmatprep.subr.bf16.mxu0 0
        %1290 = vmatpush1.bf16.msra.mxu0 0
        %1291 = vmatprep.mubr.bf16.mxu0 0
        %1292 = vmatmul.mubr.bf16.gmra.mrb[0].mxu0 %v889
        %v1293 = vpop.f32.mrb[0].mxu0
        %v1294 = vadd.f32 0.0, %v1293
        %v1295 = vpop.f32.mrb[0].mxu0
        %v1296 = vpop.f32.mrb[0].mxu0
        %v1297 = vadd.f32 0.0, %v1296
        %v1298 = vpop.f32.mrb[0].mxu0
        %1299 = vdwg.mxu0
        %v1300 = vadd.f32 %v1257, %v1294
        %v1301 = vadd.f32 %v1258, %v1297
        %1302 = vmatprep.subr.bf16.mxu0 0
        %1303 = vmatpush1.bf16.msra.mxu0 %v892
        %1304 = vmatprep.subr.bf16.mxu0 0
        %1305 = vmatpush1.bf16.msra.mxu0 0
        %1306 = vmatprep.subr.bf16.mxu0 0
        %1307 = vmatpush1.bf16.msra.mxu0 0
        %1308 = vmatprep.subr.bf16.mxu0 0
        %1309 = vmatpush1.bf16.msra.mxu0 0
        %1310 = vmatprep.subr.bf16.mxu0 0
        %1311 = vmatpush1.bf16.msra.mxu0 0
        %1312 = vmatprep.subr.bf16.mxu0 0
        %1313 = vmatpush1.bf16.msra.mxu0 0
        %1314 = vmatprep.subr.bf16.mxu0 0
        %1315 = vmatpush1.bf16.msra.mxu0 0
        %1316 = vmatprep.subr.bf16.mxu0 0
        %1317 = vmatpush1.bf16.msra.mxu0 0
        %1318 = vmatprep.subr.bf16.mxu0 0
        %1319 = vmatpush1.bf16.msra.mxu0 0
        %1320 = vmatprep.subr.bf16.mxu0 0
        %1321 = vmatpush1.bf16.msra.mxu0 0
        %1322 = vmatprep.subr.bf16.mxu0 0
        %1323 = vmatpush1.bf16.msra.mxu0 0
        %1324 = vmatprep.subr.bf16.mxu0 0
        %1325 = vmatpush1.bf16.msra.mxu0 0
        %1326 = vmatprep.subr.bf16.mxu0 0
        %1327 = vmatpush1.bf16.msra.mxu0 0
        %1328 = vmatprep.subr.bf16.mxu0 0
        %1329 = vmatpush1.bf16.msra.mxu0 0
        %1330 = vmatprep.subr.bf16.mxu0 0
        %1331 = vmatpush1.bf16.msra.mxu0 0
        %1332 = vmatprep.subr.bf16.mxu0 0
        %1333 = vmatpush1.bf16.msra.mxu0 0
        %1334 = vmatprep.mubr.bf16.mxu0 0
        %1335 = vmatmul.mubr.bf16.gmra.mrb[0].mxu0 %v945
        %v1336 = vpop.f32.mrb[0].mxu0
        %v1337 = vadd.f32 0.0, %v1336
        %v1338 = vpop.f32.mrb[0].mxu0
        %v1339 = vpop.f32.mrb[0].mxu0
        %v1340 = vadd.f32 0.0, %v1339
        %v1341 = vpop.f32.mrb[0].mxu0
        %1342 = vdwg.mxu0
        %v1343 = vadd.f32 %v1300, %v1337
        %v1344 = vadd.f32 %v1301, %v1340
        %1345 = vrot.lane.b32.xlu0 %v882, 127
        %v1346 = vpop.permute.xlu0 %1345
        %v1348 = vsel %vm494, %v1346, 0
        %1350 = vmatprep.subr.bf16.mxu0 0
        %1351 = vmatpush1.bf16.msra.mxu0 %v948
        %1352 = vmatprep.subr.bf16.mxu0 0
        %1353 = vmatpush1.bf16.msra.mxu0 0
        %1354 = vmatprep.subr.bf16.mxu0 0
        %1355 = vmatpush1.bf16.msra.mxu0 0
        %1356 = vmatprep.subr.bf16.mxu0 0
        %1357 = vmatpush1.bf16.msra.mxu0 0
        %1358 = vmatprep.subr.bf16.mxu0 0
        %1359 = vmatpush1.bf16.msra.mxu0 0
        %1360 = vmatprep.subr.bf16.mxu0 0
        %1361 = vmatpush1.bf16.msra.mxu0 0
        %1362 = vmatprep.subr.bf16.mxu0 0
        %1363 = vmatpush1.bf16.msra.mxu0 0
        %1364 = vmatprep.subr.bf16.mxu0 0
        %1365 = vmatpush1.bf16.msra.mxu0 0
        %1366 = vmatprep.subr.bf16.mxu0 0
        %1367 = vmatpush1.bf16.msra.mxu0 0
        %1368 = vmatprep.subr.bf16.mxu0 0
        %1369 = vmatpush1.bf16.msra.mxu0 0
        %1370 = vmatprep.subr.bf16.mxu0 0
        %1371 = vmatpush1.bf16.msra.mxu0 0
        %1372 = vmatprep.subr.bf16.mxu0 0
        %1373 = vmatpush1.bf16.msra.mxu0 0
        %1374 = vmatprep.subr.bf16.mxu0 0
        %1375 = vmatpush1.bf16.msra.mxu0 0
        %1376 = vmatprep.subr.bf16.mxu0 0
        %1377 = vmatpush1.bf16.msra.mxu0 0
        %1378 = vmatprep.subr.bf16.mxu0 0
        %1379 = vmatpush1.bf16.msra.mxu0 0
        %1380 = vmatprep.subr.bf16.mxu0 0
        %1381 = vmatpush1.bf16.msra.mxu0 0
        %1382 = vmatprep.mubr.bf16.mxu0 0
        %1383 = vmatmul.mubr.bf16.gmra.mrb[0].mxu0 %v1348
        %v1384 = vpop.f32.mrb[0].mxu0
        %v1385 = vadd.f32 0.0, %v1384
        %v1386 = vpop.f32.mrb[0].mxu0
        %v1387 = vpop.f32.mrb[0].mxu0
        %v1388 = vadd.f32 0.0, %v1387
        %v1389 = vpop.f32.mrb[0].mxu0
        %1390 = vdwg.mxu0
        %v1391 = vadd.f32 %v1343, %v1385
        %v1392 = vadd.f32 %v1344, %v1388
        %v1393 = vmax.f32 %v991, %v1391
        %v1394 = vmax.f32 %v992, %v1392
        %1395 = vmatprep.subr.bf16.mxu0 0
        %1396 = vmatpush1.bf16.msra.mxu0 %v500
        %1397 = vmatprep.subr.bf16.mxu0 0
        %1398 = vmatpush1.bf16.msra.mxu0 0
        %1399 = vmatprep.subr.bf16.mxu0 0
        %1400 = vmatpush1.bf16.msra.mxu0 0
        %1401 = vmatprep.subr.bf16.mxu0 0
        %1402 = vmatpush1.bf16.msra.mxu0 0
        %1403 = vmatprep.subr.bf16.mxu0 0
        %1404 = vmatpush1.bf16.msra.mxu0 0
        %1405 = vmatprep.subr.bf16.mxu0 0
        %1406 = vmatpush1.bf16.msra.mxu0 0
        %1407 = vmatprep.subr.bf16.mxu0 0
        %1408 = vmatpush1.bf16.msra.mxu0 0
        %1409 = vmatprep.subr.bf16.mxu0 0
        %1410 = vmatpush1.bf16.msra.mxu0 0
        %1411 = vmatprep.subr.bf16.mxu0 0
        %1412 = vmatpush1.bf16.msra.mxu0 0
        %1413 = vmatprep.subr.bf16.mxu0 0
        %1414 = vmatpush1.bf16.msra.mxu0 0
        %1415 = vmatprep.subr.bf16.mxu0 0
        %1416 = vmatpush1.bf16.msra.mxu0 0
        %1417 = vmatprep.subr.bf16.mxu0 0
        %1418 = vmatpush1.bf16.msra.mxu0 0
        %1419 = vmatprep.subr.bf16.mxu0 0
        %1420 = vmatpush1.bf16.msra.mxu0 0
        %1421 = vmatprep.subr.bf16.mxu0 0
        %1422 = vmatpush1.bf16.msra.mxu0 0
        %1423 = vmatprep.subr.bf16.mxu0 0
        %1424 = vmatpush1.bf16.msra.mxu0 0
        %1425 = vmatprep.subr.bf16.mxu0 0
        %1426 = vmatpush1.bf16.msra.mxu0 0
        %1427 = vmatprep.mubr.bf16.mxu0 0
        %1428 = vmatmul.mubr.bf16.gmra.mrb[0].mxu0 %v712
        %v1429 = vpop.f32.mrb[0].mxu0
        %v1430 = vadd.f32 0.0, %v1429
        %v1431 = vpop.f32.mrb[0].mxu0
        %v1432 = vpop.f32.mrb[0].mxu0
        %v1433 = vadd.f32 0.0, %v1432
        %v1434 = vpop.f32.mrb[0].mxu0
        %1435 = vdwg.mxu0
        %1436 = vmatprep.subr.bf16.mxu0 0
        %1437 = vmatpush1.bf16.msra.mxu0 %v552
        %1438 = vmatprep.subr.bf16.mxu0 0
        %1439 = vmatpush1.bf16.msra.mxu0 0
        %1440 = vmatprep.subr.bf16.mxu0 0
        %1441 = vmatpush1.bf16.msra.mxu0 0
        %1442 = vmatprep.subr.bf16.mxu0 0
        %1443 = vmatpush1.bf16.msra.mxu0 0
        %1444 = vmatprep.subr.bf16.mxu0 0
        %1445 = vmatpush1.bf16.msra.mxu0 0
        %1446 = vmatprep.subr.bf16.mxu0 0
        %1447 = vmatpush1.bf16.msra.mxu0 0
        %1448 = vmatprep.subr.bf16.mxu0 0
        %1449 = vmatpush1.bf16.msra.mxu0 0
        %1450 = vmatprep.subr.bf16.mxu0 0
        %1451 = vmatpush1.bf16.msra.mxu0 0
        %1452 = vmatprep.subr.bf16.mxu0 0
        %1453 = vmatpush1.bf16.msra.mxu0 0
        %1454 = vmatprep.subr.bf16.mxu0 0
        %1455 = vmatpush1.bf16.msra.mxu0 0
        %1456 = vmatprep.subr.bf16.mxu0 0
        %1457 = vmatpush1.bf16.msra.mxu0 0
        %1458 = vmatprep.subr.bf16.mxu0 0
        %1459 = vmatpush1.bf16.msra.mxu0 0
        %1460 = vmatprep.subr.bf16.mxu0 0
        %1461 = vmatpush1.bf16.msra.mxu0 0
        %1462 = vmatprep.subr.bf16.mxu0 0
        %1463 = vmatpush1.bf16.msra.mxu0 0
        %1464 = vmatprep.subr.bf16.mxu0 0
        %1465 = vmatpush1.bf16.msra.mxu0 0
        %1466 = vmatprep.subr.bf16.mxu0 0
        %1467 = vmatpush1.bf16.msra.mxu0 0
        %1468 = vmatprep.mubr.bf16.mxu0 0
        %1469 = vmatmul.mubr.bf16.gmra.mrb[0].mxu0 %v658
        %v1470 = vpop.f32.mrb[0].mxu0
        %v1471 = vadd.f32 %v1430, %v1470
        %v1472 = vpop.f32.mrb[0].mxu0
        %v1473 = vpop.f32.mrb[0].mxu0
        %v1474 = vadd.f32 %v1433, %v1473
        %v1475 = vpop.f32.mrb[0].mxu0
        %1476 = vdwg.mxu0
        %1477 = vmatprep.subr.bf16.mxu0 0
        %1478 = vmatpush1.bf16.msra.mxu0 %v607
        %1479 = vmatprep.subr.bf16.mxu0 0
        %1480 = vmatpush1.bf16.msra.mxu0 0
        %1481 = vmatprep.subr.bf16.mxu0 0
        %1482 = vmatpush1.bf16.msra.mxu0 0
        %1483 = vmatprep.subr.bf16.mxu0 0
        %1484 = vmatpush1.bf16.msra.mxu0 0
        %1485 = vmatprep.subr.bf16.mxu0 0
        %1486 = vmatpush1.bf16.msra.mxu0 0
        %1487 = vmatprep.subr.bf16.mxu0 0
        %1488 = vmatpush1.bf16.msra.mxu0 0
        %1489 = vmatprep.subr.bf16.mxu0 0
        %1490 = vmatpush1.bf16.msra.mxu0 0
        %1491 = vmatprep.subr.bf16.mxu0 0
        %1492 = vmatpush1.bf16.msra.mxu0 0
        %1493 = vmatprep.subr.bf16.mxu0 0
        %1494 = vmatpush1.bf16.msra.mxu0 0
        %1495 = vmatprep.subr.bf16.mxu0 0
        %1496 = vmatpush1.bf16.msra.mxu0 0
        %1497 = vmatprep.subr.bf16.mxu0 0
        %1498 = vmatpush1.bf16.msra.mxu0 0
        %1499 = vmatprep.subr.bf16.mxu0 0
        %1500 = vmatpush1.bf16.msra.mxu0 0
        %1501 = vmatprep.subr.bf16.mxu0 0
        %1502 = vmatpush1.bf16.msra.mxu0 0
        %1503 = vmatprep.subr.bf16.mxu0 0
        %1504 = vmatpush1.bf16.msra.mxu0 0
        %1505 = vmatprep.subr.bf16.mxu0 0
        %1506 = vmatpush1.bf16.msra.mxu0 0
        %1507 = vmatprep.subr.bf16.mxu0 0
        %1508 = vmatpush1.bf16.msra.mxu0 0
        %1509 = vmatprep.mubr.bf16.mxu0 0
        %1510 = vmatmul.mubr.bf16.gmra.mrb[0].mxu0 %v769
        %v1511 = vpop.f32.mrb[0].mxu0
        %v1512 = vadd.f32 0.0, %v1511
        %v1513 = vpop.f32.mrb[0].mxu0
        %v1514 = vpop.f32.mrb[0].mxu0
        %v1515 = vadd.f32 0.0, %v1514
        %v1516 = vpop.f32.mrb[0].mxu0
        %1517 = vdwg.mxu0
        %v1518 = vadd.f32 %v1471, %v1512
        %v1519 = vadd.f32 %v1474, %v1515
        %1520 = vmatprep.subr.bf16.mxu0 0
        %1521 = vmatpush1.bf16.msra.mxu0 %v661
        %1522 = vmatprep.subr.bf16.mxu0 0
        %1523 = vmatpush1.bf16.msra.mxu0 0
        %1524 = vmatprep.subr.bf16.mxu0 0
        %1525 = vmatpush1.bf16.msra.mxu0 0
        %1526 = vmatprep.subr.bf16.mxu0 0
        %1527 = vmatpush1.bf16.msra.mxu0 0
        %1528 = vmatprep.subr.bf16.mxu0 0
        %1529 = vmatpush1.bf16.msra.mxu0 0
        %1530 = vmatprep.subr.bf16.mxu0 0
        %1531 = vmatpush1.bf16.msra.mxu0 0
        %1532 = vmatprep.subr.bf16.mxu0 0
        %1533 = vmatpush1.bf16.msra.mxu0 0
        %1534 = vmatprep.subr.bf16.mxu0 0
        %1535 = vmatpush1.bf16.msra.mxu0 0
        %1536 = vmatprep.subr.bf16.mxu0 0
        %1537 = vmatpush1.bf16.msra.mxu0 0
        %1538 = vmatprep.subr.bf16.mxu0 0
        %1539 = vmatpush1.bf16.msra.mxu0 0
        %1540 = vmatprep.subr.bf16.mxu0 0
        %1541 = vmatpush1.bf16.msra.mxu0 0
        %1542 = vmatprep.subr.bf16.mxu0 0
        %1543 = vmatpush1.bf16.msra.mxu0 0
        %1544 = vmatprep.subr.bf16.mxu0 0
        %1545 = vmatpush1.bf16.msra.mxu0 0
        %1546 = vmatprep.subr.bf16.mxu0 0
        %1547 = vmatpush1.bf16.msra.mxu0 0
        %1548 = vmatprep.subr.bf16.mxu0 0
        %1549 = vmatpush1.bf16.msra.mxu0 0
        %1550 = vmatprep.subr.bf16.mxu0 0
        %1551 = vmatpush1.bf16.msra.mxu0 0
        %1552 = vmatprep.mubr.bf16.mxu0 0
        %1553 = vmatmul.mubr.bf16.gmra.mrb[0].mxu0 %v829
        %v1554 = vpop.f32.mrb[0].mxu0
        %v1555 = vadd.f32 0.0, %v1554
        %v1556 = vpop.f32.mrb[0].mxu0
        %v1557 = vpop.f32.mrb[0].mxu0
        %v1558 = vadd.f32 0.0, %v1557
        %v1559 = vpop.f32.mrb[0].mxu0
        %1560 = vdwg.mxu0
        %v1561 = vadd.f32 %v1518, %v1555
        %v1562 = vadd.f32 %v1519, %v1558
        %1563 = vmatprep.subr.bf16.mxu0 0
        %1564 = vmatpush1.bf16.msra.mxu0 %v715
        %1565 = vmatprep.subr.bf16.mxu0 0
        %1566 = vmatpush1.bf16.msra.mxu0 0
        %1567 = vmatprep.subr.bf16.mxu0 0
        %1568 = vmatpush1.bf16.msra.mxu0 0
        %1569 = vmatprep.subr.bf16.mxu0 0
        %1570 = vmatpush1.bf16.msra.mxu0 0
        %1571 = vmatprep.subr.bf16.mxu0 0
        %1572 = vmatpush1.bf16.msra.mxu0 0
        %1573 = vmatprep.subr.bf16.mxu0 0
        %1574 = vmatpush1.bf16.msra.mxu0 0
        %1575 = vmatprep.subr.bf16.mxu0 0
        %1576 = vmatpush1.bf16.msra.mxu0 0
        %1577 = vmatprep.subr.bf16.mxu0 0
        %1578 = vmatpush1.bf16.msra.mxu0 0
        %1579 = vmatprep.subr.bf16.mxu0 0
        %1580 = vmatpush1.bf16.msra.mxu0 0
        %1581 = vmatprep.subr.bf16.mxu0 0
        %1582 = vmatpush1.bf16.msra.mxu0 0
        %1583 = vmatprep.subr.bf16.mxu0 0
        %1584 = vmatpush1.bf16.msra.mxu0 0
        %1585 = vmatprep.subr.bf16.mxu0 0
        %1586 = vmatpush1.bf16.msra.mxu0 0
        %1587 = vmatprep.subr.bf16.mxu0 0
        %1588 = vmatpush1.bf16.msra.mxu0 0
        %1589 = vmatprep.subr.bf16.mxu0 0
        %1590 = vmatpush1.bf16.msra.mxu0 0
        %1591 = vmatprep.subr.bf16.mxu0 0
        %1592 = vmatpush1.bf16.msra.mxu0 0
        %1593 = vmatprep.subr.bf16.mxu0 0
        %1594 = vmatpush1.bf16.msra.mxu0 0
        %1595 = vmatprep.mubr.bf16.mxu0 0
        %1596 = vmatmul.mubr.bf16.gmra.mrb[0].mxu0 %v889
        %v1597 = vpop.f32.mrb[0].mxu0
        %v1598 = vadd.f32 0.0, %v1597
        %v1599 = vpop.f32.mrb[0].mxu0
        %v1600 = vpop.f32.mrb[0].mxu0
        %v1601 = vadd.f32 0.0, %v1600
        %v1602 = vpop.f32.mrb[0].mxu0
        %1603 = vdwg.mxu0
        %v1604 = vadd.f32 %v1561, %v1598
        %v1605 = vadd.f32 %v1562, %v1601
        %1606 = vmatprep.subr.bf16.mxu0 0
        %1607 = vmatpush1.bf16.msra.mxu0 %v772
        %1608 = vmatprep.subr.bf16.mxu0 0
        %1609 = vmatpush1.bf16.msra.mxu0 0
        %1610 = vmatprep.subr.bf16.mxu0 0
        %1611 = vmatpush1.bf16.msra.mxu0 0
        %1612 = vmatprep.subr.bf16.mxu0 0
        %1613 = vmatpush1.bf16.msra.mxu0 0
        %1614 = vmatprep.subr.bf16.mxu0 0
        %1615 = vmatpush1.bf16.msra.mxu0 0
        %1616 = vmatprep.subr.bf16.mxu0 0
        %1617 = vmatpush1.bf16.msra.mxu0 0
        %1618 = vmatprep.subr.bf16.mxu0 0
        %1619 = vmatpush1.bf16.msra.mxu0 0
        %1620 = vmatprep.subr.bf16.mxu0 0
        %1621 = vmatpush1.bf16.msra.mxu0 0
        %1622 = vmatprep.subr.bf16.mxu0 0
        %1623 = vmatpush1.bf16.msra.mxu0 0
        %1624 = vmatprep.subr.bf16.mxu0 0
        %1625 = vmatpush1.bf16.msra.mxu0 0
        %1626 = vmatprep.subr.bf16.mxu0 0
        %1627 = vmatpush1.bf16.msra.mxu0 0
        %1628 = vmatprep.subr.bf16.mxu0 0
        %1629 = vmatpush1.bf16.msra.mxu0 0
        %1630 = vmatprep.subr.bf16.mxu0 0
        %1631 = vmatpush1.bf16.msra.mxu0 0
        %1632 = vmatprep.subr.bf16.mxu0 0
        %1633 = vmatpush1.bf16.msra.mxu0 0
        %1634 = vmatprep.subr.bf16.mxu0 0
        %1635 = vmatpush1.bf16.msra.mxu0 0
        %1636 = vmatprep.subr.bf16.mxu0 0
        %1637 = vmatpush1.bf16.msra.mxu0 0
        %1638 = vmatprep.mubr.bf16.mxu0 0
        %1639 = vmatmul.mubr.bf16.gmra.mrb[0].mxu0 %v945
        %v1640 = vpop.f32.mrb[0].mxu0
        %v1641 = vadd.f32 0.0, %v1640
        %v1642 = vpop.f32.mrb[0].mxu0
        %v1643 = vpop.f32.mrb[0].mxu0
        %v1644 = vadd.f32 0.0, %v1643
        %v1645 = vpop.f32.mrb[0].mxu0
        %1646 = vdwg.mxu0
        %v1647 = vadd.f32 %v1604, %v1641
        %v1648 = vadd.f32 %v1605, %v1644
        %v1649 = vshrl.u32 %v458, 16
        %v1651 = vshll.u32 %v458, 16
        %v1653 = vrot.slane %v1651, 1
        %v1654 = vor.u32 %v1649, %v1653
        %v1656 = vsel %vm494, %v1654, 0
        %1658 = vmatprep.subr.bf16.mxu0 0
        %1659 = vmatpush1.bf16.msra.mxu0 %v832
        %1660 = vmatprep.subr.bf16.mxu0 0
        %1661 = vmatpush1.bf16.msra.mxu0 0
        %1662 = vmatprep.subr.bf16.mxu0 0
        %1663 = vmatpush1.bf16.msra.mxu0 0
        %1664 = vmatprep.subr.bf16.mxu0 0
        %1665 = vmatpush1.bf16.msra.mxu0 0
        %1666 = vmatprep.subr.bf16.mxu0 0
        %1667 = vmatpush1.bf16.msra.mxu0 0
        %1668 = vmatprep.subr.bf16.mxu0 0
        %1669 = vmatpush1.bf16.msra.mxu0 0
        %1670 = vmatprep.subr.bf16.mxu0 0
        %1671 = vmatpush1.bf16.msra.mxu0 0
        %1672 = vmatprep.subr.bf16.mxu0 0
        %1673 = vmatpush1.bf16.msra.mxu0 0
        %1674 = vmatprep.subr.bf16.mxu0 0
        %1675 = vmatpush1.bf16.msra.mxu0 0
        %1676 = vmatprep.subr.bf16.mxu0 0
        %1677 = vmatpush1.bf16.msra.mxu0 0
        %1678 = vmatprep.subr.bf16.mxu0 0
        %1679 = vmatpush1.bf16.msra.mxu0 0
        %1680 = vmatprep.subr.bf16.mxu0 0
        %1681 = vmatpush1.bf16.msra.mxu0 0
        %1682 = vmatprep.subr.bf16.mxu0 0
        %1683 = vmatpush1.bf16.msra.mxu0 0
        %1684 = vmatprep.subr.bf16.mxu0 0
        %1685 = vmatpush1.bf16.msra.mxu0 0
        %1686 = vmatprep.subr.bf16.mxu0 0
        %1687 = vmatpush1.bf16.msra.mxu0 0
        %1688 = vmatprep.subr.bf16.mxu0 0
        %1689 = vmatpush1.bf16.msra.mxu0 0
        %1690 = vmatprep.mubr.bf16.mxu0 0
        %1691 = vmatmul.mubr.bf16.gmra.mrb[0].mxu0 %v1656
        %v1692 = vpop.f32.mrb[0].mxu0
        %v1693 = vadd.f32 0.0, %v1692
        %v1694 = vpop.f32.mrb[0].mxu0
        %v1695 = vpop.f32.mrb[0].mxu0
        %v1696 = vadd.f32 0.0, %v1695
        %v1697 = vpop.f32.mrb[0].mxu0
        %1698 = vdwg.mxu0
        %v1699 = vadd.f32 %v1647, %v1693
        %v1700 = vadd.f32 %v1648, %v1696
        %v1701 = vshrl.u32 %v462, 16
        %v1703 = vshll.u32 %v462, 16
        %v1705 = vrot.slane %v1703, 1
        %v1706 = vor.u32 %v1701, %v1705
        %v1708 = vsel %vm494, %v1706, 0
        %1710 = vmatprep.subr.bf16.mxu0 0
        %1711 = vmatpush1.bf16.msra.mxu0 %v892
        %1712 = vmatprep.subr.bf16.mxu0 0
        %1713 = vmatpush1.bf16.msra.mxu0 0
        %1714 = vmatprep.subr.bf16.mxu0 0
        %1715 = vmatpush1.bf16.msra.mxu0 0
        %1716 = vmatprep.subr.bf16.mxu0 0
        %1717 = vmatpush1.bf16.msra.mxu0 0
        %1718 = vmatprep.subr.bf16.mxu0 0
        %1719 = vmatpush1.bf16.msra.mxu0 0
        %1720 = vmatprep.subr.bf16.mxu0 0
        %1721 = vmatpush1.bf16.msra.mxu0 0
        %1722 = vmatprep.subr.bf16.mxu0 0
        %1723 = vmatpush1.bf16.msra.mxu0 0
        %1724 = vmatprep.subr.bf16.mxu0 0
        %1725 = vmatpush1.bf16.msra.mxu0 0
        %1726 = vmatprep.subr.bf16.mxu0 0
        %1727 = vmatpush1.bf16.msra.mxu0 0
        %1728 = vmatprep.subr.bf16.mxu0 0
        %1729 = vmatpush1.bf16.msra.mxu0 0
        %1730 = vmatprep.subr.bf16.mxu0 0
        %1731 = vmatpush1.bf16.msra.mxu0 0
        %1732 = vmatprep.subr.bf16.mxu0 0
        %1733 = vmatpush1.bf16.msra.mxu0 0
        %1734 = vmatprep.subr.bf16.mxu0 0
        %1735 = vmatpush1.bf16.msra.mxu0 0
        %1736 = vmatprep.subr.bf16.mxu0 0
        %1737 = vmatpush1.bf16.msra.mxu0 0
        %1738 = vmatprep.subr.bf16.mxu0 0
        %1739 = vmatpush1.bf16.msra.mxu0 0
        %1740 = vmatprep.subr.bf16.mxu0 0
        %1741 = vmatpush1.bf16.msra.mxu0 0
        %1742 = vmatprep.mubr.bf16.mxu0 0
        %1743 = vmatmul.mubr.bf16.gmra.mrb[0].mxu0 %v1708
        %v1744 = vpop.f32.mrb[0].mxu0
        %v1745 = vadd.f32 0.0, %v1744
        %v1746 = vpop.f32.mrb[0].mxu0
        %v1747 = vpop.f32.mrb[0].mxu0
        %v1748 = vadd.f32 0.0, %v1747
        %v1749 = vpop.f32.mrb[0].mxu0
        %1750 = vdwg.mxu0
        %v1751 = vadd.f32 %v1699, %v1745
        %v1752 = vadd.f32 %v1700, %v1748
        %1753 = vrot.lane.b32.xlu0 %v1654, 127
        %v1754 = vpop.permute.xlu0 %1753
        %v1756 = vsel %vm494, %v1754, 0
        %1758 = vmatprep.subr.bf16.mxu0 0
        %1759 = vmatpush1.bf16.msra.mxu0 %v948
        %1760 = vmatprep.subr.bf16.mxu0 0
        %1761 = vmatpush1.bf16.msra.mxu0 0
        %1762 = vmatprep.subr.bf16.mxu0 0
        %1763 = vmatpush1.bf16.msra.mxu0 0
        %1764 = vmatprep.subr.bf16.mxu0 0
        %1765 = vmatpush1.bf16.msra.mxu0 0
        %1766 = vmatprep.subr.bf16.mxu0 0
        %1767 = vmatpush1.bf16.msra.mxu0 0
        %1768 = vmatprep.subr.bf16.mxu0 0
        %1769 = vmatpush1.bf16.msra.mxu0 0
        %1770 = vmatprep.subr.bf16.mxu0 0
        %1771 = vmatpush1.bf16.msra.mxu0 0
        %1772 = vmatprep.subr.bf16.mxu0 0
        %1773 = vmatpush1.bf16.msra.mxu0 0
        %1774 = vmatprep.subr.bf16.mxu0 0
        %1775 = vmatpush1.bf16.msra.mxu0 0
        %1776 = vmatprep.subr.bf16.mxu0 0
        %1777 = vmatpush1.bf16.msra.mxu0 0
        %1778 = vmatprep.subr.bf16.mxu0 0
        %1779 = vmatpush1.bf16.msra.mxu0 0
        %1780 = vmatprep.subr.bf16.mxu0 0
        %1781 = vmatpush1.bf16.msra.mxu0 0
        %1782 = vmatprep.subr.bf16.mxu0 0
        %1783 = vmatpush1.bf16.msra.mxu0 0
        %1784 = vmatprep.subr.bf16.mxu0 0
        %1785 = vmatpush1.bf16.msra.mxu0 0
        %1786 = vmatprep.subr.bf16.mxu0 0
        %1787 = vmatpush1.bf16.msra.mxu0 0
        %1788 = vmatprep.subr.bf16.mxu0 0
        %1789 = vmatpush1.bf16.msra.mxu0 0
        %1790 = vmatprep.mubr.bf16.mxu0 0
        %1791 = vmatmul.mubr.bf16.gmra.mrb[0].mxu0 %v1756
        %v1792 = vpop.f32.mrb[0].mxu0
        %v1793 = vadd.f32 0.0, %v1792
        %v1794 = vpop.f32.mrb[0].mxu0
        %v1795 = vpop.f32.mrb[0].mxu0
        %v1796 = vadd.f32 0.0, %v1795
        %v1797 = vpop.f32.mrb[0].mxu0
        %1798 = vdwg.mxu0
        %v1799 = vadd.f32 %v1751, %v1793
        %v1800 = vadd.f32 %v1752, %v1796
        %v1801 = vmax.f32 %v1393, %v1799
        %v1802 = vmax.f32 %v1394, %v1800
        %1803 = vmatprep.subr.bf16.mxu0 0
        %1804 = vmatpush1.bf16.msra.mxu0 %v500
        %1805 = vmatprep.subr.bf16.mxu0 0
        %1806 = vmatpush1.bf16.msra.mxu0 0
        %1807 = vmatprep.subr.bf16.mxu0 0
        %1808 = vmatpush1.bf16.msra.mxu0 0
        %1809 = vmatprep.subr.bf16.mxu0 0
        %1810 = vmatpush1.bf16.msra.mxu0 0
        %1811 = vmatprep.subr.bf16.mxu0 0
        %1812 = vmatpush1.bf16.msra.mxu0 0
        %1813 = vmatprep.subr.bf16.mxu0 0
        %1814 = vmatpush1.bf16.msra.mxu0 0
        %1815 = vmatprep.subr.bf16.mxu0 0
        %1816 = vmatpush1.bf16.msra.mxu0 0
        %1817 = vmatprep.subr.bf16.mxu0 0
        %1818 = vmatpush1.bf16.msra.mxu0 0
        %1819 = vmatprep.subr.bf16.mxu0 0
        %1820 = vmatpush1.bf16.msra.mxu0 0
        %1821 = vmatprep.subr.bf16.mxu0 0
        %1822 = vmatpush1.bf16.msra.mxu0 0
        %1823 = vmatprep.subr.bf16.mxu0 0
        %1824 = vmatpush1.bf16.msra.mxu0 0
        %1825 = vmatprep.subr.bf16.mxu0 0
        %1826 = vmatpush1.bf16.msra.mxu0 0
        %1827 = vmatprep.subr.bf16.mxu0 0
        %1828 = vmatpush1.bf16.msra.mxu0 0
        %1829 = vmatprep.subr.bf16.mxu0 0
        %1830 = vmatpush1.bf16.msra.mxu0 0
        %1831 = vmatprep.subr.bf16.mxu0 0
        %1832 = vmatpush1.bf16.msra.mxu0 0
        %1833 = vmatprep.subr.bf16.mxu0 0
        %1834 = vmatpush1.bf16.msra.mxu0 0
        %1835 = vmatprep.mubr.bf16.mxu0 0
        %1836 = vmatmul.mubr.bf16.gmra.mrb[0].mxu0 %v769
        %v1837 = vpop.f32.mrb[0].mxu0
        %v1838 = vadd.f32 0.0, %v1837
        %v1839 = vpop.f32.mrb[0].mxu0
        %v1840 = vpop.f32.mrb[0].mxu0
        %v1841 = vadd.f32 0.0, %v1840
        %v1842 = vpop.f32.mrb[0].mxu0
        %1843 = vdwg.mxu0
        %1844 = vmatprep.subr.bf16.mxu0 0
        %1845 = vmatpush1.bf16.msra.mxu0 %v552
        %1846 = vmatprep.subr.bf16.mxu0 0
        %1847 = vmatpush1.bf16.msra.mxu0 0
        %1848 = vmatprep.subr.bf16.mxu0 0
        %1849 = vmatpush1.bf16.msra.mxu0 0
        %1850 = vmatprep.subr.bf16.mxu0 0
        %1851 = vmatpush1.bf16.msra.mxu0 0
        %1852 = vmatprep.subr.bf16.mxu0 0
        %1853 = vmatpush1.bf16.msra.mxu0 0
        %1854 = vmatprep.subr.bf16.mxu0 0
        %1855 = vmatpush1.bf16.msra.mxu0 0
        %1856 = vmatprep.subr.bf16.mxu0 0
        %1857 = vmatpush1.bf16.msra.mxu0 0
        %1858 = vmatprep.subr.bf16.mxu0 0
        %1859 = vmatpush1.bf16.msra.mxu0 0
        %1860 = vmatprep.subr.bf16.mxu0 0
        %1861 = vmatpush1.bf16.msra.mxu0 0
        %1862 = vmatprep.subr.bf16.mxu0 0
        %1863 = vmatpush1.bf16.msra.mxu0 0
        %1864 = vmatprep.subr.bf16.mxu0 0
        %1865 = vmatpush1.bf16.msra.mxu0 0
        %1866 = vmatprep.subr.bf16.mxu0 0
        %1867 = vmatpush1.bf16.msra.mxu0 0
        %1868 = vmatprep.subr.bf16.mxu0 0
        %1869 = vmatpush1.bf16.msra.mxu0 0
        %1870 = vmatprep.subr.bf16.mxu0 0
        %1871 = vmatpush1.bf16.msra.mxu0 0
        %1872 = vmatprep.subr.bf16.mxu0 0
        %1873 = vmatpush1.bf16.msra.mxu0 0
        %1874 = vmatprep.subr.bf16.mxu0 0
        %1875 = vmatpush1.bf16.msra.mxu0 0
        %1876 = vmatprep.mubr.bf16.mxu0 0
        %1877 = vmatmul.mubr.bf16.gmra.mrb[0].mxu0 %v712
        %v1878 = vpop.f32.mrb[0].mxu0
        %v1879 = vadd.f32 %v1838, %v1878
        %v1880 = vpop.f32.mrb[0].mxu0
        %v1881 = vpop.f32.mrb[0].mxu0
        %v1882 = vadd.f32 %v1841, %v1881
        %v1883 = vpop.f32.mrb[0].mxu0
        %1884 = vdwg.mxu0
        %1885 = vmatprep.subr.bf16.mxu0 0
        %1886 = vmatpush1.bf16.msra.mxu0 %v607
        %1887 = vmatprep.subr.bf16.mxu0 0
        %1888 = vmatpush1.bf16.msra.mxu0 0
        %1889 = vmatprep.subr.bf16.mxu0 0
        %1890 = vmatpush1.bf16.msra.mxu0 0
        %1891 = vmatprep.subr.bf16.mxu0 0
        %1892 = vmatpush1.bf16.msra.mxu0 0
        %1893 = vmatprep.subr.bf16.mxu0 0
        %1894 = vmatpush1.bf16.msra.mxu0 0
        %1895 = vmatprep.subr.bf16.mxu0 0
        %1896 = vmatpush1.bf16.msra.mxu0 0
        %1897 = vmatprep.subr.bf16.mxu0 0
        %1898 = vmatpush1.bf16.msra.mxu0 0
        %1899 = vmatprep.subr.bf16.mxu0 0
        %1900 = vmatpush1.bf16.msra.mxu0 0
        %1901 = vmatprep.subr.bf16.mxu0 0
        %1902 = vmatpush1.bf16.msra.mxu0 0
        %1903 = vmatprep.subr.bf16.mxu0 0
        %1904 = vmatpush1.bf16.msra.mxu0 0
        %1905 = vmatprep.subr.bf16.mxu0 0
        %1906 = vmatpush1.bf16.msra.mxu0 0
        %1907 = vmatprep.subr.bf16.mxu0 0
        %1908 = vmatpush1.bf16.msra.mxu0 0
        %1909 = vmatprep.subr.bf16.mxu0 0
        %1910 = vmatpush1.bf16.msra.mxu0 0
        %1911 = vmatprep.subr.bf16.mxu0 0
        %1912 = vmatpush1.bf16.msra.mxu0 0
        %1913 = vmatprep.subr.bf16.mxu0 0
        %1914 = vmatpush1.bf16.msra.mxu0 0
        %1915 = vmatprep.subr.bf16.mxu0 0
        %1916 = vmatpush1.bf16.msra.mxu0 0
        %1917 = vmatprep.mubr.bf16.mxu0 0
        %1918 = vmatmul.mubr.bf16.gmra.mrb[0].mxu0 %v1214
        %v1919 = vpop.f32.mrb[0].mxu0
        %v1920 = vadd.f32 0.0, %v1919
        %v1921 = vpop.f32.mrb[0].mxu0
        %v1922 = vpop.f32.mrb[0].mxu0
        %v1923 = vadd.f32 0.0, %v1922
        %v1924 = vpop.f32.mrb[0].mxu0
        %1925 = vdwg.mxu0
        %v1926 = vadd.f32 %v1879, %v1920
        %v1927 = vadd.f32 %v1882, %v1923
        %1928 = vmatprep.subr.bf16.mxu0 0
        %1929 = vmatpush1.bf16.msra.mxu0 %v661
        %1930 = vmatprep.subr.bf16.mxu0 0
        %1931 = vmatpush1.bf16.msra.mxu0 0
        %1932 = vmatprep.subr.bf16.mxu0 0
        %1933 = vmatpush1.bf16.msra.mxu0 0
        %1934 = vmatprep.subr.bf16.mxu0 0
        %1935 = vmatpush1.bf16.msra.mxu0 0
        %1936 = vmatprep.subr.bf16.mxu0 0
        %1937 = vmatpush1.bf16.msra.mxu0 0
        %1938 = vmatprep.subr.bf16.mxu0 0
        %1939 = vmatpush1.bf16.msra.mxu0 0
        %1940 = vmatprep.subr.bf16.mxu0 0
        %1941 = vmatpush1.bf16.msra.mxu0 0
        %1942 = vmatprep.subr.bf16.mxu0 0
        %1943 = vmatpush1.bf16.msra.mxu0 0
        %1944 = vmatprep.subr.bf16.mxu0 0
        %1945 = vmatpush1.bf16.msra.mxu0 0
        %1946 = vmatprep.subr.bf16.mxu0 0
        %1947 = vmatpush1.bf16.msra.mxu0 0
        %1948 = vmatprep.subr.bf16.mxu0 0
        %1949 = vmatpush1.bf16.msra.mxu0 0
        %1950 = vmatprep.subr.bf16.mxu0 0
        %1951 = vmatpush1.bf16.msra.mxu0 0
        %1952 = vmatprep.subr.bf16.mxu0 0
        %1953 = vmatpush1.bf16.msra.mxu0 0
        %1954 = vmatprep.subr.bf16.mxu0 0
        %1955 = vmatpush1.bf16.msra.mxu0 0
        %1956 = vmatprep.subr.bf16.mxu0 0
        %1957 = vmatpush1.bf16.msra.mxu0 0
        %1958 = vmatprep.subr.bf16.mxu0 0
        %1959 = vmatpush1.bf16.msra.mxu0 0
        %1960 = vmatprep.mubr.bf16.mxu0 0
        %1961 = vmatmul.mubr.bf16.gmra.mrb[0].mxu0 %v889
        %v1962 = vpop.f32.mrb[0].mxu0
        %v1963 = vadd.f32 0.0, %v1962
        %v1964 = vpop.f32.mrb[0].mxu0
        %v1965 = vpop.f32.mrb[0].mxu0
        %v1966 = vadd.f32 0.0, %v1965
        %v1967 = vpop.f32.mrb[0].mxu0
        %1968 = vdwg.mxu0
        %v1969 = vadd.f32 %v1926, %v1963
        %v1970 = vadd.f32 %v1927, %v1966
        %1971 = vmatprep.subr.bf16.mxu0 0
        %1972 = vmatpush1.bf16.msra.mxu0 %v715
        %1973 = vmatprep.subr.bf16.mxu0 0
        %1974 = vmatpush1.bf16.msra.mxu0 0
        %1975 = vmatprep.subr.bf16.mxu0 0
        %1976 = vmatpush1.bf16.msra.mxu0 0
        %1977 = vmatprep.subr.bf16.mxu0 0
        %1978 = vmatpush1.bf16.msra.mxu0 0
        %1979 = vmatprep.subr.bf16.mxu0 0
        %1980 = vmatpush1.bf16.msra.mxu0 0
        %1981 = vmatprep.subr.bf16.mxu0 0
        %1982 = vmatpush1.bf16.msra.mxu0 0
        %1983 = vmatprep.subr.bf16.mxu0 0
        %1984 = vmatpush1.bf16.msra.mxu0 0
        %1985 = vmatprep.subr.bf16.mxu0 0
        %1986 = vmatpush1.bf16.msra.mxu0 0
        %1987 = vmatprep.subr.bf16.mxu0 0
        %1988 = vmatpush1.bf16.msra.mxu0 0
        %1989 = vmatprep.subr.bf16.mxu0 0
        %1990 = vmatpush1.bf16.msra.mxu0 0
        %1991 = vmatprep.subr.bf16.mxu0 0
        %1992 = vmatpush1.bf16.msra.mxu0 0
        %1993 = vmatprep.subr.bf16.mxu0 0
        %1994 = vmatpush1.bf16.msra.mxu0 0
        %1995 = vmatprep.subr.bf16.mxu0 0
        %1996 = vmatpush1.bf16.msra.mxu0 0
        %1997 = vmatprep.subr.bf16.mxu0 0
        %1998 = vmatpush1.bf16.msra.mxu0 0
        %1999 = vmatprep.subr.bf16.mxu0 0
        %2000 = vmatpush1.bf16.msra.mxu0 0
        %2001 = vmatprep.subr.bf16.mxu0 0
        %2002 = vmatpush1.bf16.msra.mxu0 0
        %2003 = vmatprep.mubr.bf16.mxu0 0
        %2004 = vmatmul.mubr.bf16.gmra.mrb[0].mxu0 %v945
        %v2005 = vpop.f32.mrb[0].mxu0
        %v2006 = vadd.f32 0.0, %v2005
        %v2007 = vpop.f32.mrb[0].mxu0
        %v2008 = vpop.f32.mrb[0].mxu0
        %v2009 = vadd.f32 0.0, %v2008
        %v2010 = vpop.f32.mrb[0].mxu0
        %2011 = vdwg.mxu0
        %v2012 = vadd.f32 %v1969, %v2006
        %v2013 = vadd.f32 %v1970, %v2009
        %2014 = vmatprep.subr.bf16.mxu0 0
        %2015 = vmatpush1.bf16.msra.mxu0 %v772
        %2016 = vmatprep.subr.bf16.mxu0 0
        %2017 = vmatpush1.bf16.msra.mxu0 0
        %2018 = vmatprep.subr.bf16.mxu0 0
        %2019 = vmatpush1.bf16.msra.mxu0 0
        %2020 = vmatprep.subr.bf16.mxu0 0
        %2021 = vmatpush1.bf16.msra.mxu0 0
        %2022 = vmatprep.subr.bf16.mxu0 0
        %2023 = vmatpush1.bf16.msra.mxu0 0
        %2024 = vmatprep.subr.bf16.mxu0 0
        %2025 = vmatpush1.bf16.msra.mxu0 0
        %2026 = vmatprep.subr.bf16.mxu0 0
        %2027 = vmatpush1.bf16.msra.mxu0 0
        %2028 = vmatprep.subr.bf16.mxu0 0
        %2029 = vmatpush1.bf16.msra.mxu0 0
        %2030 = vmatprep.subr.bf16.mxu0 0
        %2031 = vmatpush1.bf16.msra.mxu0 0
        %2032 = vmatprep.subr.bf16.mxu0 0
        %2033 = vmatpush1.bf16.msra.mxu0 0
        %2034 = vmatprep.subr.bf16.mxu0 0
        %2035 = vmatpush1.bf16.msra.mxu0 0
        %2036 = vmatprep.subr.bf16.mxu0 0
        %2037 = vmatpush1.bf16.msra.mxu0 0
        %2038 = vmatprep.subr.bf16.mxu0 0
        %2039 = vmatpush1.bf16.msra.mxu0 0
        %2040 = vmatprep.subr.bf16.mxu0 0
        %2041 = vmatpush1.bf16.msra.mxu0 0
        %2042 = vmatprep.subr.bf16.mxu0 0
        %2043 = vmatpush1.bf16.msra.mxu0 0
        %2044 = vmatprep.subr.bf16.mxu0 0
        %2045 = vmatpush1.bf16.msra.mxu0 0
        %2046 = vmatprep.mubr.bf16.mxu0 0
        %2047 = vmatmul.mubr.bf16.gmra.mrb[0].mxu0 %v1348
        %v2048 = vpop.f32.mrb[0].mxu0
        %v2049 = vadd.f32 0.0, %v2048
        %v2050 = vpop.f32.mrb[0].mxu0
        %v2051 = vpop.f32.mrb[0].mxu0
        %v2052 = vadd.f32 0.0, %v2051
        %v2053 = vpop.f32.mrb[0].mxu0
        %2054 = vdwg.mxu0
        %v2055 = vadd.f32 %v2012, %v2049
        %v2056 = vadd.f32 %v2013, %v2052
        %2057 = vmatprep.subr.bf16.mxu0 0
        %2058 = vmatpush1.bf16.msra.mxu0 %v832
        %2059 = vmatprep.subr.bf16.mxu0 0
        %2060 = vmatpush1.bf16.msra.mxu0 0
        %2061 = vmatprep.subr.bf16.mxu0 0
        %2062 = vmatpush1.bf16.msra.mxu0 0
        %2063 = vmatprep.subr.bf16.mxu0 0
        %2064 = vmatpush1.bf16.msra.mxu0 0
        %2065 = vmatprep.subr.bf16.mxu0 0
        %2066 = vmatpush1.bf16.msra.mxu0 0
        %2067 = vmatprep.subr.bf16.mxu0 0
        %2068 = vmatpush1.bf16.msra.mxu0 0
        %2069 = vmatprep.subr.bf16.mxu0 0
        %2070 = vmatpush1.bf16.msra.mxu0 0
        %2071 = vmatprep.subr.bf16.mxu0 0
        %2072 = vmatpush1.bf16.msra.mxu0 0
        %2073 = vmatprep.subr.bf16.mxu0 0
        %2074 = vmatpush1.bf16.msra.mxu0 0
        %2075 = vmatprep.subr.bf16.mxu0 0
        %2076 = vmatpush1.bf16.msra.mxu0 0
        %2077 = vmatprep.subr.bf16.mxu0 0
        %2078 = vmatpush1.bf16.msra.mxu0 0
        %2079 = vmatprep.subr.bf16.mxu0 0
        %2080 = vmatpush1.bf16.msra.mxu0 0
        %2081 = vmatprep.subr.bf16.mxu0 0
        %2082 = vmatpush1.bf16.msra.mxu0 0
        %2083 = vmatprep.subr.bf16.mxu0 0
        %2084 = vmatpush1.bf16.msra.mxu0 0
        %2085 = vmatprep.subr.bf16.mxu0 0
        %2086 = vmatpush1.bf16.msra.mxu0 0
        %2087 = vmatprep.subr.bf16.mxu0 0
        %2088 = vmatpush1.bf16.msra.mxu0 0
        %2089 = vmatprep.mubr.bf16.mxu0 0
        %2090 = vmatmul.mubr.bf16.gmra.mrb[0].mxu0 %v1708
        %v2091 = vpop.f32.mrb[0].mxu0
        %v2092 = vadd.f32 0.0, %v2091
        %v2093 = vpop.f32.mrb[0].mxu0
        %v2094 = vpop.f32.mrb[0].mxu0
        %v2095 = vadd.f32 0.0, %v2094
        %v2096 = vpop.f32.mrb[0].mxu0
        %2097 = vdwg.mxu0
        %v2098 = vadd.f32 %v2055, %v2092
        %v2099 = vadd.f32 %v2056, %v2095
        %2100 = vmatprep.subr.bf16.mxu0 0
        %2101 = vmatpush1.bf16.msra.mxu0 %v892
        %2102 = vmatprep.subr.bf16.mxu0 0
        %2103 = vmatpush1.bf16.msra.mxu0 0
        %2104 = vmatprep.subr.bf16.mxu0 0
        %2105 = vmatpush1.bf16.msra.mxu0 0
        %2106 = vmatprep.subr.bf16.mxu0 0
        %2107 = vmatpush1.bf16.msra.mxu0 0
        %2108 = vmatprep.subr.bf16.mxu0 0
        %2109 = vmatpush1.bf16.msra.mxu0 0
        %2110 = vmatprep.subr.bf16.mxu0 0
        %2111 = vmatpush1.bf16.msra.mxu0 0
        %2112 = vmatprep.subr.bf16.mxu0 0
        %2113 = vmatpush1.bf16.msra.mxu0 0
        %2114 = vmatprep.subr.bf16.mxu0 0
        %2115 = vmatpush1.bf16.msra.mxu0 0
        %2116 = vmatprep.subr.bf16.mxu0 0
        %2117 = vmatpush1.bf16.msra.mxu0 0
        %2118 = vmatprep.subr.bf16.mxu0 0
        %2119 = vmatpush1.bf16.msra.mxu0 0
        %2120 = vmatprep.subr.bf16.mxu0 0
        %2121 = vmatpush1.bf16.msra.mxu0 0
        %2122 = vmatprep.subr.bf16.mxu0 0
        %2123 = vmatpush1.bf16.msra.mxu0 0
        %2124 = vmatprep.subr.bf16.mxu0 0
        %2125 = vmatpush1.bf16.msra.mxu0 0
        %2126 = vmatprep.subr.bf16.mxu0 0
        %2127 = vmatpush1.bf16.msra.mxu0 0
        %2128 = vmatprep.subr.bf16.mxu0 0
        %2129 = vmatpush1.bf16.msra.mxu0 0
        %2130 = vmatprep.subr.bf16.mxu0 0
        %2131 = vmatpush1.bf16.msra.mxu0 0
        %2132 = vmatprep.mubr.bf16.mxu0 0
        %2133 = vmatmul.mubr.bf16.gmra.mrb[0].mxu0 %v1756
        %v2134 = vpop.f32.mrb[0].mxu0
        %v2135 = vadd.f32 0.0, %v2134
        %v2136 = vpop.f32.mrb[0].mxu0
        %v2137 = vpop.f32.mrb[0].mxu0
        %v2138 = vadd.f32 0.0, %v2137
        %v2139 = vpop.f32.mrb[0].mxu0
        %2140 = vdwg.mxu0
        %v2141 = vadd.f32 %v2098, %v2135
        %v2142 = vadd.f32 %v2099, %v2138
        %2143 = vrot.lane.b32.xlu0 %v1706, 127
        %v2144 = vpop.permute.xlu0 %2143
        %v2146 = vsel %vm494, %v2144, 0
        %2148 = vmatprep.subr.bf16.mxu0 0
        %2149 = vmatpush1.bf16.msra.mxu0 %v948
        %2150 = vmatprep.subr.bf16.mxu0 0
        %2151 = vmatpush1.bf16.msra.mxu0 0
        %2152 = vmatprep.subr.bf16.mxu0 0
        %2153 = vmatpush1.bf16.msra.mxu0 0
        %2154 = vmatprep.subr.bf16.mxu0 0
        %2155 = vmatpush1.bf16.msra.mxu0 0
        %2156 = vmatprep.subr.bf16.mxu0 0
        %2157 = vmatpush1.bf16.msra.mxu0 0
        %2158 = vmatprep.subr.bf16.mxu0 0
        %2159 = vmatpush1.bf16.msra.mxu0 0
        %2160 = vmatprep.subr.bf16.mxu0 0
        %2161 = vmatpush1.bf16.msra.mxu0 0
        %2162 = vmatprep.subr.bf16.mxu0 0
        %2163 = vmatpush1.bf16.msra.mxu0 0
        %2164 = vmatprep.subr.bf16.mxu0 0
        %2165 = vmatpush1.bf16.msra.mxu0 0
        %2166 = vmatprep.subr.bf16.mxu0 0
        %2167 = vmatpush1.bf16.msra.mxu0 0
        %2168 = vmatprep.subr.bf16.mxu0 0
        %2169 = vmatpush1.bf16.msra.mxu0 0
        %2170 = vmatprep.subr.bf16.mxu0 0
        %2171 = vmatpush1.bf16.msra.mxu0 0
        %2172 = vmatprep.subr.bf16.mxu0 0
        %2173 = vmatpush1.bf16.msra.mxu0 0
        %2174 = vmatprep.subr.bf16.mxu0 0
        %2175 = vmatpush1.bf16.msra.mxu0 0
        %2176 = vmatprep.subr.bf16.mxu0 0
        %2177 = vmatpush1.bf16.msra.mxu0 0
        %2178 = vmatprep.subr.bf16.mxu0 0
        %2179 = vmatpush1.bf16.msra.mxu0 0
        %2180 = vmatprep.mubr.bf16.mxu0 0
        %2181 = vmatmul.mubr.bf16.gmra.mrb[0].mxu0 %v2146
        %v2182 = vpop.f32.mrb[0].mxu0
        %v2183 = vadd.f32 0.0, %v2182
        %v2184 = vpop.f32.mrb[0].mxu0
        %v2185 = vpop.f32.mrb[0].mxu0
        %v2186 = vadd.f32 0.0, %v2185
        %v2187 = vpop.f32.mrb[0].mxu0
        %2188 = vdwg.mxu0
        %v2189 = vadd.f32 %v2141, %v2183
        %v2190 = vadd.f32 %v2142, %v2186
        %v2191 = vmax.f32 %v1801, %v2189
        %v2192 = vmax.f32 %v1802, %v2190
        %v2193 = vld [vmem:[%s2] sm:$0x1]
        %v2195 = vlaneseq
        %v2196 = vshrl.u32 %v2195, 7
        %v2197 = vsub.s32 0, %v2196
        %v2198 = vrot.slane %v2193, %v2197
        %v2200 = vadd.f32 %v2191, %v2198
        %v2201 = vadd.f32 %v2192, %v2198
        %v2202 = vmax.f32 %v2200, 0.0
        %v2203 = vmax.f32 %v2201, 0.0
        %2204 = vst [vmem:[#allocation2 + $0x1] sm:$0xff] %v2202
        %2205 = vst [vmem:[#allocation2 + $0x9] sm:$0x3f] %v2203
        %2206 = vst [vmem:[#allocation2] sm:$0x1] 0.0
        %2207 = vst [vmem:[#allocation2 + $0xf] sm:$0x1] 0.0
        %v2208 = vld [vmem:[%s3] sm:$0xf]
        %v2209 = vld [vmem:[%s3 + $0x4] sm:$0xf]
        %v2210 = vld [vmem:[%s3 + $0x8] sm:$0xf]
        %v2211 = vld [vmem:[%s3 + $0xc] sm:$0xf]
        %v2212 = vld [vmem:[%s3 + $0x10] sm:$0xf]
        %v2213 = vld [vmem:[%s3 + $0x14] sm:$0xf]
        %v2214 = vld [vmem:[%s3 + $0x18] sm:$0xf]
        %s2215 = scalar_lea.vmem %s3, 28
        %v2216 = vld [vmem:[%s2215] sm:$0xf]
        %v2217 = vld [vmem:[%s2215 + $0x4] sm:$0xf]
        %v2218 = vld [vmem:[%s2215 + $0x8] sm:$0xf]
        %v2219 = vld [vmem:[%s2215 + $0xc] sm:$0xf]
        %v2220 = vld [vmem:[%s2215 + $0x10] sm:$0xf]
        %v2221 = vld [vmem:[%s2215 + $0x14] sm:$0xf]
        %v2222 = vld [vmem:[%s2215 + $0x18] sm:$0xf]
        %s2223 = scalar_lea.vmem %s3, 56
        %v2224 = vld [vmem:[%s2223] sm:$0xf]
        %v2225 = vld [vmem:[%s2223 + $0x4] sm:$0xf]
        %v2226 = vld [vmem:[%s2223 + $0x8] sm:$0xf]
        %v2227 = vld [vmem:[%s2223 + $0xc] sm:$0xf]
        %v2228 = vld [vmem:[%s2223 + $0x10] sm:$0xf]
        %v2229 = vld [vmem:[%s2223 + $0x14] sm:$0xf]
        %v2230 = vld [vmem:[%s2223 + $0x18] sm:$0xf]
        %s2231 = scalar_lea.vmem %s3, 84
        %v2232 = vld [vmem:[%s2231] sm:$0xf]
        %v2233 = vld [vmem:[%s2231 + $0x4] sm:$0xf]
        %v2234 = vld [vmem:[%s2231 + $0x8] sm:$0xf]
        %v2235 = vld [vmem:[%s2231 + $0xc] sm:$0xf]
        %v2236 = vld [vmem:[%s2231 + $0x10] sm:$0xf]
        %v2237 = vld [vmem:[%s2231 + $0x14] sm:$0xf]
        %v2238 = vld [vmem:[%s2231 + $0x18] sm:$0xf]
        %s2239 = scalar_lea.vmem %s3, 112
        %v2240 = vld [vmem:[%s2239] sm:$0xf]
        %v2241 = vld [vmem:[%s2239 + $0x4] sm:$0xf]
        %v2242 = vld [vmem:[%s2239 + $0x8] sm:$0xf]
        %v2243 = vld [vmem:[%s2239 + $0xc] sm:$0xf]
        %v2244 = vld [vmem:[%s2239 + $0x10] sm:$0xf]
        %v2245 = vld [vmem:[%s2239 + $0x14] sm:$0xf]
        %v2246 = vld [vmem:[%s2239 + $0x18] sm:$0xf]
        %s2247 = scalar_lea.vmem %s3, 140
        %v2248 = vld [vmem:[%s2247] sm:$0xf]
        %v2249 = vld [vmem:[%s2247 + $0x4] sm:$0xf]
        %v2250 = vld [vmem:[%s2247 + $0x8] sm:$0xf]
        %v2251 = vld [vmem:[%s2247 + $0xc] sm:$0xf]
        %v2252 = vld [vmem:[%s2247 + $0x10] sm:$0xf]
        %v2253 = vld [vmem:[%s2247 + $0x14] sm:$0xf]
        %v2254 = vld [vmem:[%s2247 + $0x18] sm:$0xf]
        %s2255 = scalar_lea.vmem %s3, 168
        %v2256 = vld [vmem:[%s2255] sm:$0xf]
        %v2257 = vld [vmem:[%s2255 + $0x4] sm:$0xf]
        %v2258 = vld [vmem:[%s2255 + $0x8] sm:$0xf]
        %v2259 = vld [vmem:[%s2255 + $0xc] sm:$0xf]
        %v2260 = vld [vmem:[%s2255 + $0x10] sm:$0xf]
        %v2261 = vld [vmem:[%s2255 + $0x14] sm:$0xf]
        %v2262 = vld [vmem:[%s2255 + $0x18] sm:$0xf]
        %s2263 = scalar_lea.vmem %s3, 196
        %v2264 = vld [vmem:[%s2263] sm:$0xf]
        %v2265 = vld [vmem:[%s2263 + $0x4] sm:$0xf]
        %v2266 = vld [vmem:[%s2263 + $0x8] sm:$0xf]
        %v2267 = vld [vmem:[%s2263 + $0xc] sm:$0xf]
        %v2268 = vld [vmem:[%s2263 + $0x10] sm:$0xf]
        %v2269 = vld [vmem:[%s2263 + $0x14] sm:$0xf]
        %v2270 = vld [vmem:[%s2263 + $0x18] sm:$0xf]
        %s2271 = scalar_lea.vmem %s3, 224
        %v2272 = vld [vmem:[%s2271] sm:$0xf]
        %v2273 = vld [vmem:[%s2271 + $0x4] sm:$0xf]
        %v2274 = vld [vmem:[%s2271 + $0x8] sm:$0xf]
        %v2275 = vld [vmem:[%s2271 + $0xc] sm:$0xf]
        %v2276 = vld [vmem:[%s2271 + $0x10] sm:$0xf]
        %v2277 = vld [vmem:[%s2271 + $0x14] sm:$0xf]
        %v2278 = vld [vmem:[%s2271 + $0x18] sm:$0xf]
        %v2279 = vld [vmem:[#allocation2] ss:$2 sm:$0x7f]
        %v2280 = vpack.c.bf16 %v2279, %v2279
        %s2281 = scalar_lea.vmem [#allocation2], 1
        %v2282 = vld [vmem:[%s2281] ss:$2 sm:$0x7f]
        %v2283 = vpack.c.bf16 %v2282, %v2282
        %s2284 = scalar_lea.vmem [#allocation2], 2
        %v2285 = vld [vmem:[%s2284] ss:$2 sm:$0x7f]
        %v2286 = vpack.c.bf16 %v2285, %v2285
        %s2287 = scalar_lea.vmem [#allocation2], 3
        %v2288 = vld [vmem:[%s2287] ss:$2 sm:$0x7f]
        %v2289 = vpack.c.bf16 %v2288, %v2288
        %v2297 = vunpack.c.l.b16 %v2216
        %v2298 = vunpack.c.l.b16 %v2217
        %v2299 = vunpack.c.l.b16 %v2218
        %v2300 = vunpack.c.l.b16 %v2219
        %v2301 = vunpack.c.l.b16 %v2220
        %v2302 = vunpack.c.l.b16 %v2221
        %v2303 = vunpack.c.l.b16 %v2222
        %v2304 = vpack.c.b16 %v2298, %v2297
        %v2305 = vpack.c.b16 %v2300, %v2299
        %v2306 = vpack.c.b16 %v2302, %v2301
        %v2307 = vpack.c.b16 %v2303, %v2303
        %vm2311 = vcmask 457728
        %v2313 = vsel %vm2311, %v2280, 0
        %vm2315 = vcmask 1043456
        %v2317 = vsel %vm2315, %v2307, 0
        %2319 = vmatprep.subr.bf16.mxu0 0
        %2320 = vmatpush1.bf16.msra.mxu0 %v2304
        %2321 = vmatprep.subr.bf16.mxu0 0
        %2322 = vmatpush1.bf16.msra.mxu0 %v2305
        %2323 = vmatprep.subr.bf16.mxu0 0
        %2324 = vmatpush1.bf16.msra.mxu0 %v2306
        %2325 = vmatprep.subr.bf16.mxu0 0
        %2326 = vmatpush1.bf16.msra.mxu0 %v2317
        %2327 = vmatprep.subr.bf16.mxu0 0
        %2328 = vmatpush1.bf16.msra.mxu0 0
        %2329 = vmatprep.subr.bf16.mxu0 0
        %2330 = vmatpush1.bf16.msra.mxu0 0
        %2331 = vmatprep.subr.bf16.mxu0 0
        %2332 = vmatpush1.bf16.msra.mxu0 0
        %2333 = vmatprep.subr.bf16.mxu0 0
        %2334 = vmatpush1.bf16.msra.mxu0 0
        %2335 = vmatprep.subr.bf16.mxu0 0
        %2336 = vmatpush1.bf16.msra.mxu0 0
        %2337 = vmatprep.subr.bf16.mxu0 0
        %2338 = vmatpush1.bf16.msra.mxu0 0
        %2339 = vmatprep.subr.bf16.mxu0 0
        %2340 = vmatpush1.bf16.msra.mxu0 0
        %2341 = vmatprep.subr.bf16.mxu0 0
        %2342 = vmatpush1.bf16.msra.mxu0 0
        %2343 = vmatprep.subr.bf16.mxu0 0
        %2344 = vmatpush1.bf16.msra.mxu0 0
        %2345 = vmatprep.subr.bf16.mxu0 0
        %2346 = vmatpush1.bf16.msra.mxu0 0
        %2347 = vmatprep.subr.bf16.mxu0 0
        %2348 = vmatpush1.bf16.msra.mxu0 0
        %2349 = vmatprep.subr.bf16.mxu0 0
        %2350 = vmatpush1.bf16.msra.mxu0 0
        %2351 = vmatprep.mubr.bf16.mxu0 0
        %2352 = vmatmul.mubr.bf16.gmra.mrb[0].mxu0 %v2313
        %v2353 = vpop.f32.mrb[0].mxu0
        %v2354 = vadd.f32 0.0, %v2353
        %v2355 = vpop.f32.mrb[0].mxu0
        %v2356 = vpop.f32.mrb[0].mxu0
        %v2357 = vpop.f32.mrb[0].mxu0
        %2358 = vdwg.mxu0
        %2360 = vrot.lane.b32.xlu0 %v2280, 64
        %v2361 = vpop.permute.xlu0 %2360
        %v2369 = vunpack.c.l.b16 %v2208
        %v2370 = vunpack.c.l.b16 %v2209
        %v2371 = vunpack.c.l.b16 %v2210
        %v2372 = vunpack.c.l.b16 %v2211
        %v2373 = vunpack.c.l.b16 %v2212
        %v2374 = vunpack.c.l.b16 %v2213
        %v2375 = vunpack.c.l.b16 %v2214
        %v2376 = vpack.c.b16 %v2370, %v2369
        %v2377 = vpack.c.b16 %v2372, %v2371
        %v2378 = vpack.c.b16 %v2374, %v2373
        %v2379 = vpack.c.b16 %v2375, %v2375
        %v2384 = vsel %vm2311, %v2361, 0
        %v2387 = vsel %vm2315, %v2379, 0
        %2389 = vmatprep.subr.bf16.mxu0 0
        %2390 = vmatpush1.bf16.msra.mxu0 %v2376
        %2391 = vmatprep.subr.bf16.mxu0 0
        %2392 = vmatpush1.bf16.msra.mxu0 %v2377
        %2393 = vmatprep.subr.bf16.mxu0 0
        %2394 = vmatpush1.bf16.msra.mxu0 %v2378
        %2395 = vmatprep.subr.bf16.mxu0 0
        %2396 = vmatpush1.bf16.msra.mxu0 %v2387
        %2397 = vmatprep.subr.bf16.mxu0 0
        %2398 = vmatpush1.bf16.msra.mxu0 0
        %2399 = vmatprep.subr.bf16.mxu0 0
        %2400 = vmatpush1.bf16.msra.mxu0 0
        %2401 = vmatprep.subr.bf16.mxu0 0
        %2402 = vmatpush1.bf16.msra.mxu0 0
        %2403 = vmatprep.subr.bf16.mxu0 0
        %2404 = vmatpush1.bf16.msra.mxu0 0
        %2405 = vmatprep.subr.bf16.mxu0 0
        %2406 = vmatpush1.bf16.msra.mxu0 0
        %2407 = vmatprep.subr.bf16.mxu0 0
        %2408 = vmatpush1.bf16.msra.mxu0 0
        %2409 = vmatprep.subr.bf16.mxu0 0
        %2410 = vmatpush1.bf16.msra.mxu0 0
        %2411 = vmatprep.subr.bf16.mxu0 0
        %2412 = vmatpush1.bf16.msra.mxu0 0
        %2413 = vmatprep.subr.bf16.mxu0 0
        %2414 = vmatpush1.bf16.msra.mxu0 0
        %2415 = vmatprep.subr.bf16.mxu0 0
        %2416 = vmatpush1.bf16.msra.mxu0 0
        %2417 = vmatprep.subr.bf16.mxu0 0
        %2418 = vmatpush1.bf16.msra.mxu0 0
        %2419 = vmatprep.subr.bf16.mxu0 0
        %2420 = vmatpush1.bf16.msra.mxu0 0
        %2421 = vmatprep.mubr.bf16.mxu0 0
        %2422 = vmatmul.mubr.bf16.gmra.mrb[0].mxu0 %v2384
        %v2423 = vpop.f32.mrb[0].mxu0
        %v2424 = vadd.f32 %v2354, %v2423
        %v2425 = vpop.f32.mrb[0].mxu0
        %v2426 = vpop.f32.mrb[0].mxu0
        %v2427 = vpop.f32.mrb[0].mxu0
        %2428 = vdwg.mxu0
        %2429 = vrot.lane.b32.xlu0 %v2280, 56
        %v2430 = vpop.permute.xlu0 %2429
        %v2438 = vunpack.c.l.b16 %v2224
        %v2439 = vunpack.c.l.b16 %v2225
        %v2440 = vunpack.c.l.b16 %v2226
        %v2441 = vunpack.c.l.b16 %v2227
        %v2442 = vunpack.c.l.b16 %v2228
        %v2443 = vunpack.c.l.b16 %v2229
        %v2444 = vunpack.c.l.b16 %v2230
        %v2445 = vpack.c.b16 %v2439, %v2438
        %v2446 = vpack.c.b16 %v2441, %v2440
        %v2447 = vpack.c.b16 %v2443, %v2442
        %v2448 = vpack.c.b16 %v2444, %v2444
        %v2453 = vsel %vm2311, %v2430, 0
        %v2456 = vsel %vm2315, %v2448, 0
        %2458 = vmatprep.subr.bf16.mxu0 0
        %2459 = vmatpush1.bf16.msra.mxu0 %v2445
        %2460 = vmatprep.subr.bf16.mxu0 0
        %2461 = vmatpush1.bf16.msra.mxu0 %v2446
        %2462 = vmatprep.subr.bf16.mxu0 0
        %2463 = vmatpush1.bf16.msra.mxu0 %v2447
        %2464 = vmatprep.subr.bf16.mxu0 0
        %2465 = vmatpush1.bf16.msra.mxu0 %v2456
        %2466 = vmatprep.subr.bf16.mxu0 0
        %2467 = vmatpush1.bf16.msra.mxu0 0
        %2468 = vmatprep.subr.bf16.mxu0 0
        %2469 = vmatpush1.bf16.msra.mxu0 0
        %2470 = vmatprep.subr.bf16.mxu0 0
        %2471 = vmatpush1.bf16.msra.mxu0 0
        %2472 = vmatprep.subr.bf16.mxu0 0
        %2473 = vmatpush1.bf16.msra.mxu0 0
        %2474 = vmatprep.subr.bf16.mxu0 0
        %2475 = vmatpush1.bf16.msra.mxu0 0
        %2476 = vmatprep.subr.bf16.mxu0 0
        %2477 = vmatpush1.bf16.msra.mxu0 0
        %2478 = vmatprep.subr.bf16.mxu0 0
        %2479 = vmatpush1.bf16.msra.mxu0 0
        %2480 = vmatprep.subr.bf16.mxu0 0
        %2481 = vmatpush1.bf16.msra.mxu0 0
        %2482 = vmatprep.subr.bf16.mxu0 0
        %2483 = vmatpush1.bf16.msra.mxu0 0
        %2484 = vmatprep.subr.bf16.mxu0 0
        %2485 = vmatpush1.bf16.msra.mxu0 0
        %2486 = vmatprep.subr.bf16.mxu0 0
        %2487 = vmatpush1.bf16.msra.mxu0 0
        %2488 = vmatprep.subr.bf16.mxu0 0
        %2489 = vmatpush1.bf16.msra.mxu0 0
        %2490 = vmatprep.mubr.bf16.mxu0 0
        %2491 = vmatmul.mubr.bf16.gmra.mrb[0].mxu0 %v2453
        %v2492 = vpop.f32.mrb[0].mxu0
        %v2493 = vadd.f32 0.0, %v2492
        %v2494 = vpop.f32.mrb[0].mxu0
        %v2495 = vpop.f32.mrb[0].mxu0
        %v2496 = vpop.f32.mrb[0].mxu0
        %2497 = vdwg.mxu0
        %v2498 = vadd.f32 %v2424, %v2493
        %2500 = vrot.lane.b32.xlu0 %v2283, 64
        %v2501 = vpop.permute.xlu0 %2500
        %v2509 = vunpack.c.l.b16 %v2232
        %v2510 = vunpack.c.l.b16 %v2233
        %v2511 = vunpack.c.l.b16 %v2234
        %v2512 = vunpack.c.l.b16 %v2235
        %v2513 = vunpack.c.l.b16 %v2236
        %v2514 = vunpack.c.l.b16 %v2237
        %v2515 = vunpack.c.l.b16 %v2238
        %v2516 = vpack.c.b16 %v2510, %v2509
        %v2517 = vpack.c.b16 %v2512, %v2511
        %v2518 = vpack.c.b16 %v2514, %v2513
        %v2519 = vpack.c.b16 %v2515, %v2515
        %v2524 = vsel %vm2311, %v2501, 0
        %v2527 = vsel %vm2315, %v2519, 0
        %2529 = vmatprep.subr.bf16.mxu0 0
        %2530 = vmatpush1.bf16.msra.mxu0 %v2516
        %2531 = vmatprep.subr.bf16.mxu0 0
        %2532 = vmatpush1.bf16.msra.mxu0 %v2517
        %2533 = vmatprep.subr.bf16.mxu0 0
        %2534 = vmatpush1.bf16.msra.mxu0 %v2518
        %2535 = vmatprep.subr.bf16.mxu0 0
        %2536 = vmatpush1.bf16.msra.mxu0 %v2527
        %2537 = vmatprep.subr.bf16.mxu0 0
        %2538 = vmatpush1.bf16.msra.mxu0 0
        %2539 = vmatprep.subr.bf16.mxu0 0
        %2540 = vmatpush1.bf16.msra.mxu0 0
        %2541 = vmatprep.subr.bf16.mxu0 0
        %2542 = vmatpush1.bf16.msra.mxu0 0
        %2543 = vmatprep.subr.bf16.mxu0 0
        %2544 = vmatpush1.bf16.msra.mxu0 0
        %2545 = vmatprep.subr.bf16.mxu0 0
        %2546 = vmatpush1.bf16.msra.mxu0 0
        %2547 = vmatprep.subr.bf16.mxu0 0
        %2548 = vmatpush1.bf16.msra.mxu0 0
        %2549 = vmatprep.subr.bf16.mxu0 0
        %2550 = vmatpush1.bf16.msra.mxu0 0
        %2551 = vmatprep.subr.bf16.mxu0 0
        %2552 = vmatpush1.bf16.msra.mxu0 0
        %2553 = vmatprep.subr.bf16.mxu0 0
        %2554 = vmatpush1.bf16.msra.mxu0 0
        %2555 = vmatprep.subr.bf16.mxu0 0
        %2556 = vmatpush1.bf16.msra.mxu0 0
        %2557 = vmatprep.subr.bf16.mxu0 0
        %2558 = vmatpush1.bf16.msra.mxu0 0
        %2559 = vmatprep.subr.bf16.mxu0 0
        %2560 = vmatpush1.bf16.msra.mxu0 0
        %2561 = vmatprep.mubr.bf16.mxu0 0
        %2562 = vmatmul.mubr.bf16.gmra.mrb[0].mxu0 %v2524
        %v2563 = vpop.f32.mrb[0].mxu0
        %v2564 = vadd.f32 0.0, %v2563
        %v2565 = vpop.f32.mrb[0].mxu0
        %v2566 = vpop.f32.mrb[0].mxu0
        %v2567 = vpop.f32.mrb[0].mxu0
        %2568 = vdwg.mxu0
        %v2569 = vadd.f32 %v2498, %v2564
        %v2577 = vunpack.c.l.b16 %v2240
        %v2578 = vunpack.c.l.b16 %v2241
        %v2579 = vunpack.c.l.b16 %v2242
        %v2580 = vunpack.c.l.b16 %v2243
        %v2581 = vunpack.c.l.b16 %v2244
        %v2582 = vunpack.c.l.b16 %v2245
        %v2583 = vunpack.c.l.b16 %v2246
        %v2584 = vpack.c.b16 %v2578, %v2577
        %v2585 = vpack.c.b16 %v2580, %v2579
        %v2586 = vpack.c.b16 %v2582, %v2581
        %v2587 = vpack.c.b16 %v2583, %v2583
        %v2592 = vsel %vm2311, %v2283, 0
        %v2595 = vsel %vm2315, %v2587, 0
        %2597 = vmatprep.subr.bf16.mxu0 0
        %2598 = vmatpush1.bf16.msra.mxu0 %v2584
        %2599 = vmatprep.subr.bf16.mxu0 0
        %2600 = vmatpush1.bf16.msra.mxu0 %v2585
        %2601 = vmatprep.subr.bf16.mxu0 0
        %2602 = vmatpush1.bf16.msra.mxu0 %v2586
        %2603 = vmatprep.subr.bf16.mxu0 0
        %2604 = vmatpush1.bf16.msra.mxu0 %v2595
        %2605 = vmatprep.subr.bf16.mxu0 0
        %2606 = vmatpush1.bf16.msra.mxu0 0
        %2607 = vmatprep.subr.bf16.mxu0 0
        %2608 = vmatpush1.bf16.msra.mxu0 0
        %2609 = vmatprep.subr.bf16.mxu0 0
        %2610 = vmatpush1.bf16.msra.mxu0 0
        %2611 = vmatprep.subr.bf16.mxu0 0
        %2612 = vmatpush1.bf16.msra.mxu0 0
        %2613 = vmatprep.subr.bf16.mxu0 0
        %2614 = vmatpush1.bf16.msra.mxu0 0
        %2615 = vmatprep.subr.bf16.mxu0 0
        %2616 = vmatpush1.bf16.msra.mxu0 0
        %2617 = vmatprep.subr.bf16.mxu0 0
        %2618 = vmatpush1.bf16.msra.mxu0 0
        %2619 = vmatprep.subr.bf16.mxu0 0
        %2620 = vmatpush1.bf16.msra.mxu0 0
        %2621 = vmatprep.subr.bf16.mxu0 0
        %2622 = vmatpush1.bf16.msra.mxu0 0
        %2623 = vmatprep.subr.bf16.mxu0 0
        %2624 = vmatpush1.bf16.msra.mxu0 0
        %2625 = vmatprep.subr.bf16.mxu0 0
        %2626 = vmatpush1.bf16.msra.mxu0 0
        %2627 = vmatprep.subr.bf16.mxu0 0
        %2628 = vmatpush1.bf16.msra.mxu0 0
        %2629 = vmatprep.mubr.bf16.mxu0 0
        %2630 = vmatmul.mubr.bf16.gmra.mrb[0].mxu0 %v2592
        %v2631 = vpop.f32.mrb[0].mxu0
        %v2632 = vadd.f32 0.0, %v2631
        %v2633 = vpop.f32.mrb[0].mxu0
        %v2634 = vpop.f32.mrb[0].mxu0
        %v2635 = vpop.f32.mrb[0].mxu0
        %2636 = vdwg.mxu0
        %v2637 = vadd.f32 %v2569, %v2632
        %2638 = vrot.lane.b32.xlu0 %v2283, 56
        %v2639 = vpop.permute.xlu0 %2638
        %v2647 = vunpack.c.l.b16 %v2248
        %v2648 = vunpack.c.l.b16 %v2249
        %v2649 = vunpack.c.l.b16 %v2250
        %v2650 = vunpack.c.l.b16 %v2251
        %v2651 = vunpack.c.l.b16 %v2252
        %v2652 = vunpack.c.l.b16 %v2253
        %v2653 = vunpack.c.l.b16 %v2254
        %v2654 = vpack.c.b16 %v2648, %v2647
        %v2655 = vpack.c.b16 %v2650, %v2649
        %v2656 = vpack.c.b16 %v2652, %v2651
        %v2657 = vpack.c.b16 %v2653, %v2653
        %v2662 = vsel %vm2311, %v2639, 0
        %v2665 = vsel %vm2315, %v2657, 0
        %2667 = vmatprep.subr.bf16.mxu0 0
        %2668 = vmatpush1.bf16.msra.mxu0 %v2654
        %2669 = vmatprep.subr.bf16.mxu0 0
        %2670 = vmatpush1.bf16.msra.mxu0 %v2655
        %2671 = vmatprep.subr.bf16.mxu0 0
        %2672 = vmatpush1.bf16.msra.mxu0 %v2656
        %2673 = vmatprep.subr.bf16.mxu0 0
        %2674 = vmatpush1.bf16.msra.mxu0 %v2665
        %2675 = vmatprep.subr.bf16.mxu0 0
        %2676 = vmatpush1.bf16.msra.mxu0 0
        %2677 = vmatprep.subr.bf16.mxu0 0
        %2678 = vmatpush1.bf16.msra.mxu0 0
        %2679 = vmatprep.subr.bf16.mxu0 0
        %2680 = vmatpush1.bf16.msra.mxu0 0
        %2681 = vmatprep.subr.bf16.mxu0 0
        %2682 = vmatpush1.bf16.msra.mxu0 0
        %2683 = vmatprep.subr.bf16.mxu0 0
        %2684 = vmatpush1.bf16.msra.mxu0 0
        %2685 = vmatprep.subr.bf16.mxu0 0
        %2686 = vmatpush1.bf16.msra.mxu0 0
        %2687 = vmatprep.subr.bf16.mxu0 0
        %2688 = vmatpush1.bf16.msra.mxu0 0
        %2689 = vmatprep.subr.bf16.mxu0 0
        %2690 = vmatpush1.bf16.msra.mxu0 0
        %2691 = vmatprep.subr.bf16.mxu0 0
        %2692 = vmatpush1.bf16.msra.mxu0 0
        %2693 = vmatprep.subr.bf16.mxu0 0
        %2694 = vmatpush1.bf16.msra.mxu0 0
        %2695 = vmatprep.subr.bf16.mxu0 0
        %2696 = vmatpush1.bf16.msra.mxu0 0
        %2697 = vmatprep.subr.bf16.mxu0 0
        %2698 = vmatpush1.bf16.msra.mxu0 0
        %2699 = vmatprep.mubr.bf16.mxu0 0
        %2700 = vmatmul.mubr.bf16.gmra.mrb[0].mxu0 %v2662
        %v2701 = vpop.f32.mrb[0].mxu0
        %v2702 = vadd.f32 0.0, %v2701
        %v2703 = vpop.f32.mrb[0].mxu0
        %v2704 = vpop.f32.mrb[0].mxu0
        %v2705 = vpop.f32.mrb[0].mxu0
        %2706 = vdwg.mxu0
        %v2707 = vadd.f32 %v2637, %v2702
        %2709 = vrot.lane.b32.xlu0 %v2286, 64
        %v2710 = vpop.permute.xlu0 %2709
        %v2718 = vunpack.c.l.b16 %v2256
        %v2719 = vunpack.c.l.b16 %v2257
        %v2720 = vunpack.c.l.b16 %v2258
        %v2721 = vunpack.c.l.b16 %v2259
        %v2722 = vunpack.c.l.b16 %v2260
        %v2723 = vunpack.c.l.b16 %v2261
        %v2724 = vunpack.c.l.b16 %v2262
        %v2725 = vpack.c.b16 %v2719, %v2718
        %v2726 = vpack.c.b16 %v2721, %v2720
        %v2727 = vpack.c.b16 %v2723, %v2722
        %v2728 = vpack.c.b16 %v2724, %v2724
        %v2733 = vsel %vm2311, %v2710, 0
        %v2736 = vsel %vm2315, %v2728, 0
        %2738 = vmatprep.subr.bf16.mxu0 0
        %2739 = vmatpush1.bf16.msra.mxu0 %v2725
        %2740 = vmatprep.subr.bf16.mxu0 0
        %2741 = vmatpush1.bf16.msra.mxu0 %v2726
        %2742 = vmatprep.subr.bf16.mxu0 0
        %2743 = vmatpush1.bf16.msra.mxu0 %v2727
        %2744 = vmatprep.subr.bf16.mxu0 0
        %2745 = vmatpush1.bf16.msra.mxu0 %v2736
        %2746 = vmatprep.subr.bf16.mxu0 0
        %2747 = vmatpush1.bf16.msra.mxu0 0
        %2748 = vmatprep.subr.bf16.mxu0 0
        %2749 = vmatpush1.bf16.msra.mxu0 0
        %2750 = vmatprep.subr.bf16.mxu0 0
        %2751 = vmatpush1.bf16.msra.mxu0 0
        %2752 = vmatprep.subr.bf16.mxu0 0
        %2753 = vmatpush1.bf16.msra.mxu0 0
        %2754 = vmatprep.subr.bf16.mxu0 0
        %2755 = vmatpush1.bf16.msra.mxu0 0
        %2756 = vmatprep.subr.bf16.mxu0 0
        %2757 = vmatpush1.bf16.msra.mxu0 0
        %2758 = vmatprep.subr.bf16.mxu0 0
        %2759 = vmatpush1.bf16.msra.mxu0 0
        %2760 = vmatprep.subr.bf16.mxu0 0
        %2761 = vmatpush1.bf16.msra.mxu0 0
        %2762 = vmatprep.subr.bf16.mxu0 0
        %2763 = vmatpush1.bf16.msra.mxu0 0
        %2764 = vmatprep.subr.bf16.mxu0 0
        %2765 = vmatpush1.bf16.msra.mxu0 0
        %2766 = vmatprep.subr.bf16.mxu0 0
        %2767 = vmatpush1.bf16.msra.mxu0 0
        %2768 = vmatprep.subr.bf16.mxu0 0
        %2769 = vmatpush1.bf16.msra.mxu0 0
        %2770 = vmatprep.mubr.bf16.mxu0 0
        %2771 = vmatmul.mubr.bf16.gmra.mrb[0].mxu0 %v2733
        %v2772 = vpop.f32.mrb[0].mxu0
        %v2773 = vadd.f32 0.0, %v2772
        %v2774 = vpop.f32.mrb[0].mxu0
        %v2775 = vpop.f32.mrb[0].mxu0
        %v2776 = vpop.f32.mrb[0].mxu0
        %2777 = vdwg.mxu0
        %v2778 = vadd.f32 %v2707, %v2773
        %v2786 = vunpack.c.l.b16 %v2264
        %v2787 = vunpack.c.l.b16 %v2265
        %v2788 = vunpack.c.l.b16 %v2266
        %v2789 = vunpack.c.l.b16 %v2267
        %v2790 = vunpack.c.l.b16 %v2268
        %v2791 = vunpack.c.l.b16 %v2269
        %v2792 = vunpack.c.l.b16 %v2270
        %v2793 = vpack.c.b16 %v2787, %v2786
        %v2794 = vpack.c.b16 %v2789, %v2788
        %v2795 = vpack.c.b16 %v2791, %v2790
        %v2796 = vpack.c.b16 %v2792, %v2792
        %v2801 = vsel %vm2311, %v2286, 0
        %v2804 = vsel %vm2315, %v2796, 0
        %2806 = vmatprep.subr.bf16.mxu0 0
        %2807 = vmatpush1.bf16.msra.mxu0 %v2793
        %2808 = vmatprep.subr.bf16.mxu0 0
        %2809 = vmatpush1.bf16.msra.mxu0 %v2794
        %2810 = vmatprep.subr.bf16.mxu0 0
        %2811 = vmatpush1.bf16.msra.mxu0 %v2795
        %2812 = vmatprep.subr.bf16.mxu0 0
        %2813 = vmatpush1.bf16.msra.mxu0 %v2804
        %2814 = vmatprep.subr.bf16.mxu0 0
        %2815 = vmatpush1.bf16.msra.mxu0 0
        %2816 = vmatprep.subr.bf16.mxu0 0
        %2817 = vmatpush1.bf16.msra.mxu0 0
        %2818 = vmatprep.subr.bf16.mxu0 0
        %2819 = vmatpush1.bf16.msra.mxu0 0
        %2820 = vmatprep.subr.bf16.mxu0 0
        %2821 = vmatpush1.bf16.msra.mxu0 0
        %2822 = vmatprep.subr.bf16.mxu0 0
        %2823 = vmatpush1.bf16.msra.mxu0 0
        %2824 = vmatprep.subr.bf16.mxu0 0
        %2825 = vmatpush1.bf16.msra.mxu0 0
        %2826 = vmatprep.subr.bf16.mxu0 0
        %2827 = vmatpush1.bf16.msra.mxu0 0
        %2828 = vmatprep.subr.bf16.mxu0 0
        %2829 = vmatpush1.bf16.msra.mxu0 0
        %2830 = vmatprep.subr.bf16.mxu0 0
        %2831 = vmatpush1.bf16.msra.mxu0 0
        %2832 = vmatprep.subr.bf16.mxu0 0
        %2833 = vmatpush1.bf16.msra.mxu0 0
        %2834 = vmatprep.subr.bf16.mxu0 0
        %2835 = vmatpush1.bf16.msra.mxu0 0
        %2836 = vmatprep.subr.bf16.mxu0 0
        %2837 = vmatpush1.bf16.msra.mxu0 0
        %2838 = vmatprep.mubr.bf16.mxu0 0
        %2839 = vmatmul.mubr.bf16.gmra.mrb[0].mxu0 %v2801
        %v2840 = vpop.f32.mrb[0].mxu0
        %v2841 = vadd.f32 0.0, %v2840
        %v2842 = vpop.f32.mrb[0].mxu0
        %v2843 = vpop.f32.mrb[0].mxu0
        %v2844 = vpop.f32.mrb[0].mxu0
        %2845 = vdwg.mxu0
        %v2846 = vadd.f32 %v2778, %v2841
        %2847 = vrot.lane.b32.xlu0 %v2286, 56
        %v2848 = vpop.permute.xlu0 %2847
        %v2856 = vunpack.c.l.b16 %v2272
        %v2857 = vunpack.c.l.b16 %v2273
        %v2858 = vunpack.c.l.b16 %v2274
        %v2859 = vunpack.c.l.b16 %v2275
        %v2860 = vunpack.c.l.b16 %v2276
        %v2861 = vunpack.c.l.b16 %v2277
        %v2862 = vunpack.c.l.b16 %v2278
        %v2863 = vpack.c.b16 %v2857, %v2856
        %v2864 = vpack.c.b16 %v2859, %v2858
        %v2865 = vpack.c.b16 %v2861, %v2860
        %v2866 = vpack.c.b16 %v2862, %v2862
        %v2871 = vsel %vm2311, %v2848, 0
        %v2874 = vsel %vm2315, %v2866, 0
        %2876 = vmatprep.subr.bf16.mxu0 0
        %2877 = vmatpush1.bf16.msra.mxu0 %v2863
        %2878 = vmatprep.subr.bf16.mxu0 0
        %2879 = vmatpush1.bf16.msra.mxu0 %v2864
        %2880 = vmatprep.subr.bf16.mxu0 0
        %2881 = vmatpush1.bf16.msra.mxu0 %v2865
        %2882 = vmatprep.subr.bf16.mxu0 0
        %2883 = vmatpush1.bf16.msra.mxu0 %v2874
        %2884 = vmatprep.subr.bf16.mxu0 0
        %2885 = vmatpush1.bf16.msra.mxu0 0
        %2886 = vmatprep.subr.bf16.mxu0 0
        %2887 = vmatpush1.bf16.msra.mxu0 0
        %2888 = vmatprep.subr.bf16.mxu0 0
        %2889 = vmatpush1.bf16.msra.mxu0 0
        %2890 = vmatprep.subr.bf16.mxu0 0
        %2891 = vmatpush1.bf16.msra.mxu0 0
        %2892 = vmatprep.subr.bf16.mxu0 0
        %2893 = vmatpush1.bf16.msra.mxu0 0
        %2894 = vmatprep.subr.bf16.mxu0 0
        %2895 = vmatpush1.bf16.msra.mxu0 0
        %2896 = vmatprep.subr.bf16.mxu0 0
        %2897 = vmatpush1.bf16.msra.mxu0 0
        %2898 = vmatprep.subr.bf16.mxu0 0
        %2899 = vmatpush1.bf16.msra.mxu0 0
        %2900 = vmatprep.subr.bf16.mxu0 0
        %2901 = vmatpush1.bf16.msra.mxu0 0
        %2902 = vmatprep.subr.bf16.mxu0 0
        %2903 = vmatpush1.bf16.msra.mxu0 0
        %2904 = vmatprep.subr.bf16.mxu0 0
        %2905 = vmatpush1.bf16.msra.mxu0 0
        %2906 = vmatprep.subr.bf16.mxu0 0
        %2907 = vmatpush1.bf16.msra.mxu0 0
        %2908 = vmatprep.mubr.bf16.mxu0 0
        %2909 = vmatmul.mubr.bf16.gmra.mrb[0].mxu0 %v2871
        %v2910 = vpop.f32.mrb[0].mxu0
        %v2911 = vadd.f32 0.0, %v2910
        %v2912 = vpop.f32.mrb[0].mxu0
        %v2913 = vpop.f32.mrb[0].mxu0
        %v2914 = vpop.f32.mrb[0].mxu0
        %2915 = vdwg.mxu0
        %v2916 = vadd.f32 %v2846, %v2911
        %2917 = vmatprep.subr.bf16.mxu0 0
        %2918 = vmatpush1.bf16.msra.mxu0 %v2304
        %2919 = vmatprep.subr.bf16.mxu0 0
        %2920 = vmatpush1.bf16.msra.mxu0 %v2305
        %2921 = vmatprep.subr.bf16.mxu0 0
        %2922 = vmatpush1.bf16.msra.mxu0 %v2306
        %2923 = vmatprep.subr.bf16.mxu0 0
        %2924 = vmatpush1.bf16.msra.mxu0 %v2317
        %2925 = vmatprep.subr.bf16.mxu0 0
        %2926 = vmatpush1.bf16.msra.mxu0 0
        %2927 = vmatprep.subr.bf16.mxu0 0
        %2928 = vmatpush1.bf16.msra.mxu0 0
        %2929 = vmatprep.subr.bf16.mxu0 0
        %2930 = vmatpush1.bf16.msra.mxu0 0
        %2931 = vmatprep.subr.bf16.mxu0 0
        %2932 = vmatpush1.bf16.msra.mxu0 0
        %2933 = vmatprep.subr.bf16.mxu0 0
        %2934 = vmatpush1.bf16.msra.mxu0 0
        %2935 = vmatprep.subr.bf16.mxu0 0
        %2936 = vmatpush1.bf16.msra.mxu0 0
        %2937 = vmatprep.subr.bf16.mxu0 0
        %2938 = vmatpush1.bf16.msra.mxu0 0
        %2939 = vmatprep.subr.bf16.mxu0 0
        %2940 = vmatpush1.bf16.msra.mxu0 0
        %2941 = vmatprep.subr.bf16.mxu0 0
        %2942 = vmatpush1.bf16.msra.mxu0 0
        %2943 = vmatprep.subr.bf16.mxu0 0
        %2944 = vmatpush1.bf16.msra.mxu0 0
        %2945 = vmatprep.subr.bf16.mxu0 0
        %2946 = vmatpush1.bf16.msra.mxu0 0
        %2947 = vmatprep.subr.bf16.mxu0 0
        %2948 = vmatpush1.bf16.msra.mxu0 0
        %2949 = vmatprep.mubr.bf16.mxu0 0
        %2950 = vmatmul.mubr.bf16.gmra.mrb[0].mxu0 %v2453
        %v2951 = vpop.f32.mrb[0].mxu0
        %v2952 = vadd.f32 0.0, %v2951
        %v2953 = vpop.f32.mrb[0].mxu0
        %v2954 = vpop.f32.mrb[0].mxu0
        %v2955 = vpop.f32.mrb[0].mxu0
        %2956 = vdwg.mxu0
        %2957 = vmatprep.subr.bf16.mxu0 0
        %2958 = vmatpush1.bf16.msra.mxu0 %v2376
        %2959 = vmatprep.subr.bf16.mxu0 0
        %2960 = vmatpush1.bf16.msra.mxu0 %v2377
        %2961 = vmatprep.subr.bf16.mxu0 0
        %2962 = vmatpush1.bf16.msra.mxu0 %v2378
        %2963 = vmatprep.subr.bf16.mxu0 0
        %2964 = vmatpush1.bf16.msra.mxu0 %v2387
        %2965 = vmatprep.subr.bf16.mxu0 0
        %2966 = vmatpush1.bf16.msra.mxu0 0
        %2967 = vmatprep.subr.bf16.mxu0 0
        %2968 = vmatpush1.bf16.msra.mxu0 0
        %2969 = vmatprep.subr.bf16.mxu0 0
        %2970 = vmatpush1.bf16.msra.mxu0 0
        %2971 = vmatprep.subr.bf16.mxu0 0
        %2972 = vmatpush1.bf16.msra.mxu0 0
        %2973 = vmatprep.subr.bf16.mxu0 0
        %2974 = vmatpush1.bf16.msra.mxu0 0
        %2975 = vmatprep.subr.bf16.mxu0 0
        %2976 = vmatpush1.bf16.msra.mxu0 0
        %2977 = vmatprep.subr.bf16.mxu0 0
        %2978 = vmatpush1.bf16.msra.mxu0 0
        %2979 = vmatprep.subr.bf16.mxu0 0
        %2980 = vmatpush1.bf16.msra.mxu0 0
        %2981 = vmatprep.subr.bf16.mxu0 0
        %2982 = vmatpush1.bf16.msra.mxu0 0
        %2983 = vmatprep.subr.bf16.mxu0 0
        %2984 = vmatpush1.bf16.msra.mxu0 0
        %2985 = vmatprep.subr.bf16.mxu0 0
        %2986 = vmatpush1.bf16.msra.mxu0 0
        %2987 = vmatprep.subr.bf16.mxu0 0
        %2988 = vmatpush1.bf16.msra.mxu0 0
        %2989 = vmatprep.mubr.bf16.mxu0 0
        %2990 = vmatmul.mubr.bf16.gmra.mrb[0].mxu0 %v2313
        %v2991 = vpop.f32.mrb[0].mxu0
        %v2992 = vadd.f32 %v2952, %v2991
        %v2993 = vpop.f32.mrb[0].mxu0
        %v2994 = vpop.f32.mrb[0].mxu0
        %v2995 = vpop.f32.mrb[0].mxu0
        %2996 = vdwg.mxu0
        %2997 = vrot.lane.b32.xlu0 %v2280, 120
        %v2998 = vpop.permute.xlu0 %2997
        %v3000 = vsel %vm2311, %v2998, 0
        %3002 = vmatprep.subr.bf16.mxu0 0
        %3003 = vmatpush1.bf16.msra.mxu0 %v2445
        %3004 = vmatprep.subr.bf16.mxu0 0
        %3005 = vmatpush1.bf16.msra.mxu0 %v2446
        %3006 = vmatprep.subr.bf16.mxu0 0
        %3007 = vmatpush1.bf16.msra.mxu0 %v2447
        %3008 = vmatprep.subr.bf16.mxu0 0
        %3009 = vmatpush1.bf16.msra.mxu0 %v2456
        %3010 = vmatprep.subr.bf16.mxu0 0
        %3011 = vmatpush1.bf16.msra.mxu0 0
        %3012 = vmatprep.subr.bf16.mxu0 0
        %3013 = vmatpush1.bf16.msra.mxu0 0
        %3014 = vmatprep.subr.bf16.mxu0 0
        %3015 = vmatpush1.bf16.msra.mxu0 0
        %3016 = vmatprep.subr.bf16.mxu0 0
        %3017 = vmatpush1.bf16.msra.mxu0 0
        %3018 = vmatprep.subr.bf16.mxu0 0
        %3019 = vmatpush1.bf16.msra.mxu0 0
        %3020 = vmatprep.subr.bf16.mxu0 0
        %3021 = vmatpush1.bf16.msra.mxu0 0
        %3022 = vmatprep.subr.bf16.mxu0 0
        %3023 = vmatpush1.bf16.msra.mxu0 0
        %3024 = vmatprep.subr.bf16.mxu0 0
        %3025 = vmatpush1.bf16.msra.mxu0 0
        %3026 = vmatprep.subr.bf16.mxu0 0
        %3027 = vmatpush1.bf16.msra.mxu0 0
        %3028 = vmatprep.subr.bf16.mxu0 0
        %3029 = vmatpush1.bf16.msra.mxu0 0
        %3030 = vmatprep.subr.bf16.mxu0 0
        %3031 = vmatpush1.bf16.msra.mxu0 0
        %3032 = vmatprep.subr.bf16.mxu0 0
        %3033 = vmatpush1.bf16.msra.mxu0 0
        %3034 = vmatprep.mubr.bf16.mxu0 0
        %3035 = vmatmul.mubr.bf16.gmra.mrb[0].mxu0 %v3000
        %v3036 = vpop.f32.mrb[0].mxu0
        %v3037 = vadd.f32 0.0, %v3036
        %v3038 = vpop.f32.mrb[0].mxu0
        %v3039 = vpop.f32.mrb[0].mxu0
        %v3040 = vpop.f32.mrb[0].mxu0
        %3041 = vdwg.mxu0
        %v3042 = vadd.f32 %v2992, %v3037
        %3043 = vmatprep.subr.bf16.mxu0 0
        %3044 = vmatpush1.bf16.msra.mxu0 %v2516
        %3045 = vmatprep.subr.bf16.mxu0 0
        %3046 = vmatpush1.bf16.msra.mxu0 %v2517
        %3047 = vmatprep.subr.bf16.mxu0 0
        %3048 = vmatpush1.bf16.msra.mxu0 %v2518
        %3049 = vmatprep.subr.bf16.mxu0 0
        %3050 = vmatpush1.bf16.msra.mxu0 %v2527
        %3051 = vmatprep.subr.bf16.mxu0 0
        %3052 = vmatpush1.bf16.msra.mxu0 0
        %3053 = vmatprep.subr.bf16.mxu0 0
        %3054 = vmatpush1.bf16.msra.mxu0 0
        %3055 = vmatprep.subr.bf16.mxu0 0
        %3056 = vmatpush1.bf16.msra.mxu0 0
        %3057 = vmatprep.subr.bf16.mxu0 0
        %3058 = vmatpush1.bf16.msra.mxu0 0
        %3059 = vmatprep.subr.bf16.mxu0 0
        %3060 = vmatpush1.bf16.msra.mxu0 0
        %3061 = vmatprep.subr.bf16.mxu0 0
        %3062 = vmatpush1.bf16.msra.mxu0 0
        %3063 = vmatprep.subr.bf16.mxu0 0
        %3064 = vmatpush1.bf16.msra.mxu0 0
        %3065 = vmatprep.subr.bf16.mxu0 0
        %3066 = vmatpush1.bf16.msra.mxu0 0
        %3067 = vmatprep.subr.bf16.mxu0 0
        %3068 = vmatpush1.bf16.msra.mxu0 0
        %3069 = vmatprep.subr.bf16.mxu0 0
        %3070 = vmatpush1.bf16.msra.mxu0 0
        %3071 = vmatprep.subr.bf16.mxu0 0
        %3072 = vmatpush1.bf16.msra.mxu0 0
        %3073 = vmatprep.subr.bf16.mxu0 0
        %3074 = vmatpush1.bf16.msra.mxu0 0
        %3075 = vmatprep.mubr.bf16.mxu0 0
        %3076 = vmatmul.mubr.bf16.gmra.mrb[0].mxu0 %v2592
        %v3077 = vpop.f32.mrb[0].mxu0
        %v3078 = vadd.f32 0.0, %v3077
        %v3079 = vpop.f32.mrb[0].mxu0
        %v3080 = vpop.f32.mrb[0].mxu0
        %v3081 = vpop.f32.mrb[0].mxu0
        %3082 = vdwg.mxu0
        %v3083 = vadd.f32 %v3042, %v3078
        %3084 = vmatprep.subr.bf16.mxu0 0
        %3085 = vmatpush1.bf16.msra.mxu0 %v2584
        %3086 = vmatprep.subr.bf16.mxu0 0
        %3087 = vmatpush1.bf16.msra.mxu0 %v2585
        %3088 = vmatprep.subr.bf16.mxu0 0
        %3089 = vmatpush1.bf16.msra.mxu0 %v2586
        %3090 = vmatprep.subr.bf16.mxu0 0
        %3091 = vmatpush1.bf16.msra.mxu0 %v2595
        %3092 = vmatprep.subr.bf16.mxu0 0
        %3093 = vmatpush1.bf16.msra.mxu0 0
        %3094 = vmatprep.subr.bf16.mxu0 0
        %3095 = vmatpush1.bf16.msra.mxu0 0
        %3096 = vmatprep.subr.bf16.mxu0 0
        %3097 = vmatpush1.bf16.msra.mxu0 0
        %3098 = vmatprep.subr.bf16.mxu0 0
        %3099 = vmatpush1.bf16.msra.mxu0 0
        %3100 = vmatprep.subr.bf16.mxu0 0
        %3101 = vmatpush1.bf16.msra.mxu0 0
        %3102 = vmatprep.subr.bf16.mxu0 0
        %3103 = vmatpush1.bf16.msra.mxu0 0
        %3104 = vmatprep.subr.bf16.mxu0 0
        %3105 = vmatpush1.bf16.msra.mxu0 0
        %3106 = vmatprep.subr.bf16.mxu0 0
        %3107 = vmatpush1.bf16.msra.mxu0 0
        %3108 = vmatprep.subr.bf16.mxu0 0
        %3109 = vmatpush1.bf16.msra.mxu0 0
        %3110 = vmatprep.subr.bf16.mxu0 0
        %3111 = vmatpush1.bf16.msra.mxu0 0
        %3112 = vmatprep.subr.bf16.mxu0 0
        %3113 = vmatpush1.bf16.msra.mxu0 0
        %3114 = vmatprep.subr.bf16.mxu0 0
        %3115 = vmatpush1.bf16.msra.mxu0 0
        %3116 = vmatprep.mubr.bf16.mxu0 0
        %3117 = vmatmul.mubr.bf16.gmra.mrb[0].mxu0 %v2662
        %v3118 = vpop.f32.mrb[0].mxu0
        %v3119 = vadd.f32 0.0, %v3118
        %v3120 = vpop.f32.mrb[0].mxu0
        %v3121 = vpop.f32.mrb[0].mxu0
        %v3122 = vpop.f32.mrb[0].mxu0
        %3123 = vdwg.mxu0
        %v3124 = vadd.f32 %v3083, %v3119
        %3125 = vrot.lane.b32.xlu0 %v2283, 120
        %v3126 = vpop.permute.xlu0 %3125
        %v3128 = vsel %vm2311, %v3126, 0
        %3130 = vmatprep.subr.bf16.mxu0 0
        %3131 = vmatpush1.bf16.msra.mxu0 %v2654
        %3132 = vmatprep.subr.bf16.mxu0 0
        %3133 = vmatpush1.bf16.msra.mxu0 %v2655
        %3134 = vmatprep.subr.bf16.mxu0 0
        %3135 = vmatpush1.bf16.msra.mxu0 %v2656
        %3136 = vmatprep.subr.bf16.mxu0 0
        %3137 = vmatpush1.bf16.msra.mxu0 %v2665
        %3138 = vmatprep.subr.bf16.mxu0 0
        %3139 = vmatpush1.bf16.msra.mxu0 0
        %3140 = vmatprep.subr.bf16.mxu0 0
        %3141 = vmatpush1.bf16.msra.mxu0 0
        %3142 = vmatprep.subr.bf16.mxu0 0
        %3143 = vmatpush1.bf16.msra.mxu0 0
        %3144 = vmatprep.subr.bf16.mxu0 0
        %3145 = vmatpush1.bf16.msra.mxu0 0
        %3146 = vmatprep.subr.bf16.mxu0 0
        %3147 = vmatpush1.bf16.msra.mxu0 0
        %3148 = vmatprep.subr.bf16.mxu0 0
        %3149 = vmatpush1.bf16.msra.mxu0 0
        %3150 = vmatprep.subr.bf16.mxu0 0
        %3151 = vmatpush1.bf16.msra.mxu0 0
        %3152 = vmatprep.subr.bf16.mxu0 0
        %3153 = vmatpush1.bf16.msra.mxu0 0
        %3154 = vmatprep.subr.bf16.mxu0 0
        %3155 = vmatpush1.bf16.msra.mxu0 0
        %3156 = vmatprep.subr.bf16.mxu0 0
        %3157 = vmatpush1.bf16.msra.mxu0 0
        %3158 = vmatprep.subr.bf16.mxu0 0
        %3159 = vmatpush1.bf16.msra.mxu0 0
        %3160 = vmatprep.subr.bf16.mxu0 0
        %3161 = vmatpush1.bf16.msra.mxu0 0
        %3162 = vmatprep.mubr.bf16.mxu0 0
        %3163 = vmatmul.mubr.bf16.gmra.mrb[0].mxu0 %v3128
        %v3164 = vpop.f32.mrb[0].mxu0
        %v3165 = vadd.f32 0.0, %v3164
        %v3166 = vpop.f32.mrb[0].mxu0
        %v3167 = vpop.f32.mrb[0].mxu0
        %v3168 = vpop.f32.mrb[0].mxu0
        %3169 = vdwg.mxu0
        %v3170 = vadd.f32 %v3124, %v3165
        %3171 = vmatprep.subr.bf16.mxu0 0
        %3172 = vmatpush1.bf16.msra.mxu0 %v2725
        %3173 = vmatprep.subr.bf16.mxu0 0
        %3174 = vmatpush1.bf16.msra.mxu0 %v2726
        %3175 = vmatprep.subr.bf16.mxu0 0
        %3176 = vmatpush1.bf16.msra.mxu0 %v2727
        %3177 = vmatprep.subr.bf16.mxu0 0
        %3178 = vmatpush1.bf16.msra.mxu0 %v2736
        %3179 = vmatprep.subr.bf16.mxu0 0
        %3180 = vmatpush1.bf16.msra.mxu0 0
        %3181 = vmatprep.subr.bf16.mxu0 0
        %3182 = vmatpush1.bf16.msra.mxu0 0
        %3183 = vmatprep.subr.bf16.mxu0 0
        %3184 = vmatpush1.bf16.msra.mxu0 0
        %3185 = vmatprep.subr.bf16.mxu0 0
        %3186 = vmatpush1.bf16.msra.mxu0 0
        %3187 = vmatprep.subr.bf16.mxu0 0
        %3188 = vmatpush1.bf16.msra.mxu0 0
        %3189 = vmatprep.subr.bf16.mxu0 0
        %3190 = vmatpush1.bf16.msra.mxu0 0
        %3191 = vmatprep.subr.bf16.mxu0 0
        %3192 = vmatpush1.bf16.msra.mxu0 0
        %3193 = vmatprep.subr.bf16.mxu0 0
        %3194 = vmatpush1.bf16.msra.mxu0 0
        %3195 = vmatprep.subr.bf16.mxu0 0
        %3196 = vmatpush1.bf16.msra.mxu0 0
        %3197 = vmatprep.subr.bf16.mxu0 0
        %3198 = vmatpush1.bf16.msra.mxu0 0
        %3199 = vmatprep.subr.bf16.mxu0 0
        %3200 = vmatpush1.bf16.msra.mxu0 0
        %3201 = vmatprep.subr.bf16.mxu0 0
        %3202 = vmatpush1.bf16.msra.mxu0 0
        %3203 = vmatprep.mubr.bf16.mxu0 0
        %3204 = vmatmul.mubr.bf16.gmra.mrb[0].mxu0 %v2801
        %v3205 = vpop.f32.mrb[0].mxu0
        %v3206 = vadd.f32 0.0, %v3205
        %v3207 = vpop.f32.mrb[0].mxu0
        %v3208 = vpop.f32.mrb[0].mxu0
        %v3209 = vpop.f32.mrb[0].mxu0
        %3210 = vdwg.mxu0
        %v3211 = vadd.f32 %v3170, %v3206
        %3212 = vmatprep.subr.bf16.mxu0 0
        %3213 = vmatpush1.bf16.msra.mxu0 %v2793
        %3214 = vmatprep.subr.bf16.mxu0 0
        %3215 = vmatpush1.bf16.msra.mxu0 %v2794
        %3216 = vmatprep.subr.bf16.mxu0 0
        %3217 = vmatpush1.bf16.msra.mxu0 %v2795
        %3218 = vmatprep.subr.bf16.mxu0 0
        %3219 = vmatpush1.bf16.msra.mxu0 %v2804
        %3220 = vmatprep.subr.bf16.mxu0 0
        %3221 = vmatpush1.bf16.msra.mxu0 0
        %3222 = vmatprep.subr.bf16.mxu0 0
        %3223 = vmatpush1.bf16.msra.mxu0 0
        %3224 = vmatprep.subr.bf16.mxu0 0
        %3225 = vmatpush1.bf16.msra.mxu0 0
        %3226 = vmatprep.subr.bf16.mxu0 0
        %3227 = vmatpush1.bf16.msra.mxu0 0
        %3228 = vmatprep.subr.bf16.mxu0 0
        %3229 = vmatpush1.bf16.msra.mxu0 0
        %3230 = vmatprep.subr.bf16.mxu0 0
        %3231 = vmatpush1.bf16.msra.mxu0 0
        %3232 = vmatprep.subr.bf16.mxu0 0
        %3233 = vmatpush1.bf16.msra.mxu0 0
        %3234 = vmatprep.subr.bf16.mxu0 0
        %3235 = vmatpush1.bf16.msra.mxu0 0
        %3236 = vmatprep.subr.bf16.mxu0 0
        %3237 = vmatpush1.bf16.msra.mxu0 0
        %3238 = vmatprep.subr.bf16.mxu0 0
        %3239 = vmatpush1.bf16.msra.mxu0 0
        %3240 = vmatprep.subr.bf16.mxu0 0
        %3241 = vmatpush1.bf16.msra.mxu0 0
        %3242 = vmatprep.subr.bf16.mxu0 0
        %3243 = vmatpush1.bf16.msra.mxu0 0
        %3244 = vmatprep.mubr.bf16.mxu0 0
        %3245 = vmatmul.mubr.bf16.gmra.mrb[0].mxu0 %v2871
        %v3246 = vpop.f32.mrb[0].mxu0
        %v3247 = vadd.f32 0.0, %v3246
        %v3248 = vpop.f32.mrb[0].mxu0
        %v3249 = vpop.f32.mrb[0].mxu0
        %v3250 = vpop.f32.mrb[0].mxu0
        %3251 = vdwg.mxu0
        %v3252 = vadd.f32 %v3211, %v3247
        %3253 = vrot.lane.b32.xlu0 %v2286, 120
        %v3254 = vpop.permute.xlu0 %3253
        %v3256 = vsel %vm2311, %v3254, 0
        %3258 = vmatprep.subr.bf16.mxu0 0
        %3259 = vmatpush1.bf16.msra.mxu0 %v2863
        %3260 = vmatprep.subr.bf16.mxu0 0
        %3261 = vmatpush1.bf16.msra.mxu0 %v2864
        %3262 = vmatprep.subr.bf16.mxu0 0
        %3263 = vmatpush1.bf16.msra.mxu0 %v2865
        %3264 = vmatprep.subr.bf16.mxu0 0
        %3265 = vmatpush1.bf16.msra.mxu0 %v2874
        %3266 = vmatprep.subr.bf16.mxu0 0
        %3267 = vmatpush1.bf16.msra.mxu0 0
        %3268 = vmatprep.subr.bf16.mxu0 0
        %3269 = vmatpush1.bf16.msra.mxu0 0
        %3270 = vmatprep.subr.bf16.mxu0 0
        %3271 = vmatpush1.bf16.msra.mxu0 0
        %3272 = vmatprep.subr.bf16.mxu0 0
        %3273 = vmatpush1.bf16.msra.mxu0 0
        %3274 = vmatprep.subr.bf16.mxu0 0
        %3275 = vmatpush1.bf16.msra.mxu0 0
        %3276 = vmatprep.subr.bf16.mxu0 0
        %3277 = vmatpush1.bf16.msra.mxu0 0
        %3278 = vmatprep.subr.bf16.mxu0 0
        %3279 = vmatpush1.bf16.msra.mxu0 0
        %3280 = vmatprep.subr.bf16.mxu0 0
        %3281 = vmatpush1.bf16.msra.mxu0 0
        %3282 = vmatprep.subr.bf16.mxu0 0
        %3283 = vmatpush1.bf16.msra.mxu0 0
        %3284 = vmatprep.subr.bf16.mxu0 0
        %3285 = vmatpush1.bf16.msra.mxu0 0
        %3286 = vmatprep.subr.bf16.mxu0 0
        %3287 = vmatpush1.bf16.msra.mxu0 0
        %3288 = vmatprep.subr.bf16.mxu0 0
        %3289 = vmatpush1.bf16.msra.mxu0 0
        %3290 = vmatprep.mubr.bf16.mxu0 0
        %3291 = vmatmul.mubr.bf16.gmra.mrb[0].mxu0 %v3256
        %v3292 = vpop.f32.mrb[0].mxu0
        %v3293 = vadd.f32 0.0, %v3292
        %v3294 = vpop.f32.mrb[0].mxu0
        %v3295 = vpop.f32.mrb[0].mxu0
        %v3296 = vpop.f32.mrb[0].mxu0
        %3297 = vdwg.mxu0
        %v3298 = vadd.f32 %v3252, %v3293
        %v3299 = vmax.f32 %v2916, %v3298
        %3300 = vmatprep.subr.bf16.mxu0 0
        %3301 = vmatpush1.bf16.msra.mxu0 %v2304
        %3302 = vmatprep.subr.bf16.mxu0 0
        %3303 = vmatpush1.bf16.msra.mxu0 %v2305
        %3304 = vmatprep.subr.bf16.mxu0 0
        %3305 = vmatpush1.bf16.msra.mxu0 %v2306
        %3306 = vmatprep.subr.bf16.mxu0 0
        %3307 = vmatpush1.bf16.msra.mxu0 %v2317
        %3308 = vmatprep.subr.bf16.mxu0 0
        %3309 = vmatpush1.bf16.msra.mxu0 0
        %3310 = vmatprep.subr.bf16.mxu0 0
        %3311 = vmatpush1.bf16.msra.mxu0 0
        %3312 = vmatprep.subr.bf16.mxu0 0
        %3313 = vmatpush1.bf16.msra.mxu0 0
        %3314 = vmatprep.subr.bf16.mxu0 0
        %3315 = vmatpush1.bf16.msra.mxu0 0
        %3316 = vmatprep.subr.bf16.mxu0 0
        %3317 = vmatpush1.bf16.msra.mxu0 0
        %3318 = vmatprep.subr.bf16.mxu0 0
        %3319 = vmatpush1.bf16.msra.mxu0 0
        %3320 = vmatprep.subr.bf16.mxu0 0
        %3321 = vmatpush1.bf16.msra.mxu0 0
        %3322 = vmatprep.subr.bf16.mxu0 0
        %3323 = vmatpush1.bf16.msra.mxu0 0
        %3324 = vmatprep.subr.bf16.mxu0 0
        %3325 = vmatpush1.bf16.msra.mxu0 0
        %3326 = vmatprep.subr.bf16.mxu0 0
        %3327 = vmatpush1.bf16.msra.mxu0 0
        %3328 = vmatprep.subr.bf16.mxu0 0
        %3329 = vmatpush1.bf16.msra.mxu0 0
        %3330 = vmatprep.subr.bf16.mxu0 0
        %3331 = vmatpush1.bf16.msra.mxu0 0
        %3332 = vmatprep.mubr.bf16.mxu0 0
        %3333 = vmatmul.mubr.bf16.gmra.mrb[0].mxu0 %v2592
        %v3334 = vpop.f32.mrb[0].mxu0
        %v3335 = vadd.f32 0.0, %v3334
        %v3336 = vpop.f32.mrb[0].mxu0
        %v3337 = vpop.f32.mrb[0].mxu0
        %v3338 = vpop.f32.mrb[0].mxu0
        %3339 = vdwg.mxu0
        %3340 = vmatprep.subr.bf16.mxu0 0
        %3341 = vmatpush1.bf16.msra.mxu0 %v2376
        %3342 = vmatprep.subr.bf16.mxu0 0
        %3343 = vmatpush1.bf16.msra.mxu0 %v2377
        %3344 = vmatprep.subr.bf16.mxu0 0
        %3345 = vmatpush1.bf16.msra.mxu0 %v2378
        %3346 = vmatprep.subr.bf16.mxu0 0
        %3347 = vmatpush1.bf16.msra.mxu0 %v2387
        %3348 = vmatprep.subr.bf16.mxu0 0
        %3349 = vmatpush1.bf16.msra.mxu0 0
        %3350 = vmatprep.subr.bf16.mxu0 0
        %3351 = vmatpush1.bf16.msra.mxu0 0
        %3352 = vmatprep.subr.bf16.mxu0 0
        %3353 = vmatpush1.bf16.msra.mxu0 0
        %3354 = vmatprep.subr.bf16.mxu0 0
        %3355 = vmatpush1.bf16.msra.mxu0 0
        %3356 = vmatprep.subr.bf16.mxu0 0
        %3357 = vmatpush1.bf16.msra.mxu0 0
        %3358 = vmatprep.subr.bf16.mxu0 0
        %3359 = vmatpush1.bf16.msra.mxu0 0
        %3360 = vmatprep.subr.bf16.mxu0 0
        %3361 = vmatpush1.bf16.msra.mxu0 0
        %3362 = vmatprep.subr.bf16.mxu0 0
        %3363 = vmatpush1.bf16.msra.mxu0 0
        %3364 = vmatprep.subr.bf16.mxu0 0
        %3365 = vmatpush1.bf16.msra.mxu0 0
        %3366 = vmatprep.subr.bf16.mxu0 0
        %3367 = vmatpush1.bf16.msra.mxu0 0
        %3368 = vmatprep.subr.bf16.mxu0 0
        %3369 = vmatpush1.bf16.msra.mxu0 0
        %3370 = vmatprep.subr.bf16.mxu0 0
        %3371 = vmatpush1.bf16.msra.mxu0 0
        %3372 = vmatprep.mubr.bf16.mxu0 0
        %3373 = vmatmul.mubr.bf16.gmra.mrb[0].mxu0 %v2524
        %v3374 = vpop.f32.mrb[0].mxu0
        %v3375 = vadd.f32 %v3335, %v3374
        %v3376 = vpop.f32.mrb[0].mxu0
        %v3377 = vpop.f32.mrb[0].mxu0
        %v3378 = vpop.f32.mrb[0].mxu0
        %3379 = vdwg.mxu0
        %3380 = vmatprep.subr.bf16.mxu0 0
        %3381 = vmatpush1.bf16.msra.mxu0 %v2445
        %3382 = vmatprep.subr.bf16.mxu0 0
        %3383 = vmatpush1.bf16.msra.mxu0 %v2446
        %3384 = vmatprep.subr.bf16.mxu0 0
        %3385 = vmatpush1.bf16.msra.mxu0 %v2447
        %3386 = vmatprep.subr.bf16.mxu0 0
        %3387 = vmatpush1.bf16.msra.mxu0 %v2456
        %3388 = vmatprep.subr.bf16.mxu0 0
        %3389 = vmatpush1.bf16.msra.mxu0 0
        %3390 = vmatprep.subr.bf16.mxu0 0
        %3391 = vmatpush1.bf16.msra.mxu0 0
        %3392 = vmatprep.subr.bf16.mxu0 0
        %3393 = vmatpush1.bf16.msra.mxu0 0
        %3394 = vmatprep.subr.bf16.mxu0 0
        %3395 = vmatpush1.bf16.msra.mxu0 0
        %3396 = vmatprep.subr.bf16.mxu0 0
        %3397 = vmatpush1.bf16.msra.mxu0 0
        %3398 = vmatprep.subr.bf16.mxu0 0
        %3399 = vmatpush1.bf16.msra.mxu0 0
        %3400 = vmatprep.subr.bf16.mxu0 0
        %3401 = vmatpush1.bf16.msra.mxu0 0
        %3402 = vmatprep.subr.bf16.mxu0 0
        %3403 = vmatpush1.bf16.msra.mxu0 0
        %3404 = vmatprep.subr.bf16.mxu0 0
        %3405 = vmatpush1.bf16.msra.mxu0 0
        %3406 = vmatprep.subr.bf16.mxu0 0
        %3407 = vmatpush1.bf16.msra.mxu0 0
        %3408 = vmatprep.subr.bf16.mxu0 0
        %3409 = vmatpush1.bf16.msra.mxu0 0
        %3410 = vmatprep.subr.bf16.mxu0 0
        %3411 = vmatpush1.bf16.msra.mxu0 0
        %3412 = vmatprep.mubr.bf16.mxu0 0
        %3413 = vmatmul.mubr.bf16.gmra.mrb[0].mxu0 %v2662
        %v3414 = vpop.f32.mrb[0].mxu0
        %v3415 = vadd.f32 0.0, %v3414
        %v3416 = vpop.f32.mrb[0].mxu0
        %v3417 = vpop.f32.mrb[0].mxu0
        %v3418 = vpop.f32.mrb[0].mxu0
        %3419 = vdwg.mxu0
        %v3420 = vadd.f32 %v3375, %v3415
        %3421 = vmatprep.subr.bf16.mxu0 0
        %3422 = vmatpush1.bf16.msra.mxu0 %v2516
        %3423 = vmatprep.subr.bf16.mxu0 0
        %3424 = vmatpush1.bf16.msra.mxu0 %v2517
        %3425 = vmatprep.subr.bf16.mxu0 0
        %3426 = vmatpush1.bf16.msra.mxu0 %v2518
        %3427 = vmatprep.subr.bf16.mxu0 0
        %3428 = vmatpush1.bf16.msra.mxu0 %v2527
        %3429 = vmatprep.subr.bf16.mxu0 0
        %3430 = vmatpush1.bf16.msra.mxu0 0
        %3431 = vmatprep.subr.bf16.mxu0 0
        %3432 = vmatpush1.bf16.msra.mxu0 0
        %3433 = vmatprep.subr.bf16.mxu0 0
        %3434 = vmatpush1.bf16.msra.mxu0 0
        %3435 = vmatprep.subr.bf16.mxu0 0
        %3436 = vmatpush1.bf16.msra.mxu0 0
        %3437 = vmatprep.subr.bf16.mxu0 0
        %3438 = vmatpush1.bf16.msra.mxu0 0
        %3439 = vmatprep.subr.bf16.mxu0 0
        %3440 = vmatpush1.bf16.msra.mxu0 0
        %3441 = vmatprep.subr.bf16.mxu0 0
        %3442 = vmatpush1.bf16.msra.mxu0 0
        %3443 = vmatprep.subr.bf16.mxu0 0
        %3444 = vmatpush1.bf16.msra.mxu0 0
        %3445 = vmatprep.subr.bf16.mxu0 0
        %3446 = vmatpush1.bf16.msra.mxu0 0
        %3447 = vmatprep.subr.bf16.mxu0 0
        %3448 = vmatpush1.bf16.msra.mxu0 0
        %3449 = vmatprep.subr.bf16.mxu0 0
        %3450 = vmatpush1.bf16.msra.mxu0 0
        %3451 = vmatprep.subr.bf16.mxu0 0
        %3452 = vmatpush1.bf16.msra.mxu0 0
        %3453 = vmatprep.mubr.bf16.mxu0 0
        %3454 = vmatmul.mubr.bf16.gmra.mrb[0].mxu0 %v2733
        %v3455 = vpop.f32.mrb[0].mxu0
        %v3456 = vadd.f32 0.0, %v3455
        %v3457 = vpop.f32.mrb[0].mxu0
        %v3458 = vpop.f32.mrb[0].mxu0
        %v3459 = vpop.f32.mrb[0].mxu0
        %3460 = vdwg.mxu0
        %v3461 = vadd.f32 %v3420, %v3456
        %3462 = vmatprep.subr.bf16.mxu0 0
        %3463 = vmatpush1.bf16.msra.mxu0 %v2584
        %3464 = vmatprep.subr.bf16.mxu0 0
        %3465 = vmatpush1.bf16.msra.mxu0 %v2585
        %3466 = vmatprep.subr.bf16.mxu0 0
        %3467 = vmatpush1.bf16.msra.mxu0 %v2586
        %3468 = vmatprep.subr.bf16.mxu0 0
        %3469 = vmatpush1.bf16.msra.mxu0 %v2595
        %3470 = vmatprep.subr.bf16.mxu0 0
        %3471 = vmatpush1.bf16.msra.mxu0 0
        %3472 = vmatprep.subr.bf16.mxu0 0
        %3473 = vmatpush1.bf16.msra.mxu0 0
        %3474 = vmatprep.subr.bf16.mxu0 0
        %3475 = vmatpush1.bf16.msra.mxu0 0
        %3476 = vmatprep.subr.bf16.mxu0 0
        %3477 = vmatpush1.bf16.msra.mxu0 0
        %3478 = vmatprep.subr.bf16.mxu0 0
        %3479 = vmatpush1.bf16.msra.mxu0 0
        %3480 = vmatprep.subr.bf16.mxu0 0
        %3481 = vmatpush1.bf16.msra.mxu0 0
        %3482 = vmatprep.subr.bf16.mxu0 0
        %3483 = vmatpush1.bf16.msra.mxu0 0
        %3484 = vmatprep.subr.bf16.mxu0 0
        %3485 = vmatpush1.bf16.msra.mxu0 0
        %3486 = vmatprep.subr.bf16.mxu0 0
        %3487 = vmatpush1.bf16.msra.mxu0 0
        %3488 = vmatprep.subr.bf16.mxu0 0
        %3489 = vmatpush1.bf16.msra.mxu0 0
        %3490 = vmatprep.subr.bf16.mxu0 0
        %3491 = vmatpush1.bf16.msra.mxu0 0
        %3492 = vmatprep.subr.bf16.mxu0 0
        %3493 = vmatpush1.bf16.msra.mxu0 0
        %3494 = vmatprep.mubr.bf16.mxu0 0
        %3495 = vmatmul.mubr.bf16.gmra.mrb[0].mxu0 %v2801
        %v3496 = vpop.f32.mrb[0].mxu0
        %v3497 = vadd.f32 0.0, %v3496
        %v3498 = vpop.f32.mrb[0].mxu0
        %v3499 = vpop.f32.mrb[0].mxu0
        %v3500 = vpop.f32.mrb[0].mxu0
        %3501 = vdwg.mxu0
        %v3502 = vadd.f32 %v3461, %v3497
        %3503 = vmatprep.subr.bf16.mxu0 0
        %3504 = vmatpush1.bf16.msra.mxu0 %v2654
        %3505 = vmatprep.subr.bf16.mxu0 0
        %3506 = vmatpush1.bf16.msra.mxu0 %v2655
        %3507 = vmatprep.subr.bf16.mxu0 0
        %3508 = vmatpush1.bf16.msra.mxu0 %v2656
        %3509 = vmatprep.subr.bf16.mxu0 0
        %3510 = vmatpush1.bf16.msra.mxu0 %v2665
        %3511 = vmatprep.subr.bf16.mxu0 0
        %3512 = vmatpush1.bf16.msra.mxu0 0
        %3513 = vmatprep.subr.bf16.mxu0 0
        %3514 = vmatpush1.bf16.msra.mxu0 0
        %3515 = vmatprep.subr.bf16.mxu0 0
        %3516 = vmatpush1.bf16.msra.mxu0 0
        %3517 = vmatprep.subr.bf16.mxu0 0
        %3518 = vmatpush1.bf16.msra.mxu0 0
        %3519 = vmatprep.subr.bf16.mxu0 0
        %3520 = vmatpush1.bf16.msra.mxu0 0
        %3521 = vmatprep.subr.bf16.mxu0 0
        %3522 = vmatpush1.bf16.msra.mxu0 0
        %3523 = vmatprep.subr.bf16.mxu0 0
        %3524 = vmatpush1.bf16.msra.mxu0 0
        %3525 = vmatprep.subr.bf16.mxu0 0
        %3526 = vmatpush1.bf16.msra.mxu0 0
        %3527 = vmatprep.subr.bf16.mxu0 0
        %3528 = vmatpush1.bf16.msra.mxu0 0
        %3529 = vmatprep.subr.bf16.mxu0 0
        %3530 = vmatpush1.bf16.msra.mxu0 0
        %3531 = vmatprep.subr.bf16.mxu0 0
        %3532 = vmatpush1.bf16.msra.mxu0 0
        %3533 = vmatprep.subr.bf16.mxu0 0
        %3534 = vmatpush1.bf16.msra.mxu0 0
        %3535 = vmatprep.mubr.bf16.mxu0 0
        %3536 = vmatmul.mubr.bf16.gmra.mrb[0].mxu0 %v2871
        %v3537 = vpop.f32.mrb[0].mxu0
        %v3538 = vadd.f32 0.0, %v3537
        %v3539 = vpop.f32.mrb[0].mxu0
        %v3540 = vpop.f32.mrb[0].mxu0
        %v3541 = vpop.f32.mrb[0].mxu0
        %3542 = vdwg.mxu0
        %v3543 = vadd.f32 %v3502, %v3538
        %3545 = vrot.lane.b32.xlu0 %v2289, 64
        %v3546 = vpop.permute.xlu0 %3545
        %v3548 = vsel %vm2311, %v3546, 0
        %3550 = vmatprep.subr.bf16.mxu0 0
        %3551 = vmatpush1.bf16.msra.mxu0 %v2725
        %3552 = vmatprep.subr.bf16.mxu0 0
        %3553 = vmatpush1.bf16.msra.mxu0 %v2726
        %3554 = vmatprep.subr.bf16.mxu0 0
        %3555 = vmatpush1.bf16.msra.mxu0 %v2727
        %3556 = vmatprep.subr.bf16.mxu0 0
        %3557 = vmatpush1.bf16.msra.mxu0 %v2736
        %3558 = vmatprep.subr.bf16.mxu0 0
        %3559 = vmatpush1.bf16.msra.mxu0 0
        %3560 = vmatprep.subr.bf16.mxu0 0
        %3561 = vmatpush1.bf16.msra.mxu0 0
        %3562 = vmatprep.subr.bf16.mxu0 0
        %3563 = vmatpush1.bf16.msra.mxu0 0
        %3564 = vmatprep.subr.bf16.mxu0 0
        %3565 = vmatpush1.bf16.msra.mxu0 0
        %3566 = vmatprep.subr.bf16.mxu0 0
        %3567 = vmatpush1.bf16.msra.mxu0 0
        %3568 = vmatprep.subr.bf16.mxu0 0
        %3569 = vmatpush1.bf16.msra.mxu0 0
        %3570 = vmatprep.subr.bf16.mxu0 0
        %3571 = vmatpush1.bf16.msra.mxu0 0
        %3572 = vmatprep.subr.bf16.mxu0 0
        %3573 = vmatpush1.bf16.msra.mxu0 0
        %3574 = vmatprep.subr.bf16.mxu0 0
        %3575 = vmatpush1.bf16.msra.mxu0 0
        %3576 = vmatprep.subr.bf16.mxu0 0
        %3577 = vmatpush1.bf16.msra.mxu0 0
        %3578 = vmatprep.subr.bf16.mxu0 0
        %3579 = vmatpush1.bf16.msra.mxu0 0
        %3580 = vmatprep.subr.bf16.mxu0 0
        %3581 = vmatpush1.bf16.msra.mxu0 0
        %3582 = vmatprep.mubr.bf16.mxu0 0
        %3583 = vmatmul.mubr.bf16.gmra.mrb[0].mxu0 %v3548
        %v3584 = vpop.f32.mrb[0].mxu0
        %v3585 = vadd.f32 0.0, %v3584
        %v3586 = vpop.f32.mrb[0].mxu0
        %v3587 = vpop.f32.mrb[0].mxu0
        %v3588 = vpop.f32.mrb[0].mxu0
        %3589 = vdwg.mxu0
        %v3590 = vadd.f32 %v3543, %v3585
        %v3592 = vsel %vm2311, %v2289, 0
        %3594 = vmatprep.subr.bf16.mxu0 0
        %3595 = vmatpush1.bf16.msra.mxu0 %v2793
        %3596 = vmatprep.subr.bf16.mxu0 0
        %3597 = vmatpush1.bf16.msra.mxu0 %v2794
        %3598 = vmatprep.subr.bf16.mxu0 0
        %3599 = vmatpush1.bf16.msra.mxu0 %v2795
        %3600 = vmatprep.subr.bf16.mxu0 0
        %3601 = vmatpush1.bf16.msra.mxu0 %v2804
        %3602 = vmatprep.subr.bf16.mxu0 0
        %3603 = vmatpush1.bf16.msra.mxu0 0
        %3604 = vmatprep.subr.bf16.mxu0 0
        %3605 = vmatpush1.bf16.msra.mxu0 0
        %3606 = vmatprep.subr.bf16.mxu0 0
        %3607 = vmatpush1.bf16.msra.mxu0 0
        %3608 = vmatprep.subr.bf16.mxu0 0
        %3609 = vmatpush1.bf16.msra.mxu0 0
        %3610 = vmatprep.subr.bf16.mxu0 0
        %3611 = vmatpush1.bf16.msra.mxu0 0
        %3612 = vmatprep.subr.bf16.mxu0 0
        %3613 = vmatpush1.bf16.msra.mxu0 0
        %3614 = vmatprep.subr.bf16.mxu0 0
        %3615 = vmatpush1.bf16.msra.mxu0 0
        %3616 = vmatprep.subr.bf16.mxu0 0
        %3617 = vmatpush1.bf16.msra.mxu0 0
        %3618 = vmatprep.subr.bf16.mxu0 0
        %3619 = vmatpush1.bf16.msra.mxu0 0
        %3620 = vmatprep.subr.bf16.mxu0 0
        %3621 = vmatpush1.bf16.msra.mxu0 0
        %3622 = vmatprep.subr.bf16.mxu0 0
        %3623 = vmatpush1.bf16.msra.mxu0 0
        %3624 = vmatprep.subr.bf16.mxu0 0
        %3625 = vmatpush1.bf16.msra.mxu0 0
        %3626 = vmatprep.mubr.bf16.mxu0 0
        %3627 = vmatmul.mubr.bf16.gmra.mrb[0].mxu0 %v3592
        %v3628 = vpop.f32.mrb[0].mxu0
        %v3629 = vadd.f32 0.0, %v3628
        %v3630 = vpop.f32.mrb[0].mxu0
        %v3631 = vpop.f32.mrb[0].mxu0
        %v3632 = vpop.f32.mrb[0].mxu0
        %3633 = vdwg.mxu0
        %v3634 = vadd.f32 %v3590, %v3629
        %3635 = vrot.lane.b32.xlu0 %v2289, 56
        %v3636 = vpop.permute.xlu0 %3635
        %v3638 = vsel %vm2311, %v3636, 0
        %3640 = vmatprep.subr.bf16.mxu0 0
        %3641 = vmatpush1.bf16.msra.mxu0 %v2863
        %3642 = vmatprep.subr.bf16.mxu0 0
        %3643 = vmatpush1.bf16.msra.mxu0 %v2864
        %3644 = vmatprep.subr.bf16.mxu0 0
        %3645 = vmatpush1.bf16.msra.mxu0 %v2865
        %3646 = vmatprep.subr.bf16.mxu0 0
        %3647 = vmatpush1.bf16.msra.mxu0 %v2874
        %3648 = vmatprep.subr.bf16.mxu0 0
        %3649 = vmatpush1.bf16.msra.mxu0 0
        %3650 = vmatprep.subr.bf16.mxu0 0
        %3651 = vmatpush1.bf16.msra.mxu0 0
        %3652 = vmatprep.subr.bf16.mxu0 0
        %3653 = vmatpush1.bf16.msra.mxu0 0
        %3654 = vmatprep.subr.bf16.mxu0 0
        %3655 = vmatpush1.bf16.msra.mxu0 0
        %3656 = vmatprep.subr.bf16.mxu0 0
        %3657 = vmatpush1.bf16.msra.mxu0 0
        %3658 = vmatprep.subr.bf16.mxu0 0
        %3659 = vmatpush1.bf16.msra.mxu0 0
        %3660 = vmatprep.subr.bf16.mxu0 0
        %3661 = vmatpush1.bf16.msra.mxu0 0
        %3662 = vmatprep.subr.bf16.mxu0 0
        %3663 = vmatpush1.bf16.msra.mxu0 0
        %3664 = vmatprep.subr.bf16.mxu0 0
        %3665 = vmatpush1.bf16.msra.mxu0 0
        %3666 = vmatprep.subr.bf16.mxu0 0
        %3667 = vmatpush1.bf16.msra.mxu0 0
        %3668 = vmatprep.subr.bf16.mxu0 0
        %3669 = vmatpush1.bf16.msra.mxu0 0
        %3670 = vmatprep.subr.bf16.mxu0 0
        %3671 = vmatpush1.bf16.msra.mxu0 0
        %3672 = vmatprep.mubr.bf16.mxu0 0
        %3673 = vmatmul.mubr.bf16.gmra.mrb[0].mxu0 %v3638
        %v3674 = vpop.f32.mrb[0].mxu0
        %v3675 = vadd.f32 0.0, %v3674
        %v3676 = vpop.f32.mrb[0].mxu0
        %v3677 = vpop.f32.mrb[0].mxu0
        %v3678 = vpop.f32.mrb[0].mxu0
        %3679 = vdwg.mxu0
        %v3680 = vadd.f32 %v3634, %v3675
        %v3681 = vmax.f32 %v3299, %v3680
        %3682 = vmatprep.subr.bf16.mxu0 0
        %3683 = vmatpush1.bf16.msra.mxu0 %v2304
        %3684 = vmatprep.subr.bf16.mxu0 0
        %3685 = vmatpush1.bf16.msra.mxu0 %v2305
        %3686 = vmatprep.subr.bf16.mxu0 0
        %3687 = vmatpush1.bf16.msra.mxu0 %v2306
        %3688 = vmatprep.subr.bf16.mxu0 0
        %3689 = vmatpush1.bf16.msra.mxu0 %v2317
        %3690 = vmatprep.subr.bf16.mxu0 0
        %3691 = vmatpush1.bf16.msra.mxu0 0
        %3692 = vmatprep.subr.bf16.mxu0 0
        %3693 = vmatpush1.bf16.msra.mxu0 0
        %3694 = vmatprep.subr.bf16.mxu0 0
        %3695 = vmatpush1.bf16.msra.mxu0 0
        %3696 = vmatprep.subr.bf16.mxu0 0
        %3697 = vmatpush1.bf16.msra.mxu0 0
        %3698 = vmatprep.subr.bf16.mxu0 0
        %3699 = vmatpush1.bf16.msra.mxu0 0
        %3700 = vmatprep.subr.bf16.mxu0 0
        %3701 = vmatpush1.bf16.msra.mxu0 0
        %3702 = vmatprep.subr.bf16.mxu0 0
        %3703 = vmatpush1.bf16.msra.mxu0 0
        %3704 = vmatprep.subr.bf16.mxu0 0
        %3705 = vmatpush1.bf16.msra.mxu0 0
        %3706 = vmatprep.subr.bf16.mxu0 0
        %3707 = vmatpush1.bf16.msra.mxu0 0
        %3708 = vmatprep.subr.bf16.mxu0 0
        %3709 = vmatpush1.bf16.msra.mxu0 0
        %3710 = vmatprep.subr.bf16.mxu0 0
        %3711 = vmatpush1.bf16.msra.mxu0 0
        %3712 = vmatprep.subr.bf16.mxu0 0
        %3713 = vmatpush1.bf16.msra.mxu0 0
        %3714 = vmatprep.mubr.bf16.mxu0 0
        %3715 = vmatmul.mubr.bf16.gmra.mrb[0].mxu0 %v2662
        %v3716 = vpop.f32.mrb[0].mxu0
        %v3717 = vadd.f32 0.0, %v3716
        %v3718 = vpop.f32.mrb[0].mxu0
        %v3719 = vpop.f32.mrb[0].mxu0
        %v3720 = vpop.f32.mrb[0].mxu0
        %3721 = vdwg.mxu0
        %3722 = vmatprep.subr.bf16.mxu0 0
        %3723 = vmatpush1.bf16.msra.mxu0 %v2376
        %3724 = vmatprep.subr.bf16.mxu0 0
        %3725 = vmatpush1.bf16.msra.mxu0 %v2377
        %3726 = vmatprep.subr.bf16.mxu0 0
        %3727 = vmatpush1.bf16.msra.mxu0 %v2378
        %3728 = vmatprep.subr.bf16.mxu0 0
        %3729 = vmatpush1.bf16.msra.mxu0 %v2387
        %3730 = vmatprep.subr.bf16.mxu0 0
        %3731 = vmatpush1.bf16.msra.mxu0 0
        %3732 = vmatprep.subr.bf16.mxu0 0
        %3733 = vmatpush1.bf16.msra.mxu0 0
        %3734 = vmatprep.subr.bf16.mxu0 0
        %3735 = vmatpush1.bf16.msra.mxu0 0
        %3736 = vmatprep.subr.bf16.mxu0 0
        %3737 = vmatpush1.bf16.msra.mxu0 0
        %3738 = vmatprep.subr.bf16.mxu0 0
        %3739 = vmatpush1.bf16.msra.mxu0 0
        %3740 = vmatprep.subr.bf16.mxu0 0
        %3741 = vmatpush1.bf16.msra.mxu0 0
        %3742 = vmatprep.subr.bf16.mxu0 0
        %3743 = vmatpush1.bf16.msra.mxu0 0
        %3744 = vmatprep.subr.bf16.mxu0 0
        %3745 = vmatpush1.bf16.msra.mxu0 0
        %3746 = vmatprep.subr.bf16.mxu0 0
        %3747 = vmatpush1.bf16.msra.mxu0 0
        %3748 = vmatprep.subr.bf16.mxu0 0
        %3749 = vmatpush1.bf16.msra.mxu0 0
        %3750 = vmatprep.subr.bf16.mxu0 0
        %3751 = vmatpush1.bf16.msra.mxu0 0
        %3752 = vmatprep.subr.bf16.mxu0 0
        %3753 = vmatpush1.bf16.msra.mxu0 0
        %3754 = vmatprep.mubr.bf16.mxu0 0
        %3755 = vmatmul.mubr.bf16.gmra.mrb[0].mxu0 %v2592
        %v3756 = vpop.f32.mrb[0].mxu0
        %v3757 = vadd.f32 %v3717, %v3756
        %v3758 = vpop.f32.mrb[0].mxu0
        %v3759 = vpop.f32.mrb[0].mxu0
        %v3760 = vpop.f32.mrb[0].mxu0
        %3761 = vdwg.mxu0
        %3762 = vmatprep.subr.bf16.mxu0 0
        %3763 = vmatpush1.bf16.msra.mxu0 %v2445
        %3764 = vmatprep.subr.bf16.mxu0 0
        %3765 = vmatpush1.bf16.msra.mxu0 %v2446
        %3766 = vmatprep.subr.bf16.mxu0 0
        %3767 = vmatpush1.bf16.msra.mxu0 %v2447
        %3768 = vmatprep.subr.bf16.mxu0 0
        %3769 = vmatpush1.bf16.msra.mxu0 %v2456
        %3770 = vmatprep.subr.bf16.mxu0 0
        %3771 = vmatpush1.bf16.msra.mxu0 0
        %3772 = vmatprep.subr.bf16.mxu0 0
        %3773 = vmatpush1.bf16.msra.mxu0 0
        %3774 = vmatprep.subr.bf16.mxu0 0
        %3775 = vmatpush1.bf16.msra.mxu0 0
        %3776 = vmatprep.subr.bf16.mxu0 0
        %3777 = vmatpush1.bf16.msra.mxu0 0
        %3778 = vmatprep.subr.bf16.mxu0 0
        %3779 = vmatpush1.bf16.msra.mxu0 0
        %3780 = vmatprep.subr.bf16.mxu0 0
        %3781 = vmatpush1.bf16.msra.mxu0 0
        %3782 = vmatprep.subr.bf16.mxu0 0
        %3783 = vmatpush1.bf16.msra.mxu0 0
        %3784 = vmatprep.subr.bf16.mxu0 0
        %3785 = vmatpush1.bf16.msra.mxu0 0
        %3786 = vmatprep.subr.bf16.mxu0 0
        %3787 = vmatpush1.bf16.msra.mxu0 0
        %3788 = vmatprep.subr.bf16.mxu0 0
        %3789 = vmatpush1.bf16.msra.mxu0 0
        %3790 = vmatprep.subr.bf16.mxu0 0
        %3791 = vmatpush1.bf16.msra.mxu0 0
        %3792 = vmatprep.subr.bf16.mxu0 0
        %3793 = vmatpush1.bf16.msra.mxu0 0
        %3794 = vmatprep.mubr.bf16.mxu0 0
        %3795 = vmatmul.mubr.bf16.gmra.mrb[0].mxu0 %v3128
        %v3796 = vpop.f32.mrb[0].mxu0
        %v3797 = vadd.f32 0.0, %v3796
        %v3798 = vpop.f32.mrb[0].mxu0
        %v3799 = vpop.f32.mrb[0].mxu0
        %v3800 = vpop.f32.mrb[0].mxu0
        %3801 = vdwg.mxu0
        %v3802 = vadd.f32 %v3757, %v3797
        %3803 = vmatprep.subr.bf16.mxu0 0
        %3804 = vmatpush1.bf16.msra.mxu0 %v2516
        %3805 = vmatprep.subr.bf16.mxu0 0
        %3806 = vmatpush1.bf16.msra.mxu0 %v2517
        %3807 = vmatprep.subr.bf16.mxu0 0
        %3808 = vmatpush1.bf16.msra.mxu0 %v2518
        %3809 = vmatprep.subr.bf16.mxu0 0
        %3810 = vmatpush1.bf16.msra.mxu0 %v2527
        %3811 = vmatprep.subr.bf16.mxu0 0
        %3812 = vmatpush1.bf16.msra.mxu0 0
        %3813 = vmatprep.subr.bf16.mxu0 0
        %3814 = vmatpush1.bf16.msra.mxu0 0
        %3815 = vmatprep.subr.bf16.mxu0 0
        %3816 = vmatpush1.bf16.msra.mxu0 0
        %3817 = vmatprep.subr.bf16.mxu0 0
        %3818 = vmatpush1.bf16.msra.mxu0 0
        %3819 = vmatprep.subr.bf16.mxu0 0
        %3820 = vmatpush1.bf16.msra.mxu0 0
        %3821 = vmatprep.subr.bf16.mxu0 0
        %3822 = vmatpush1.bf16.msra.mxu0 0
        %3823 = vmatprep.subr.bf16.mxu0 0
        %3824 = vmatpush1.bf16.msra.mxu0 0
        %3825 = vmatprep.subr.bf16.mxu0 0
        %3826 = vmatpush1.bf16.msra.mxu0 0
        %3827 = vmatprep.subr.bf16.mxu0 0
        %3828 = vmatpush1.bf16.msra.mxu0 0
        %3829 = vmatprep.subr.bf16.mxu0 0
        %3830 = vmatpush1.bf16.msra.mxu0 0
        %3831 = vmatprep.subr.bf16.mxu0 0
        %3832 = vmatpush1.bf16.msra.mxu0 0
        %3833 = vmatprep.subr.bf16.mxu0 0
        %3834 = vmatpush1.bf16.msra.mxu0 0
        %3835 = vmatprep.mubr.bf16.mxu0 0
        %3836 = vmatmul.mubr.bf16.gmra.mrb[0].mxu0 %v2801
        %v3837 = vpop.f32.mrb[0].mxu0
        %v3838 = vadd.f32 0.0, %v3837
        %v3839 = vpop.f32.mrb[0].mxu0
        %v3840 = vpop.f32.mrb[0].mxu0
        %v3841 = vpop.f32.mrb[0].mxu0
        %3842 = vdwg.mxu0
        %v3843 = vadd.f32 %v3802, %v3838
        %3844 = vmatprep.subr.bf16.mxu0 0
        %3845 = vmatpush1.bf16.msra.mxu0 %v2584
        %3846 = vmatprep.subr.bf16.mxu0 0
        %3847 = vmatpush1.bf16.msra.mxu0 %v2585
        %3848 = vmatprep.subr.bf16.mxu0 0
        %3849 = vmatpush1.bf16.msra.mxu0 %v2586
        %3850 = vmatprep.subr.bf16.mxu0 0
        %3851 = vmatpush1.bf16.msra.mxu0 %v2595
        %3852 = vmatprep.subr.bf16.mxu0 0
        %3853 = vmatpush1.bf16.msra.mxu0 0
        %3854 = vmatprep.subr.bf16.mxu0 0
        %3855 = vmatpush1.bf16.msra.mxu0 0
        %3856 = vmatprep.subr.bf16.mxu0 0
        %3857 = vmatpush1.bf16.msra.mxu0 0
        %3858 = vmatprep.subr.bf16.mxu0 0
        %3859 = vmatpush1.bf16.msra.mxu0 0
        %3860 = vmatprep.subr.bf16.mxu0 0
        %3861 = vmatpush1.bf16.msra.mxu0 0
        %3862 = vmatprep.subr.bf16.mxu0 0
        %3863 = vmatpush1.bf16.msra.mxu0 0
        %3864 = vmatprep.subr.bf16.mxu0 0
        %3865 = vmatpush1.bf16.msra.mxu0 0
        %3866 = vmatprep.subr.bf16.mxu0 0
        %3867 = vmatpush1.bf16.msra.mxu0 0
        %3868 = vmatprep.subr.bf16.mxu0 0
        %3869 = vmatpush1.bf16.msra.mxu0 0
        %3870 = vmatprep.subr.bf16.mxu0 0
        %3871 = vmatpush1.bf16.msra.mxu0 0
        %3872 = vmatprep.subr.bf16.mxu0 0
        %3873 = vmatpush1.bf16.msra.mxu0 0
        %3874 = vmatprep.subr.bf16.mxu0 0
        %3875 = vmatpush1.bf16.msra.mxu0 0
        %3876 = vmatprep.mubr.bf16.mxu0 0
        %3877 = vmatmul.mubr.bf16.gmra.mrb[0].mxu0 %v2871
        %v3878 = vpop.f32.mrb[0].mxu0
        %v3879 = vadd.f32 0.0, %v3878
        %v3880 = vpop.f32.mrb[0].mxu0
        %v3881 = vpop.f32.mrb[0].mxu0
        %v3882 = vpop.f32.mrb[0].mxu0
        %3883 = vdwg.mxu0
        %v3884 = vadd.f32 %v3843, %v3879
        %3885 = vmatprep.subr.bf16.mxu0 0
        %3886 = vmatpush1.bf16.msra.mxu0 %v2654
        %3887 = vmatprep.subr.bf16.mxu0 0
        %3888 = vmatpush1.bf16.msra.mxu0 %v2655
        %3889 = vmatprep.subr.bf16.mxu0 0
        %3890 = vmatpush1.bf16.msra.mxu0 %v2656
        %3891 = vmatprep.subr.bf16.mxu0 0
        %3892 = vmatpush1.bf16.msra.mxu0 %v2665
        %3893 = vmatprep.subr.bf16.mxu0 0
        %3894 = vmatpush1.bf16.msra.mxu0 0
        %3895 = vmatprep.subr.bf16.mxu0 0
        %3896 = vmatpush1.bf16.msra.mxu0 0
        %3897 = vmatprep.subr.bf16.mxu0 0
        %3898 = vmatpush1.bf16.msra.mxu0 0
        %3899 = vmatprep.subr.bf16.mxu0 0
        %3900 = vmatpush1.bf16.msra.mxu0 0
        %3901 = vmatprep.subr.bf16.mxu0 0
        %3902 = vmatpush1.bf16.msra.mxu0 0
        %3903 = vmatprep.subr.bf16.mxu0 0
        %3904 = vmatpush1.bf16.msra.mxu0 0
        %3905 = vmatprep.subr.bf16.mxu0 0
        %3906 = vmatpush1.bf16.msra.mxu0 0
        %3907 = vmatprep.subr.bf16.mxu0 0
        %3908 = vmatpush1.bf16.msra.mxu0 0
        %3909 = vmatprep.subr.bf16.mxu0 0
        %3910 = vmatpush1.bf16.msra.mxu0 0
        %3911 = vmatprep.subr.bf16.mxu0 0
        %3912 = vmatpush1.bf16.msra.mxu0 0
        %3913 = vmatprep.subr.bf16.mxu0 0
        %3914 = vmatpush1.bf16.msra.mxu0 0
        %3915 = vmatprep.subr.bf16.mxu0 0
        %3916 = vmatpush1.bf16.msra.mxu0 0
        %3917 = vmatprep.mubr.bf16.mxu0 0
        %3918 = vmatmul.mubr.bf16.gmra.mrb[0].mxu0 %v3256
        %v3919 = vpop.f32.mrb[0].mxu0
        %v3920 = vadd.f32 0.0, %v3919
        %v3921 = vpop.f32.mrb[0].mxu0
        %v3922 = vpop.f32.mrb[0].mxu0
        %v3923 = vpop.f32.mrb[0].mxu0
        %3924 = vdwg.mxu0
        %v3925 = vadd.f32 %v3884, %v3920
        %3926 = vmatprep.subr.bf16.mxu0 0
        %3927 = vmatpush1.bf16.msra.mxu0 %v2725
        %3928 = vmatprep.subr.bf16.mxu0 0
        %3929 = vmatpush1.bf16.msra.mxu0 %v2726
        %3930 = vmatprep.subr.bf16.mxu0 0
        %3931 = vmatpush1.bf16.msra.mxu0 %v2727
        %3932 = vmatprep.subr.bf16.mxu0 0
        %3933 = vmatpush1.bf16.msra.mxu0 %v2736
        %3934 = vmatprep.subr.bf16.mxu0 0
        %3935 = vmatpush1.bf16.msra.mxu0 0
        %3936 = vmatprep.subr.bf16.mxu0 0
        %3937 = vmatpush1.bf16.msra.mxu0 0
        %3938 = vmatprep.subr.bf16.mxu0 0
        %3939 = vmatpush1.bf16.msra.mxu0 0
        %3940 = vmatprep.subr.bf16.mxu0 0
        %3941 = vmatpush1.bf16.msra.mxu0 0
        %3942 = vmatprep.subr.bf16.mxu0 0
        %3943 = vmatpush1.bf16.msra.mxu0 0
        %3944 = vmatprep.subr.bf16.mxu0 0
        %3945 = vmatpush1.bf16.msra.mxu0 0
        %3946 = vmatprep.subr.bf16.mxu0 0
        %3947 = vmatpush1.bf16.msra.mxu0 0
        %3948 = vmatprep.subr.bf16.mxu0 0
        %3949 = vmatpush1.bf16.msra.mxu0 0
        %3950 = vmatprep.subr.bf16.mxu0 0
        %3951 = vmatpush1.bf16.msra.mxu0 0
        %3952 = vmatprep.subr.bf16.mxu0 0
        %3953 = vmatpush1.bf16.msra.mxu0 0
        %3954 = vmatprep.subr.bf16.mxu0 0
        %3955 = vmatpush1.bf16.msra.mxu0 0
        %3956 = vmatprep.subr.bf16.mxu0 0
        %3957 = vmatpush1.bf16.msra.mxu0 0
        %3958 = vmatprep.mubr.bf16.mxu0 0
        %3959 = vmatmul.mubr.bf16.gmra.mrb[0].mxu0 %v3592
        %v3960 = vpop.f32.mrb[0].mxu0
        %v3961 = vadd.f32 0.0, %v3960
        %v3962 = vpop.f32.mrb[0].mxu0
        %v3963 = vpop.f32.mrb[0].mxu0
        %v3964 = vpop.f32.mrb[0].mxu0
        %3965 = vdwg.mxu0
        %v3966 = vadd.f32 %v3925, %v3961
        %3967 = vmatprep.subr.bf16.mxu0 0
        %3968 = vmatpush1.bf16.msra.mxu0 %v2793
        %3969 = vmatprep.subr.bf16.mxu0 0
        %3970 = vmatpush1.bf16.msra.mxu0 %v2794
        %3971 = vmatprep.subr.bf16.mxu0 0
        %3972 = vmatpush1.bf16.msra.mxu0 %v2795
        %3973 = vmatprep.subr.bf16.mxu0 0
        %3974 = vmatpush1.bf16.msra.mxu0 %v2804
        %3975 = vmatprep.subr.bf16.mxu0 0
        %3976 = vmatpush1.bf16.msra.mxu0 0
        %3977 = vmatprep.subr.bf16.mxu0 0
        %3978 = vmatpush1.bf16.msra.mxu0 0
        %3979 = vmatprep.subr.bf16.mxu0 0
        %3980 = vmatpush1.bf16.msra.mxu0 0
        %3981 = vmatprep.subr.bf16.mxu0 0
        %3982 = vmatpush1.bf16.msra.mxu0 0
        %3983 = vmatprep.subr.bf16.mxu0 0
        %3984 = vmatpush1.bf16.msra.mxu0 0
        %3985 = vmatprep.subr.bf16.mxu0 0
        %3986 = vmatpush1.bf16.msra.mxu0 0
        %3987 = vmatprep.subr.bf16.mxu0 0
        %3988 = vmatpush1.bf16.msra.mxu0 0
        %3989 = vmatprep.subr.bf16.mxu0 0
        %3990 = vmatpush1.bf16.msra.mxu0 0
        %3991 = vmatprep.subr.bf16.mxu0 0
        %3992 = vmatpush1.bf16.msra.mxu0 0
        %3993 = vmatprep.subr.bf16.mxu0 0
        %3994 = vmatpush1.bf16.msra.mxu0 0
        %3995 = vmatprep.subr.bf16.mxu0 0
        %3996 = vmatpush1.bf16.msra.mxu0 0
        %3997 = vmatprep.subr.bf16.mxu0 0
        %3998 = vmatpush1.bf16.msra.mxu0 0
        %3999 = vmatprep.mubr.bf16.mxu0 0
        %4000 = vmatmul.mubr.bf16.gmra.mrb[0].mxu0 %v3638
        %v4001 = vpop.f32.mrb[0].mxu0
        %v4002 = vadd.f32 0.0, %v4001
        %v4003 = vpop.f32.mrb[0].mxu0
        %v4004 = vpop.f32.mrb[0].mxu0
        %v4005 = vpop.f32.mrb[0].mxu0
        %4006 = vdwg.mxu0
        %v4007 = vadd.f32 %v3966, %v4002
        %4008 = vrot.lane.b32.xlu0 %v2289, 120
        %v4009 = vpop.permute.xlu0 %4008
        %v4011 = vsel %vm2311, %v4009, 0
        %4013 = vmatprep.subr.bf16.mxu0 0
        %4014 = vmatpush1.bf16.msra.mxu0 %v2863
        %4015 = vmatprep.subr.bf16.mxu0 0
        %4016 = vmatpush1.bf16.msra.mxu0 %v2864
        %4017 = vmatprep.subr.bf16.mxu0 0
        %4018 = vmatpush1.bf16.msra.mxu0 %v2865
        %4019 = vmatprep.subr.bf16.mxu0 0
        %4020 = vmatpush1.bf16.msra.mxu0 %v2874
        %4021 = vmatprep.subr.bf16.mxu0 0
        %4022 = vmatpush1.bf16.msra.mxu0 0
        %4023 = vmatprep.subr.bf16.mxu0 0
        %4024 = vmatpush1.bf16.msra.mxu0 0
        %4025 = vmatprep.subr.bf16.mxu0 0
        %4026 = vmatpush1.bf16.msra.mxu0 0
        %4027 = vmatprep.subr.bf16.mxu0 0
        %4028 = vmatpush1.bf16.msra.mxu0 0
        %4029 = vmatprep.subr.bf16.mxu0 0
        %4030 = vmatpush1.bf16.msra.mxu0 0
        %4031 = vmatprep.subr.bf16.mxu0 0
        %4032 = vmatpush1.bf16.msra.mxu0 0
        %4033 = vmatprep.subr.bf16.mxu0 0
        %4034 = vmatpush1.bf16.msra.mxu0 0
        %4035 = vmatprep.subr.bf16.mxu0 0
        %4036 = vmatpush1.bf16.msra.mxu0 0
        %4037 = vmatprep.subr.bf16.mxu0 0
        %4038 = vmatpush1.bf16.msra.mxu0 0
        %4039 = vmatprep.subr.bf16.mxu0 0
        %4040 = vmatpush1.bf16.msra.mxu0 0
        %4041 = vmatprep.subr.bf16.mxu0 0
        %4042 = vmatpush1.bf16.msra.mxu0 0
        %4043 = vmatprep.subr.bf16.mxu0 0
        %4044 = vmatpush1.bf16.msra.mxu0 0
        %4045 = vmatprep.mubr.bf16.mxu0 0
        %4046 = vmatmul.mubr.bf16.gmra.mrb[0].mxu0 %v4011
        %v4047 = vpop.f32.mrb[0].mxu0
        %v4048 = vadd.f32 0.0, %v4047
        %v4049 = vpop.f32.mrb[0].mxu0
        %v4050 = vpop.f32.mrb[0].mxu0
        %v4051 = vpop.f32.mrb[0].mxu0
        %4052 = vdwg.mxu0
        %v4053 = vadd.f32 %v4007, %v4048
        %v4054 = vmax.f32 %v3681, %v4053
        %v4055 = vld [vmem:[%s4] sm:$0x1]
        %v4057 = vlaneseq
        %v4058 = vshrl.u32 %v4057, 7
        %v4059 = vsub.s32 0, %v4058
        %v4060 = vrot.slane %v4055, %v4059
        %v4062 = vadd.f32 %v4054, %v4060
        %v4063 = vmax.f32 %v4062, 0.0
        %v4064 = vpack.c.bf16 %v4063, %v4063
        %v4065 = vld [vmem:[%s5] sm:$0xf]
        %v4066 = vld [vmem:[%s5 + $0x4] sm:$0xf]
        %v4067 = vld [vmem:[%s5 + $0x8] sm:$0xf]
        %v4068 = vld [vmem:[%s5 + $0xc] sm:$0xf]
        %v4069 = vld [vmem:[%s5 + $0x10] sm:$0xf]
        %v4070 = vld [vmem:[%s5 + $0x14] sm:$0xf]
        %v4071 = vld [vmem:[%s5 + $0x18] sm:$0xf]
        %v4072 = vld [vmem:[%s5 + $0x1c] sm:$0xf]
        %v4073 = vld [vmem:[%s5 + $0x20] sm:$0xf]
        %v4074 = vld [vmem:[%s5 + $0x24] sm:$0xf]
        %v4075 = vld [vmem:[%s5 + $0x28] sm:$0xf]
        %v4076 = vld [vmem:[%s5 + $0x2c] sm:$0xf]
        %v4077 = vld [vmem:[%s5 + $0x30] sm:$0xf]
        %v4078 = vld [vmem:[%s5 + $0x34] sm:$0xf]
        %s4079 = scalar_lea.vmem %s5, 56
        %v4080 = vld [vmem:[%s4079] sm:$0xf]
        %v4081 = vld [vmem:[%s4079 + $0x4] sm:$0xf]
        %v4082 = vld [vmem:[%s4079 + $0x8] sm:$0xf]
        %v4083 = vld [vmem:[%s4079 + $0xc] sm:$0xf]
        %v4084 = vld [vmem:[%s4079 + $0x10] sm:$0xf]
        %v4085 = vld [vmem:[%s4079 + $0x14] sm:$0xf]
        %v4086 = vld [vmem:[%s4079 + $0x18] sm:$0xf]
        %v4087 = vld [vmem:[%s4079 + $0x1c] sm:$0xf]
        %v4088 = vld [vmem:[%s4079 + $0x20] sm:$0xf]
        %v4089 = vld [vmem:[%s4079 + $0x24] sm:$0xf]
        %v4090 = vld [vmem:[%s4079 + $0x28] sm:$0xf]
        %v4091 = vld [vmem:[%s4079 + $0x2c] sm:$0xf]
        %v4092 = vld [vmem:[%s4079 + $0x30] sm:$0xf]
        %v4093 = vld [vmem:[%s4079 + $0x34] sm:$0xf]
        %v4095 = vshrl.u32 %v4064, 16
        %v4111 = vunpack.c.l.b16 %v4080
        %v4112 = vunpack.c.l.b16 %v4081
        %v4113 = vunpack.c.l.b16 %v4082
        %v4114 = vunpack.c.l.b16 %v4083
        %v4115 = vunpack.c.l.b16 %v4084
        %v4116 = vunpack.c.l.b16 %v4085
        %v4117 = vunpack.c.l.b16 %v4086
        %v4118 = vunpack.c.l.b16 %v4087
        %v4119 = vunpack.c.l.b16 %v4088
        %v4120 = vunpack.c.l.b16 %v4089
        %v4121 = vunpack.c.l.b16 %v4090
        %v4122 = vunpack.c.l.b16 %v4091
        %v4123 = vunpack.c.l.b16 %v4092
        %v4124 = vunpack.c.l.b16 %v4093
        %v4125 = vpack.c.b16 %v4112, %v4111
        %v4126 = vpack.c.b16 %v4114, %v4113
        %v4127 = vpack.c.b16 %v4116, %v4115
        %v4128 = vpack.c.b16 %v4118, %v4117
        %v4129 = vpack.c.b16 %v4120, %v4119
        %v4130 = vpack.c.b16 %v4122, %v4121
        %v4131 = vpack.c.b16 %v4124, %v4123
        %vm4139 = vcmask 916480
        %v4141 = vsel %vm4139, %v4095, 0
        %4143 = vmatprep.subr.bf16.mxu0 0
        %4144 = vmatpush1.bf16.msra.mxu0 %v4125
        %4145 = vmatprep.subr.bf16.mxu0 0
        %4146 = vmatpush1.bf16.msra.mxu0 %v4126
        %4147 = vmatprep.subr.bf16.mxu0 0
        %4148 = vmatpush1.bf16.msra.mxu0 %v4127
        %4149 = vmatprep.subr.bf16.mxu0 0
        %4150 = vmatpush1.bf16.msra.mxu0 %v4128
        %4151 = vmatprep.subr.bf16.mxu0 0
        %4152 = vmatpush1.bf16.msra.mxu0 %v4129
        %4153 = vmatprep.subr.bf16.mxu0 0
        %4154 = vmatpush1.bf16.msra.mxu0 %v4130
        %4155 = vmatprep.subr.bf16.mxu0 0
        %4156 = vmatpush1.bf16.msra.mxu0 %v4131
        %4157 = vmatprep.subr.bf16.mxu0 0
        %4158 = vmatpush1.bf16.msra.mxu0 0
        %4159 = vmatprep.subr.bf16.mxu0 0
        %4160 = vmatpush1.bf16.msra.mxu0 0
        %4161 = vmatprep.subr.bf16.mxu0 0
        %4162 = vmatpush1.bf16.msra.mxu0 0
        %4163 = vmatprep.subr.bf16.mxu0 0
        %4164 = vmatpush1.bf16.msra.mxu0 0
        %4165 = vmatprep.subr.bf16.mxu0 0
        %4166 = vmatpush1.bf16.msra.mxu0 0
        %4167 = vmatprep.subr.bf16.mxu0 0
        %4168 = vmatpush1.bf16.msra.mxu0 0
        %4169 = vmatprep.subr.bf16.mxu0 0
        %4170 = vmatpush1.bf16.msra.mxu0 0
        %4171 = vmatprep.subr.bf16.mxu0 0
        %4172 = vmatpush1.bf16.msra.mxu0 0
        %4173 = vmatprep.subr.bf16.mxu0 0
        %4174 = vmatpush1.bf16.msra.mxu0 0
        %4175 = vmatprep.mubr.bf16.mxu0 0
        %4176 = vmatmul.mubr.bf16.gmra.mrb[0].mxu0 %v4141
        %v4177 = vpop.f32.mrb[0].mxu0
        %v4178 = vadd.f32 0.0, %v4177
        %v4179 = vpop.f32.mrb[0].mxu0
        %v4180 = vpop.f32.mrb[0].mxu0
        %v4181 = vpop.f32.mrb[0].mxu0
        %4182 = vdwg.mxu0
        %v4197 = vunpack.c.l.b16 %v4065
        %v4198 = vunpack.c.l.b16 %v4066
        %v4199 = vunpack.c.l.b16 %v4067
        %v4200 = vunpack.c.l.b16 %v4068
        %v4201 = vunpack.c.l.b16 %v4069
        %v4202 = vunpack.c.l.b16 %v4070
        %v4203 = vunpack.c.l.b16 %v4071
        %v4204 = vunpack.c.l.b16 %v4072
        %v4205 = vunpack.c.l.b16 %v4073
        %v4206 = vunpack.c.l.b16 %v4074
        %v4207 = vunpack.c.l.b16 %v4075
        %v4208 = vunpack.c.l.b16 %v4076
        %v4209 = vunpack.c.l.b16 %v4077
        %v4210 = vunpack.c.l.b16 %v4078
        %v4211 = vpack.c.b16 %v4198, %v4197
        %v4212 = vpack.c.b16 %v4200, %v4199
        %v4213 = vpack.c.b16 %v4202, %v4201
        %v4214 = vpack.c.b16 %v4204, %v4203
        %v4215 = vpack.c.b16 %v4206, %v4205
        %v4216 = vpack.c.b16 %v4208, %v4207
        %v4217 = vpack.c.b16 %v4210, %v4209
        %v4225 = vsel %vm4139, %v4064, 0
        %4227 = vmatprep.subr.bf16.mxu0 0
        %4228 = vmatpush1.bf16.msra.mxu0 %v4211
        %4229 = vmatprep.subr.bf16.mxu0 0
        %4230 = vmatpush1.bf16.msra.mxu0 %v4212
        %4231 = vmatprep.subr.bf16.mxu0 0
        %4232 = vmatpush1.bf16.msra.mxu0 %v4213
        %4233 = vmatprep.subr.bf16.mxu0 0
        %4234 = vmatpush1.bf16.msra.mxu0 %v4214
        %4235 = vmatprep.subr.bf16.mxu0 0
        %4236 = vmatpush1.bf16.msra.mxu0 %v4215
        %4237 = vmatprep.subr.bf16.mxu0 0
        %4238 = vmatpush1.bf16.msra.mxu0 %v4216
        %4239 = vmatprep.subr.bf16.mxu0 0
        %4240 = vmatpush1.bf16.msra.mxu0 %v4217
        %4241 = vmatprep.subr.bf16.mxu0 0
        %4242 = vmatpush1.bf16.msra.mxu0 0
        %4243 = vmatprep.subr.bf16.mxu0 0
        %4244 = vmatpush1.bf16.msra.mxu0 0
        %4245 = vmatprep.subr.bf16.mxu0 0
        %4246 = vmatpush1.bf16.msra.mxu0 0
        %4247 = vmatprep.subr.bf16.mxu0 0
        %4248 = vmatpush1.bf16.msra.mxu0 0
        %4249 = vmatprep.subr.bf16.mxu0 0
        %4250 = vmatpush1.bf16.msra.mxu0 0
        %4251 = vmatprep.subr.bf16.mxu0 0
        %4252 = vmatpush1.bf16.msra.mxu0 0
        %4253 = vmatprep.subr.bf16.mxu0 0
        %4254 = vmatpush1.bf16.msra.mxu0 0
        %4255 = vmatprep.subr.bf16.mxu0 0
        %4256 = vmatpush1.bf16.msra.mxu0 0
        %4257 = vmatprep.subr.bf16.mxu0 0
        %4258 = vmatpush1.bf16.msra.mxu0 0
        %4259 = vmatprep.mubr.bf16.mxu0 0
        %4260 = vmatmul.mubr.bf16.gmra.mrb[0].mxu0 %v4225
        %v4261 = vpop.f32.mrb[0].mxu0
        %v4262 = vadd.f32 %v4178, %v4261
        %v4263 = vpop.f32.mrb[0].mxu0
        %v4264 = vpop.f32.mrb[0].mxu0
        %v4265 = vpop.f32.mrb[0].mxu0
        %4266 = vdwg.mxu0
        %s4267 = scalar_lea.vmem %s5, 112
        %v4268 = vld [vmem:[%s4267] sm:$0xf]
        %v4269 = vld [vmem:[%s4267 + $0x4] sm:$0xf]
        %v4270 = vld [vmem:[%s4267 + $0x8] sm:$0xf]
        %v4271 = vld [vmem:[%s4267 + $0xc] sm:$0xf]
        %v4272 = vld [vmem:[%s4267 + $0x10] sm:$0xf]
        %v4273 = vld [vmem:[%s4267 + $0x14] sm:$0xf]
        %v4274 = vld [vmem:[%s4267 + $0x18] sm:$0xf]
        %v4275 = vld [vmem:[%s4267 + $0x1c] sm:$0xf]
        %v4276 = vld [vmem:[%s4267 + $0x20] sm:$0xf]
        %v4277 = vld [vmem:[%s4267 + $0x24] sm:$0xf]
        %v4278 = vld [vmem:[%s4267 + $0x28] sm:$0xf]
        %v4279 = vld [vmem:[%s4267 + $0x2c] sm:$0xf]
        %v4280 = vld [vmem:[%s4267 + $0x30] sm:$0xf]
        %v4281 = vld [vmem:[%s4267 + $0x34] sm:$0xf]
        %v4283 = vrot.slane %v4064, 1
        %v4298 = vunpack.c.l.b16 %v4268
        %v4299 = vunpack.c.l.b16 %v4269
        %v4300 = vunpack.c.l.b16 %v4270
        %v4301 = vunpack.c.l.b16 %v4271
        %v4302 = vunpack.c.l.b16 %v4272
        %v4303 = vunpack.c.l.b16 %v4273
        %v4304 = vunpack.c.l.b16 %v4274
        %v4305 = vunpack.c.l.b16 %v4275
        %v4306 = vunpack.c.l.b16 %v4276
        %v4307 = vunpack.c.l.b16 %v4277
        %v4308 = vunpack.c.l.b16 %v4278
        %v4309 = vunpack.c.l.b16 %v4279
        %v4310 = vunpack.c.l.b16 %v4280
        %v4311 = vunpack.c.l.b16 %v4281
        %v4312 = vpack.c.b16 %v4299, %v4298
        %v4313 = vpack.c.b16 %v4301, %v4300
        %v4314 = vpack.c.b16 %v4303, %v4302
        %v4315 = vpack.c.b16 %v4305, %v4304
        %v4316 = vpack.c.b16 %v4307, %v4306
        %v4317 = vpack.c.b16 %v4309, %v4308
        %v4318 = vpack.c.b16 %v4311, %v4310
        %v4327 = vsel %vm4139, %v4283, 0
        %4329 = vmatprep.subr.bf16.mxu0 0
        %4330 = vmatpush1.bf16.msra.mxu0 %v4312
        %4331 = vmatprep.subr.bf16.mxu0 0
        %4332 = vmatpush1.bf16.msra.mxu0 %v4313
        %4333 = vmatprep.subr.bf16.mxu0 0
        %4334 = vmatpush1.bf16.msra.mxu0 %v4314
        %4335 = vmatprep.subr.bf16.mxu0 0
        %4336 = vmatpush1.bf16.msra.mxu0 %v4315
        %4337 = vmatprep.subr.bf16.mxu0 0
        %4338 = vmatpush1.bf16.msra.mxu0 %v4316
        %4339 = vmatprep.subr.bf16.mxu0 0
        %4340 = vmatpush1.bf16.msra.mxu0 %v4317
        %4341 = vmatprep.subr.bf16.mxu0 0
        %4342 = vmatpush1.bf16.msra.mxu0 %v4318
        %4343 = vmatprep.subr.bf16.mxu0 0
        %4344 = vmatpush1.bf16.msra.mxu0 0
        %4345 = vmatprep.subr.bf16.mxu0 0
        %4346 = vmatpush1.bf16.msra.mxu0 0
        %4347 = vmatprep.subr.bf16.mxu0 0
        %4348 = vmatpush1.bf16.msra.mxu0 0
        %4349 = vmatprep.subr.bf16.mxu0 0
        %4350 = vmatpush1.bf16.msra.mxu0 0
        %4351 = vmatprep.subr.bf16.mxu0 0
        %4352 = vmatpush1.bf16.msra.mxu0 0
        %4353 = vmatprep.subr.bf16.mxu0 0
        %4354 = vmatpush1.bf16.msra.mxu0 0
        %4355 = vmatprep.subr.bf16.mxu0 0
        %4356 = vmatpush1.bf16.msra.mxu0 0
        %4357 = vmatprep.subr.bf16.mxu0 0
        %4358 = vmatpush1.bf16.msra.mxu0 0
        %4359 = vmatprep.subr.bf16.mxu0 0
        %4360 = vmatpush1.bf16.msra.mxu0 0
        %4361 = vmatprep.mubr.bf16.mxu0 0
        %4362 = vmatmul.mubr.bf16.gmra.mrb[0].mxu0 %v4327
        %v4363 = vpop.f32.mrb[0].mxu0
        %v4364 = vadd.f32 0.0, %v4363
        %v4365 = vpop.f32.mrb[0].mxu0
        %v4366 = vpop.f32.mrb[0].mxu0
        %v4367 = vpop.f32.mrb[0].mxu0
        %4368 = vdwg.mxu0
        %v4369 = vadd.f32 %v4262, %v4364
        %s4370 = scalar_lea.vmem %s5, 168
        %v4371 = vld [vmem:[%s4370] sm:$0xf]
        %v4372 = vld [vmem:[%s4370 + $0x4] sm:$0xf]
        %v4373 = vld [vmem:[%s4370 + $0x8] sm:$0xf]
        %v4374 = vld [vmem:[%s4370 + $0xc] sm:$0xf]
        %v4375 = vld [vmem:[%s4370 + $0x10] sm:$0xf]
        %v4376 = vld [vmem:[%s4370 + $0x14] sm:$0xf]
        %v4377 = vld [vmem:[%s4370 + $0x18] sm:$0xf]
        %v4378 = vld [vmem:[%s4370 + $0x1c] sm:$0xf]
        %v4379 = vld [vmem:[%s4370 + $0x20] sm:$0xf]
        %v4380 = vld [vmem:[%s4370 + $0x24] sm:$0xf]
        %v4381 = vld [vmem:[%s4370 + $0x28] sm:$0xf]
        %v4382 = vld [vmem:[%s4370 + $0x2c] sm:$0xf]
        %v4383 = vld [vmem:[%s4370 + $0x30] sm:$0xf]
        %v4384 = vld [vmem:[%s4370 + $0x34] sm:$0xf]
        %v4385 = vrot.slane %v4095, 1
        %v4400 = vunpack.c.l.b16 %v4371
        %v4401 = vunpack.c.l.b16 %v4372
        %v4402 = vunpack.c.l.b16 %v4373
        %v4403 = vunpack.c.l.b16 %v4374
        %v4404 = vunpack.c.l.b16 %v4375
        %v4405 = vunpack.c.l.b16 %v4376
        %v4406 = vunpack.c.l.b16 %v4377
        %v4407 = vunpack.c.l.b16 %v4378
        %v4408 = vunpack.c.l.b16 %v4379
        %v4409 = vunpack.c.l.b16 %v4380
        %v4410 = vunpack.c.l.b16 %v4381
        %v4411 = vunpack.c.l.b16 %v4382
        %v4412 = vunpack.c.l.b16 %v4383
        %v4413 = vunpack.c.l.b16 %v4384
        %v4414 = vpack.c.b16 %v4401, %v4400
        %v4415 = vpack.c.b16 %v4403, %v4402
        %v4416 = vpack.c.b16 %v4405, %v4404
        %v4417 = vpack.c.b16 %v4407, %v4406
        %v4418 = vpack.c.b16 %v4409, %v4408
        %v4419 = vpack.c.b16 %v4411, %v4410
        %v4420 = vpack.c.b16 %v4413, %v4412
        %v4429 = vsel %vm4139, %v4385, 0
        %4431 = vmatprep.subr.bf16.mxu0 0
        %4432 = vmatpush1.bf16.msra.mxu0 %v4414
        %4433 = vmatprep.subr.bf16.mxu0 0
        %4434 = vmatpush1.bf16.msra.mxu0 %v4415
        %4435 = vmatprep.subr.bf16.mxu0 0
        %4436 = vmatpush1.bf16.msra.mxu0 %v4416
        %4437 = vmatprep.subr.bf16.mxu0 0
        %4438 = vmatpush1.bf16.msra.mxu0 %v4417
        %4439 = vmatprep.subr.bf16.mxu0 0
        %4440 = vmatpush1.bf16.msra.mxu0 %v4418
        %4441 = vmatprep.subr.bf16.mxu0 0
        %4442 = vmatpush1.bf16.msra.mxu0 %v4419
        %4443 = vmatprep.subr.bf16.mxu0 0
        %4444 = vmatpush1.bf16.msra.mxu0 %v4420
        %4445 = vmatprep.subr.bf16.mxu0 0
        %4446 = vmatpush1.bf16.msra.mxu0 0
        %4447 = vmatprep.subr.bf16.mxu0 0
        %4448 = vmatpush1.bf16.msra.mxu0 0
        %4449 = vmatprep.subr.bf16.mxu0 0
        %4450 = vmatpush1.bf16.msra.mxu0 0
        %4451 = vmatprep.subr.bf16.mxu0 0
        %4452 = vmatpush1.bf16.msra.mxu0 0
        %4453 = vmatprep.subr.bf16.mxu0 0
        %4454 = vmatpush1.bf16.msra.mxu0 0
        %4455 = vmatprep.subr.bf16.mxu0 0
        %4456 = vmatpush1.bf16.msra.mxu0 0
        %4457 = vmatprep.subr.bf16.mxu0 0
        %4458 = vmatpush1.bf16.msra.mxu0 0
        %4459 = vmatprep.subr.bf16.mxu0 0
        %4460 = vmatpush1.bf16.msra.mxu0 0
        %4461 = vmatprep.subr.bf16.mxu0 0
        %4462 = vmatpush1.bf16.msra.mxu0 0
        %4463 = vmatprep.mubr.bf16.mxu0 0
        %4464 = vmatmul.mubr.bf16.gmra.mrb[0].mxu0 %v4429
        %v4465 = vpop.f32.mrb[0].mxu0
        %v4466 = vadd.f32 0.0, %v4465
        %v4467 = vpop.f32.mrb[0].mxu0
        %v4468 = vpop.f32.mrb[0].mxu0
        %v4469 = vpop.f32.mrb[0].mxu0
        %4470 = vdwg.mxu0
        %v4471 = vadd.f32 %v4369, %v4466
        %s4472 = scalar_lea.vmem %s5, 224
        %v4473 = vld [vmem:[%s4472] sm:$0xf]
        %v4474 = vld [vmem:[%s4472 + $0x4] sm:$0xf]
        %v4475 = vld [vmem:[%s4472 + $0x8] sm:$0xf]
        %v4476 = vld [vmem:[%s4472 + $0xc] sm:$0xf]
        %v4477 = vld [vmem:[%s4472 + $0x10] sm:$0xf]
        %v4478 = vld [vmem:[%s4472 + $0x14] sm:$0xf]
        %v4479 = vld [vmem:[%s4472 + $0x18] sm:$0xf]
        %v4480 = vld [vmem:[%s4472 + $0x1c] sm:$0xf]
        %v4481 = vld [vmem:[%s4472 + $0x20] sm:$0xf]
        %v4482 = vld [vmem:[%s4472 + $0x24] sm:$0xf]
        %v4483 = vld [vmem:[%s4472 + $0x28] sm:$0xf]
        %v4484 = vld [vmem:[%s4472 + $0x2c] sm:$0xf]
        %v4485 = vld [vmem:[%s4472 + $0x30] sm:$0xf]
        %v4486 = vld [vmem:[%s4472 + $0x34] sm:$0xf]
        %v4487 = vrot.slane %v4064, 2
        %v4502 = vunpack.c.l.b16 %v4473
        %v4503 = vunpack.c.l.b16 %v4474
        %v4504 = vunpack.c.l.b16 %v4475
        %v4505 = vunpack.c.l.b16 %v4476
        %v4506 = vunpack.c.l.b16 %v4477
        %v4507 = vunpack.c.l.b16 %v4478
        %v4508 = vunpack.c.l.b16 %v4479
        %v4509 = vunpack.c.l.b16 %v4480
        %v4510 = vunpack.c.l.b16 %v4481
        %v4511 = vunpack.c.l.b16 %v4482
        %v4512 = vunpack.c.l.b16 %v4483
        %v4513 = vunpack.c.l.b16 %v4484
        %v4514 = vunpack.c.l.b16 %v4485
        %v4515 = vunpack.c.l.b16 %v4486
        %v4516 = vpack.c.b16 %v4503, %v4502
        %v4517 = vpack.c.b16 %v4505, %v4504
        %v4518 = vpack.c.b16 %v4507, %v4506
        %v4519 = vpack.c.b16 %v4509, %v4508
        %v4520 = vpack.c.b16 %v4511, %v4510
        %v4521 = vpack.c.b16 %v4513, %v4512
        %v4522 = vpack.c.b16 %v4515, %v4514
        %v4531 = vsel %vm4139, %v4487, 0
        %4533 = vmatprep.subr.bf16.mxu0 0
        %4534 = vmatpush1.bf16.msra.mxu0 %v4516
        %4535 = vmatprep.subr.bf16.mxu0 0
        %4536 = vmatpush1.bf16.msra.mxu0 %v4517
        %4537 = vmatprep.subr.bf16.mxu0 0
        %4538 = vmatpush1.bf16.msra.mxu0 %v4518
        %4539 = vmatprep.subr.bf16.mxu0 0
        %4540 = vmatpush1.bf16.msra.mxu0 %v4519
        %4541 = vmatprep.subr.bf16.mxu0 0
        %4542 = vmatpush1.bf16.msra.mxu0 %v4520
        %4543 = vmatprep.subr.bf16.mxu0 0
        %4544 = vmatpush1.bf16.msra.mxu0 %v4521
        %4545 = vmatprep.subr.bf16.mxu0 0
        %4546 = vmatpush1.bf16.msra.mxu0 %v4522
        %4547 = vmatprep.subr.bf16.mxu0 0
        %4548 = vmatpush1.bf16.msra.mxu0 0
        %4549 = vmatprep.subr.bf16.mxu0 0
        %4550 = vmatpush1.bf16.msra.mxu0 0
        %4551 = vmatprep.subr.bf16.mxu0 0
        %4552 = vmatpush1.bf16.msra.mxu0 0
        %4553 = vmatprep.subr.bf16.mxu0 0
        %4554 = vmatpush1.bf16.msra.mxu0 0
        %4555 = vmatprep.subr.bf16.mxu0 0
        %4556 = vmatpush1.bf16.msra.mxu0 0
        %4557 = vmatprep.subr.bf16.mxu0 0
        %4558 = vmatpush1.bf16.msra.mxu0 0
        %4559 = vmatprep.subr.bf16.mxu0 0
        %4560 = vmatpush1.bf16.msra.mxu0 0
        %4561 = vmatprep.subr.bf16.mxu0 0
        %4562 = vmatpush1.bf16.msra.mxu0 0
        %4563 = vmatprep.subr.bf16.mxu0 0
        %4564 = vmatpush1.bf16.msra.mxu0 0
        %4565 = vmatprep.mubr.bf16.mxu0 0
        %4566 = vmatmul.mubr.bf16.gmra.mrb[0].mxu0 %v4531
        %v4567 = vpop.f32.mrb[0].mxu0
        %v4568 = vadd.f32 0.0, %v4567
        %v4569 = vpop.f32.mrb[0].mxu0
        %v4570 = vpop.f32.mrb[0].mxu0
        %v4571 = vpop.f32.mrb[0].mxu0
        %4572 = vdwg.mxu0
        %v4573 = vadd.f32 %v4471, %v4568
        %s4574 = scalar_lea.vmem %s5, 280
        %v4575 = vld [vmem:[%s4574] sm:$0xf]
        %v4576 = vld [vmem:[%s4574 + $0x4] sm:$0xf]
        %v4577 = vld [vmem:[%s4574 + $0x8] sm:$0xf]
        %v4578 = vld [vmem:[%s4574 + $0xc] sm:$0xf]
        %v4579 = vld [vmem:[%s4574 + $0x10] sm:$0xf]
        %v4580 = vld [vmem:[%s4574 + $0x14] sm:$0xf]
        %v4581 = vld [vmem:[%s4574 + $0x18] sm:$0xf]
        %v4582 = vld [vmem:[%s4574 + $0x1c] sm:$0xf]
        %v4583 = vld [vmem:[%s4574 + $0x20] sm:$0xf]
        %v4584 = vld [vmem:[%s4574 + $0x24] sm:$0xf]
        %v4585 = vld [vmem:[%s4574 + $0x28] sm:$0xf]
        %v4586 = vld [vmem:[%s4574 + $0x2c] sm:$0xf]
        %v4587 = vld [vmem:[%s4574 + $0x30] sm:$0xf]
        %v4588 = vld [vmem:[%s4574 + $0x34] sm:$0xf]
        %v4589 = vrot.slane %v4095, 2
        %v4604 = vunpack.c.l.b16 %v4575
        %v4605 = vunpack.c.l.b16 %v4576
        %v4606 = vunpack.c.l.b16 %v4577
        %v4607 = vunpack.c.l.b16 %v4578
        %v4608 = vunpack.c.l.b16 %v4579
        %v4609 = vunpack.c.l.b16 %v4580
        %v4610 = vunpack.c.l.b16 %v4581
        %v4611 = vunpack.c.l.b16 %v4582
        %v4612 = vunpack.c.l.b16 %v4583
        %v4613 = vunpack.c.l.b16 %v4584
        %v4614 = vunpack.c.l.b16 %v4585
        %v4615 = vunpack.c.l.b16 %v4586
        %v4616 = vunpack.c.l.b16 %v4587
        %v4617 = vunpack.c.l.b16 %v4588
        %v4618 = vpack.c.b16 %v4605, %v4604
        %v4619 = vpack.c.b16 %v4607, %v4606
        %v4620 = vpack.c.b16 %v4609, %v4608
        %v4621 = vpack.c.b16 %v4611, %v4610
        %v4622 = vpack.c.b16 %v4613, %v4612
        %v4623 = vpack.c.b16 %v4615, %v4614
        %v4624 = vpack.c.b16 %v4617, %v4616
        %v4633 = vsel %vm4139, %v4589, 0
        %4635 = vmatprep.subr.bf16.mxu0 0
        %4636 = vmatpush1.bf16.msra.mxu0 %v4618
        %4637 = vmatprep.subr.bf16.mxu0 0
        %4638 = vmatpush1.bf16.msra.mxu0 %v4619
        %4639 = vmatprep.subr.bf16.mxu0 0
        %4640 = vmatpush1.bf16.msra.mxu0 %v4620
        %4641 = vmatprep.subr.bf16.mxu0 0
        %4642 = vmatpush1.bf16.msra.mxu0 %v4621
        %4643 = vmatprep.subr.bf16.mxu0 0
        %4644 = vmatpush1.bf16.msra.mxu0 %v4622
        %4645 = vmatprep.subr.bf16.mxu0 0
        %4646 = vmatpush1.bf16.msra.mxu0 %v4623
        %4647 = vmatprep.subr.bf16.mxu0 0
        %4648 = vmatpush1.bf16.msra.mxu0 %v4624
        %4649 = vmatprep.subr.bf16.mxu0 0
        %4650 = vmatpush1.bf16.msra.mxu0 0
        %4651 = vmatprep.subr.bf16.mxu0 0
        %4652 = vmatpush1.bf16.msra.mxu0 0
        %4653 = vmatprep.subr.bf16.mxu0 0
        %4654 = vmatpush1.bf16.msra.mxu0 0
        %4655 = vmatprep.subr.bf16.mxu0 0
        %4656 = vmatpush1.bf16.msra.mxu0 0
        %4657 = vmatprep.subr.bf16.mxu0 0
        %4658 = vmatpush1.bf16.msra.mxu0 0
        %4659 = vmatprep.subr.bf16.mxu0 0
        %4660 = vmatpush1.bf16.msra.mxu0 0
        %4661 = vmatprep.subr.bf16.mxu0 0
        %4662 = vmatpush1.bf16.msra.mxu0 0
        %4663 = vmatprep.subr.bf16.mxu0 0
        %4664 = vmatpush1.bf16.msra.mxu0 0
        %4665 = vmatprep.subr.bf16.mxu0 0
        %4666 = vmatpush1.bf16.msra.mxu0 0
        %4667 = vmatprep.mubr.bf16.mxu0 0
        %4668 = vmatmul.mubr.bf16.gmra.mrb[0].mxu0 %v4633
        %v4669 = vpop.f32.mrb[0].mxu0
        %v4670 = vadd.f32 0.0, %v4669
        %v4671 = vpop.f32.mrb[0].mxu0
        %v4672 = vpop.f32.mrb[0].mxu0
        %v4673 = vpop.f32.mrb[0].mxu0
        %4674 = vdwg.mxu0
        %v4675 = vadd.f32 %v4573, %v4670
        %s4676 = scalar_lea.vmem %s5, 336
        %v4677 = vld [vmem:[%s4676] sm:$0xf]
        %v4678 = vld [vmem:[%s4676 + $0x4] sm:$0xf]
        %v4679 = vld [vmem:[%s4676 + $0x8] sm:$0xf]
        %v4680 = vld [vmem:[%s4676 + $0xc] sm:$0xf]
        %v4681 = vld [vmem:[%s4676 + $0x10] sm:$0xf]
        %v4682 = vld [vmem:[%s4676 + $0x14] sm:$0xf]
        %v4683 = vld [vmem:[%s4676 + $0x18] sm:$0xf]
        %v4684 = vld [vmem:[%s4676 + $0x1c] sm:$0xf]
        %v4685 = vld [vmem:[%s4676 + $0x20] sm:$0xf]
        %v4686 = vld [vmem:[%s4676 + $0x24] sm:$0xf]
        %v4687 = vld [vmem:[%s4676 + $0x28] sm:$0xf]
        %v4688 = vld [vmem:[%s4676 + $0x2c] sm:$0xf]
        %v4689 = vld [vmem:[%s4676 + $0x30] sm:$0xf]
        %v4690 = vld [vmem:[%s4676 + $0x34] sm:$0xf]
        %v4691 = vrot.slane %v4064, 3
        %v4706 = vunpack.c.l.b16 %v4677
        %v4707 = vunpack.c.l.b16 %v4678
        %v4708 = vunpack.c.l.b16 %v4679
        %v4709 = vunpack.c.l.b16 %v4680
        %v4710 = vunpack.c.l.b16 %v4681
        %v4711 = vunpack.c.l.b16 %v4682
        %v4712 = vunpack.c.l.b16 %v4683
        %v4713 = vunpack.c.l.b16 %v4684
        %v4714 = vunpack.c.l.b16 %v4685
        %v4715 = vunpack.c.l.b16 %v4686
        %v4716 = vunpack.c.l.b16 %v4687
        %v4717 = vunpack.c.l.b16 %v4688
        %v4718 = vunpack.c.l.b16 %v4689
        %v4719 = vunpack.c.l.b16 %v4690
        %v4720 = vpack.c.b16 %v4707, %v4706
        %v4721 = vpack.c.b16 %v4709, %v4708
        %v4722 = vpack.c.b16 %v4711, %v4710
        %v4723 = vpack.c.b16 %v4713, %v4712
        %v4724 = vpack.c.b16 %v4715, %v4714
        %v4725 = vpack.c.b16 %v4717, %v4716
        %v4726 = vpack.c.b16 %v4719, %v4718
        %v4735 = vsel %vm4139, %v4691, 0
        %4737 = vmatprep.subr.bf16.mxu0 0
        %4738 = vmatpush1.bf16.msra.mxu0 %v4720
        %4739 = vmatprep.subr.bf16.mxu0 0
        %4740 = vmatpush1.bf16.msra.mxu0 %v4721
        %4741 = vmatprep.subr.bf16.mxu0 0
        %4742 = vmatpush1.bf16.msra.mxu0 %v4722
        %4743 = vmatprep.subr.bf16.mxu0 0
        %4744 = vmatpush1.bf16.msra.mxu0 %v4723
        %4745 = vmatprep.subr.bf16.mxu0 0
        %4746 = vmatpush1.bf16.msra.mxu0 %v4724
        %4747 = vmatprep.subr.bf16.mxu0 0
        %4748 = vmatpush1.bf16.msra.mxu0 %v4725
        %4749 = vmatprep.subr.bf16.mxu0 0
        %4750 = vmatpush1.bf16.msra.mxu0 %v4726
        %4751 = vmatprep.subr.bf16.mxu0 0
        %4752 = vmatpush1.bf16.msra.mxu0 0
        %4753 = vmatprep.subr.bf16.mxu0 0
        %4754 = vmatpush1.bf16.msra.mxu0 0
        %4755 = vmatprep.subr.bf16.mxu0 0
        %4756 = vmatpush1.bf16.msra.mxu0 0
        %4757 = vmatprep.subr.bf16.mxu0 0
        %4758 = vmatpush1.bf16.msra.mxu0 0
        %4759 = vmatprep.subr.bf16.mxu0 0
        %4760 = vmatpush1.bf16.msra.mxu0 0
        %4761 = vmatprep.subr.bf16.mxu0 0
        %4762 = vmatpush1.bf16.msra.mxu0 0
        %4763 = vmatprep.subr.bf16.mxu0 0
        %4764 = vmatpush1.bf16.msra.mxu0 0
        %4765 = vmatprep.subr.bf16.mxu0 0
        %4766 = vmatpush1.bf16.msra.mxu0 0
        %4767 = vmatprep.subr.bf16.mxu0 0
        %4768 = vmatpush1.bf16.msra.mxu0 0
        %4769 = vmatprep.mubr.bf16.mxu0 0
        %4770 = vmatmul.mubr.bf16.gmra.mrb[0].mxu0 %v4735
        %v4771 = vpop.f32.mrb[0].mxu0
        %v4772 = vadd.f32 0.0, %v4771
        %v4773 = vpop.f32.mrb[0].mxu0
        %v4774 = vpop.f32.mrb[0].mxu0
        %v4775 = vpop.f32.mrb[0].mxu0
        %4776 = vdwg.mxu0
        %v4777 = vadd.f32 %v4675, %v4772
        %v4778 = vld [vmem:[%s6] sm:$0x1]
        %v4779 = vadd.f32 %v4777, %v4778
        %v4780 = vmax.f32 %v4779, 0.0
        %v4781 = vpack.c.bf16 %v4780, %v4780
        %v4782 = vld [vmem:[%s7] sm:$0xf]
        %v4783 = vld [vmem:[%s7 + $0x4] sm:$0xf]
        %v4784 = vld [vmem:[%s7 + $0x8] sm:$0xf]
        %v4785 = vld [vmem:[%s7 + $0xc] sm:$0xf]
        %v4786 = vld [vmem:[%s7 + $0x10] sm:$0xf]
        %v4787 = vld [vmem:[%s7 + $0x14] sm:$0xf]
        %v4788 = vld [vmem:[%s7 + $0x18] sm:$0xf]
        %v4789 = vld [vmem:[%s7 + $0x1c] sm:$0xf]
        %v4790 = vld [vmem:[%s7 + $0x20] sm:$0xf]
        %v4791 = vld [vmem:[%s7 + $0x24] sm:$0xf]
        %v4792 = vld [vmem:[%s7 + $0x28] sm:$0xf]
        %v4793 = vld [vmem:[%s7 + $0x2c] sm:$0xf]
        %v4794 = vld [vmem:[%s7 + $0x30] sm:$0xf]
        %v4795 = vld [vmem:[%s7 + $0x34] sm:$0xf]
        %v4796 = vld [vmem:[%s7 + $0x38] sm:$0xf]
        %v4797 = vld [vmem:[%s7 + $0x3c] sm:$0xf]
        %v4798 = vld [vmem:[%s8] sm:$0x1]
        %v4815 = vunpack.c.l.b16 %v4782
        %v4816 = vunpack.c.l.b16 %v4783
        %v4817 = vunpack.c.l.b16 %v4784
        %v4818 = vunpack.c.l.b16 %v4785
        %v4819 = vunpack.c.l.b16 %v4786
        %v4820 = vunpack.c.l.b16 %v4787
        %v4821 = vunpack.c.l.b16 %v4788
        %v4822 = vunpack.c.l.b16 %v4789
        %v4823 = vunpack.c.l.b16 %v4790
        %v4824 = vunpack.c.l.b16 %v4791
        %v4825 = vunpack.c.l.b16 %v4792
        %v4826 = vunpack.c.l.b16 %v4793
        %v4827 = vunpack.c.l.b16 %v4794
        %v4828 = vunpack.c.l.b16 %v4795
        %v4829 = vunpack.c.l.b16 %v4796
        %v4830 = vunpack.c.l.b16 %v4797
        %v4831 = vpack.c.b16 %v4816, %v4815
        %v4832 = vpack.c.b16 %v4818, %v4817
        %v4833 = vpack.c.b16 %v4820, %v4819
        %v4834 = vpack.c.b16 %v4822, %v4821
        %v4835 = vpack.c.b16 %v4824, %v4823
        %v4836 = vpack.c.b16 %v4826, %v4825
        %v4837 = vpack.c.b16 %v4828, %v4827
        %v4838 = vpack.c.b16 %v4830, %v4829
        %4847 = vmatprep.subr.bf16.mxu0 0
        %4848 = vmatpush1.bf16.msra.mxu0 %v4831
        %4849 = vmatprep.subr.bf16.mxu0 0
        %4850 = vmatpush1.bf16.msra.mxu0 %v4832
        %4851 = vmatprep.subr.bf16.mxu0 0
        %4852 = vmatpush1.bf16.msra.mxu0 %v4833
        %4853 = vmatprep.subr.bf16.mxu0 0
        %4854 = vmatpush1.bf16.msra.mxu0 %v4834
        %4855 = vmatprep.subr.bf16.mxu0 0
        %4856 = vmatpush1.bf16.msra.mxu0 %v4835
        %4857 = vmatprep.subr.bf16.mxu0 0
        %4858 = vmatpush1.bf16.msra.mxu0 %v4836
        %4859 = vmatprep.subr.bf16.mxu0 0
        %4860 = vmatpush1.bf16.msra.mxu0 %v4837
        %4861 = vmatprep.subr.bf16.mxu0 0
        %4862 = vmatpush1.bf16.msra.mxu0 %v4838
        %4863 = vmatprep.subr.bf16.mxu0 0
        %4864 = vmatpush1.bf16.msra.mxu0 0
        %4865 = vmatprep.subr.bf16.mxu0 0
        %4866 = vmatpush1.bf16.msra.mxu0 0
        %4867 = vmatprep.subr.bf16.mxu0 0
        %4868 = vmatpush1.bf16.msra.mxu0 0
        %4869 = vmatprep.subr.bf16.mxu0 0
        %4870 = vmatpush1.bf16.msra.mxu0 0
        %4871 = vmatprep.subr.bf16.mxu0 0
        %4872 = vmatpush1.bf16.msra.mxu0 0
        %4873 = vmatprep.subr.bf16.mxu0 0
        %4874 = vmatpush1.bf16.msra.mxu0 0
        %4875 = vmatprep.subr.bf16.mxu0 0
        %4876 = vmatpush1.bf16.msra.mxu0 0
        %4877 = vmatprep.subr.bf16.mxu0 0
        %4878 = vmatpush1.bf16.msra.mxu0 0
        %4879 = vmatprep.mubr.bf16.mxu0 0
        %4880 = vmatmul.mubr.bf16.gmra.mrb[0].mxu0 %v4781
        %v4881 = vpop.f32.mrb[0].mxu0
        %v4882 = vadd.f32 %v4798, %v4881
        %v4883 = vpop.f32.mrb[0].mxu0
        %v4884 = vpop.f32.mrb[0].mxu0
        %v4885 = vpop.f32.mrb[0].mxu0
        %4886 = vdwg.mxu0
        %v4887 = vmax.f32 %v4882, 0.0
        %v4888 = vpack.c.bf16 %v4887, %v4887
        %v4889 = vld [vmem:[%s9] sm:$0xf]
        %v4890 = vld [vmem:[%s9 + $0x4] sm:$0xf]
        %v4891 = vld [vmem:[%s9 + $0x8] sm:$0xf]
        %v4892 = vld [vmem:[%s9 + $0xc] sm:$0xf]
        %v4893 = vld [vmem:[%s9 + $0x10] sm:$0xf]
        %v4894 = vld [vmem:[%s9 + $0x14] sm:$0xf]
        %v4895 = vld [vmem:[%s9 + $0x18] sm:$0xf]
        %v4896 = vld [vmem:[%s9 + $0x1c] sm:$0xf]
        %v4897 = vld [vmem:[%s9 + $0x20] sm:$0xf]
        %v4898 = vld [vmem:[%s9 + $0x24] sm:$0xf]
        %v4899 = vld [vmem:[%s9 + $0x28] sm:$0xf]
        %v4900 = vld [vmem:[%s9 + $0x2c] sm:$0xf]
        %v4901 = vld [vmem:[%s9 + $0x30] sm:$0xf]
        %v4902 = vld [vmem:[%s9 + $0x34] sm:$0xf]
        %v4903 = vld [vmem:[%s9 + $0x38] sm:$0xf]
        %v4904 = vld [vmem:[%s9 + $0x3c] sm:$0xf]
        %v4905 = vld [vmem:[%s10] sm:$0x1]
        %v4922 = vunpack.c.l.b16 %v4889
        %v4923 = vunpack.c.l.b16 %v4890
        %v4924 = vunpack.c.l.b16 %v4891
        %v4925 = vunpack.c.l.b16 %v4892
        %v4926 = vunpack.c.l.b16 %v4893
        %v4927 = vunpack.c.l.b16 %v4894
        %v4928 = vunpack.c.l.b16 %v4895
        %v4929 = vunpack.c.l.b16 %v4896
        %v4930 = vunpack.c.l.b16 %v4897
        %v4931 = vunpack.c.l.b16 %v4898
        %v4932 = vunpack.c.l.b16 %v4899
        %v4933 = vunpack.c.l.b16 %v4900
        %v4934 = vunpack.c.l.b16 %v4901
        %v4935 = vunpack.c.l.b16 %v4902
        %v4936 = vunpack.c.l.b16 %v4903
        %v4937 = vunpack.c.l.b16 %v4904
        %v4938 = vpack.c.b16 %v4923, %v4922
        %v4939 = vpack.c.b16 %v4925, %v4924
        %v4940 = vpack.c.b16 %v4927, %v4926
        %v4941 = vpack.c.b16 %v4929, %v4928
        %v4942 = vpack.c.b16 %v4931, %v4930
        %v4943 = vpack.c.b16 %v4933, %v4932
        %v4944 = vpack.c.b16 %v4935, %v4934
        %v4945 = vpack.c.b16 %v4937, %v4936
        %4954 = vmatprep.subr.bf16.mxu0 0
        %4955 = vmatpush1.bf16.msra.mxu0 %v4938
        %4956 = vmatprep.subr.bf16.mxu0 0
        %4957 = vmatpush1.bf16.msra.mxu0 %v4939
        %4958 = vmatprep.subr.bf16.mxu0 0
        %4959 = vmatpush1.bf16.msra.mxu0 %v4940
        %4960 = vmatprep.subr.bf16.mxu0 0
        %4961 = vmatpush1.bf16.msra.mxu0 %v4941
        %4962 = vmatprep.subr.bf16.mxu0 0
        %4963 = vmatpush1.bf16.msra.mxu0 %v4942
        %4964 = vmatprep.subr.bf16.mxu0 0
        %4965 = vmatpush1.bf16.msra.mxu0 %v4943
        %4966 = vmatprep.subr.bf16.mxu0 0
        %4967 = vmatpush1.bf16.msra.mxu0 %v4944
        %4968 = vmatprep.subr.bf16.mxu0 0
        %4969 = vmatpush1.bf16.msra.mxu0 %v4945
        %4970 = vmatprep.subr.bf16.mxu0 0
        %4971 = vmatpush1.bf16.msra.mxu0 0
        %4972 = vmatprep.subr.bf16.mxu0 0
        %4973 = vmatpush1.bf16.msra.mxu0 0
        %4974 = vmatprep.subr.bf16.mxu0 0
        %4975 = vmatpush1.bf16.msra.mxu0 0
        %4976 = vmatprep.subr.bf16.mxu0 0
        %4977 = vmatpush1.bf16.msra.mxu0 0
        %4978 = vmatprep.subr.bf16.mxu0 0
        %4979 = vmatpush1.bf16.msra.mxu0 0
        %4980 = vmatprep.subr.bf16.mxu0 0
        %4981 = vmatpush1.bf16.msra.mxu0 0
        %4982 = vmatprep.subr.bf16.mxu0 0
        %4983 = vmatpush1.bf16.msra.mxu0 0
        %4984 = vmatprep.subr.bf16.mxu0 0
        %4985 = vmatpush1.bf16.msra.mxu0 0
        %4986 = vmatprep.mubr.bf16.mxu0 0
        %4987 = vmatmul.mubr.bf16.gmra.mrb[0].mxu0 %v4888
        %v4988 = vpop.f32.mrb[0].mxu0
        %v4989 = vadd.f32 %v4905, %v4988
        %v4990 = vpop.f32.mrb[0].mxu0
        %v4991 = vpop.f32.mrb[0].mxu0
        %v4992 = vpop.f32.mrb[0].mxu0
        %4993 = vdwg.mxu0
        %4994 = vst [vmem:[%s446] sm:$0x1] %v4989
        %s4995 = sand.u32 %s269, 1
        %s4996 = scalar_lea.sflag [#allocation5], %s4995
        %s4997 = sand.u32 %s269, 1
        %s4998 = scalar_lea.vmem [#allocation4], %s4997
        // Predicated region
        $region103: #{net_forward.1} parent=97 // pred_check
          %p4999 = pneg %p279
        $region104: #{net_forward.1} parent=97 // pred_check_branch
          %5001 = sbr.rel (%p4999) target = $region106
        $region105: #{net_forward.1} parent=97 // pred_region
          %s5003 = ssub.s32 16, 16
          %5004 = vsyncadd %s4996, %s5003
          %s5005 = smul.addr %s25, 16
          %s5006 = scalar_lea.hbm %s11, %s5005
          %s5008 = sshll.u32 %s4998, 4
          %s5009 = int_to_ptr.vmem [resolvable:$true] %s5008
          %5011 = dma.vmem_to_hbm [thread:$0]  %s5009, 16, %s5006, %s4996
        $region106: #{net_forward.1} parent=97 // pred_fallthru
          _
      $region98: #{net_forward.1} parent=5 // pred_fallthru
        _
      %p5012 = scmp.le.s32.totalorder 2, %s20
      // Predicated region
      $region107: #{net_forward.1} parent=5 // pred_check
        %p5013 = pneg %p5012
      $region108: #{net_forward.1} parent=5 // pred_check_branch
        %5015 = sbr.rel (%p5013) target = $region110
      $region109: #{net_forward.1} parent=5 // pred_region
        %s5016 = ssub.s32 %s20, 2
        // Predicated region
        $region111: #{net_forward.1} parent=109 // pred_check
          %p5017 = pneg %p285
        $region112: #{net_forward.1} parent=109 // pred_check_branch
          %5019 = sbr.rel (%p5017) target = $region114
        $region113: #{net_forward.1} parent=109 // pred_region
          %s5020 = sand.u32 %s270, 1
          %s5021 = scalar_lea.sflag [#allocation5], %s5020
          %s5022 = sand.u32 %s270, 1
          %s5023 = scalar_lea.vmem [#allocation4], %s5022
          %5024 = dma.done %s5021, 16
        $region114: #{net_forward.1} parent=109 // pred_fallthru
          _
      $region110: #{net_forward.1} parent=5 // pred_fallthru
        _
    $region6: #{net_forward.1} parent=1 // loop_footer
      %s24 = sadd.s32 1, %s20
    $region7: #{net_forward.1} parent=1 // loop_footer_branch
      %19 = sbr.rel target = $region3
    $region8: #{net_forward.1} parent=1 // loop_exit
      _
    %5025 = vsyncpa [#allocation5], 1
    %s5026 = scalar_lea.sflag [#allocation5], 1
    %5027 = vsyncpa %s5026, 1

</llo_original>
